<compile_context>
chip_gen: v5e
topology: v5e:2x2
jax: 0.10.0
libtpu: 0.0.40
codegen_flags: <defaults>
</compile_context>

<pallas_src>
import numpy as np

import jax
import jax.numpy as jnp
from jax.experimental import pallas as pl
from jax.experimental.pallas import tpu as pltpu


_PAD = 8          # zero-pad columns on each side of the flattened spatial axis
_BASE = 7         # every phase slab lives on the 7x7 base grid (28 = 4 * 7)
_EPS = 1e-5       # BatchNorm2d default eps

# Per-dimension phase tables for ConvTranspose2d(kernel=4, stride=2, padding=1):
#   out[2u + q]   = sum over (kk, delta):  x[u + delta] * w[kk]
# Layer 2 (single-phase 7x7 input):   q -> ((kk, delta), ...)
_L2_TERMS = {0: ((1, 0), (3, -1)),
             1: ((0, 1), (2, 0))}
# Layer 3 (input given as 2 phase slabs per dim, P_s[r] = h2[2r+s]):
#   out[4r + q] = sum over (kk, src_phase, delta): P_src[r + delta] * w[kk]
_L3_TERMS = {0: ((1, 0, 0), (3, 1, -1)),
             1: ((0, 1, 0), (2, 0, 0)),
             2: ((1, 1, 0), (3, 0, 0)),
             3: ((0, 0, 1), (2, 1, 0))}


# ----------------------------------------------------------------------------
# The fused Pallas kernel
# ----------------------------------------------------------------------------
def _dcgan_g_kernel(xe_ref, w1e_ref, w2_ref, w3_ref, gb1_ref, gb2_ref, masks_ref,
                    out_ref, h1s_ref, p0_ref, p1_ref, p2_ref, p3_ref):
    f32 = jnp.float32
    zd, c1, nl = w1e_ref.shape          # (z_dim, 64, B*49)
    c2 = w2_ref.shape[1]                # 32
    ph_refs = (p0_ref, p1_ref, p2_ref, p3_ref)

    # Zero the padded scratch slabs once so every shifted window reads 0 in the
    # pad columns (belt & suspenders -- masked lanes are also where()'d to 0).
    h1s_ref[...] = jnp.zeros(h1s_ref.shape, f32)
    for r in ph_refs:
        r[...] = jnp.zeros(r.shape, f32)

    cache = {}

    def shifted(name, ref, dh, dw):
        """(C, nl) view of ref's slab shifted by (dh, dw) on the 7x7 grid,
        zero where the shift leaves the per-image 7x7 window."""
        key = (name, dh, dw)
        if key not in cache:
            lo = _PAD + dh * _BASE + dw
            v = ref[:, lo:lo + nl]
            if (dh, dw) != (0, 0):
                midx = (dh + 1) * 3 + (dw + 1)
                m = masks_ref[midx:midx + 1, :]
                v = jnp.where(m > 0.5, v, 0.0)
            cache[key] = v
        return cache[key]

    # ---- Layer 1: ConvTranspose2d(z_dim, 64, k=7, s=1, p=0) on a 1x1 input --
    # out1[co, (b, kh, kw)] = sum_ci x[b, ci] * w1[ci, co, kh, kw]
    h1 = jnp.zeros((c1, nl), f32)
    for ci in range(zd):
        h1 = h1 + w1e_ref[ci] * xe_ref[ci:ci + 1, :]

    # ---- BatchNorm2d(64) (training batch stats, one pass) + ReLU ------------
    inv_n1 = 1.0 / float(nl)
    mean1 = jnp.sum(h1, axis=1, keepdims=True) * inv_n1
    var1 = jnp.sum(h1 * h1, axis=1, keepdims=True) * inv_n1 - mean1 * mean1
    scale1 = gb1_ref[:, 0:1] * jax.lax.rsqrt(var1 + _EPS)
    shift1 = gb1_ref[:, 1:2] - mean1 * scale1
    h1s_ref[:, _PAD:_PAD + nl] = jnp.maximum(h1 * scale1 + shift1, 0.0)

    # ---- Layer 2: ConvTranspose2d(64, 32, k=4, s=2, p=1) as 4 output phases -
    raw2 = []
    for qh in (0, 1):
        for qw in (0, 1):
            acc = jnp.zeros((c2, nl), f32)
            for kh, dh in _L2_TERMS[qh]:
                for kw, dw in _L2_TERMS[qw]:
                    rhs = shifted("h1", h1s_ref, dh, dw)              # (64, nl)
                    acc = acc + jnp.dot(w2_ref[kh * 4 + kw], rhs,
                                        preferred_element_type=f32)  # (32, nl)
            raw2.append(acc)

    # ---- BatchNorm2d(32) over all 4 phases + ReLU ---------------------------
    inv_n2 = 1.0 / float(4 * nl)
    s_lin = jnp.zeros((c2, 1), f32)
    s_sq = jnp.zeros((c2, 1), f32)
    for r in raw2:
        s_lin = s_lin + jnp.sum(r, axis=1, keepdims=True)
        s_sq = s_sq + jnp.sum(r * r, axis=1, keepdims=True)
    mean2 = s_lin * inv_n2
    var2 = s_sq * inv_n2 - mean2 * mean2
    scale2 = gb2_ref[:, 0:1] * jax.lax.rsqrt(var2 + _EPS)
    shift2 = gb2_ref[:, 1:2] - mean2 * scale2
    for p, r in enumerate(raw2):
        ph_refs[p][:, _PAD:_PAD + nl] = jnp.maximum(r * scale2 + shift2, 0.0)

    # ---- Layer 3: ConvTranspose2d(32, 1, k=4, s=2, p=1) as 16 phases + Tanh -
    for qh3 in range(4):
        for qw3 in range(4):
            acc = jnp.zeros((c2, nl), f32)
            for kh, sh, dh in _L3_TERMS[qh3]:
                for kw, sw, dw in _L3_TERMS[qw3]:
                    src = sh * 2 + sw
                    s = shifted(("h2", src), ph_refs[src], dh, dw)    # (32, nl)
                    acc = acc + w3_ref[kh * 4 + kw] * s               # (32,1)*(32,nl)
            row = jnp.tanh(jnp.sum(acc, axis=0, keepdims=True))       # (1, nl)
            q = qh3 * 4 + qw3
            out_ref[q:q + 1, :] = row


# ----------------------------------------------------------------------------
# Wrapper: weight re-layout (XLA, tiny) + pallas_call + final phase interleave
# ----------------------------------------------------------------------------
def _phase_masks(batch):
    """(9, batch*49) {0,1} masks; row (dh+1)*3+(dw+1) marks lanes whose shifted
    position (m+dh, n+dw) stays inside the per-image 7x7 grid."""
    m = np.arange(_BASE * _BASE) // _BASE
    n = np.arange(_BASE * _BASE) % _BASE
    rows = []
    for dh in (-1, 0, 1):
        for dw in (-1, 0, 1):
            ok_h = np.ones_like(m, dtype=bool) if dh == 0 else \
                (m <= _BASE - 2 if dh > 0 else m >= 1)
            ok_w = np.ones_like(n, dtype=bool) if dw == 0 else \
                (n <= _BASE - 2 if dw > 0 else n >= 1)
            rows.append(np.tile((ok_h & ok_w).astype(np.float32), batch))
    return jnp.asarray(np.stack(rows, axis=0))


def dcgan_g_forward(params, x):
    B = x.shape[0]
    zd = params["w1"].shape[0]
    c1 = params["w1"].shape[1]          # 64
    c2 = params["w2"].shape[1]          # 32
    nl = B * _BASE * _BASE              # flattened (b, m, n) lane axis
    nlp = nl + 2 * _PAD

    x2 = x.reshape(B, zd).astype(jnp.float32)        # view(B, -1, 1, 1) -> (B, z)

    # Lane-layout prep (weights / tiny constants only; no activations in HBM).
    xe = jnp.repeat(x2.T, _BASE * _BASE, axis=1)                              # (z, nl)
    w1e = jnp.tile(params["w1"].reshape(zd, c1, _BASE * _BASE), (1, 1, B))    # (z, 64, nl)
    w2t = params["w2"].transpose(2, 3, 1, 0).reshape(16, c2, c1)              # (kh*4+kw, 32, 64)
    w3t = params["w3"].transpose(2, 3, 0, 1).reshape(16, c2, 1)               # (kh*4+kw, 32, 1)
    gb1 = jnp.stack([params["g1"], params["b1"]], axis=1)                     # (64, 2)
    gb2 = jnp.stack([params["g2"], params["b2"]], axis=1)                     # (32, 2)
    masks = _phase_masks(B)                                                   # (9, nl)

    vmem = pltpu.MemorySpace.VMEM
    out16 = pl.pallas_call(
        _dcgan_g_kernel,
        out_shape=jax.ShapeDtypeStruct((16, nl), jnp.float32),
        in_specs=[pl.BlockSpec(memory_space=vmem)] * 7,
        out_specs=pl.BlockSpec(memory_space=vmem),
        scratch_shapes=[pltpu.VMEM((c1, nlp), jnp.float32)]
                       + [pltpu.VMEM((c2, nlp), jnp.float32) for _ in range(4)],
    )(xe, w1e, w2t, w3t, gb1, gb2, masks)

    # Interleave the 16 sub-phases back to NCHW (6 KB transpose in XLA).
    img = (out16.reshape(4, 4, B, _BASE, _BASE)
                .transpose(2, 3, 0, 4, 1)
                .reshape(B, 4 * _BASE, 4 * _BASE))
    return img[:, None, :, :]


# ----------------------------------------------------------------------------
# Parameter init (matches dcgan_G.__init__ distributions, deterministic)
# ----------------------------------------------------------------------------
def init_params(key, z_dim):
    ks = jax.random.split(key, 5)
    return {
        "w1": 0.02 * jax.random.normal(ks[0], (z_dim, 64, 7, 7), jnp.float32),
        "w2": 0.02 * jax.random.normal(ks[1], (64, 32, 4, 4), jnp.float32),
        "w3": 0.02 * jax.random.normal(ks[2], (32, 1, 4, 4), jnp.float32),
        "g1": 1.0 + 0.02 * jax.random.normal(ks[3], (64,), jnp.float32),
        "b1": jnp.zeros((64,), jnp.float32),
        "g2": 1.0 + 0.02 * jax.random.normal(ks[4], (32,), jnp.float32),
        "b2": jnp.zeros((32,), jnp.float32),
    }


# ----------------------------------------------------------------------------
# Pure-JAX (XLA) reference for correctness checking
# ----------------------------------------------------------------------------
def _ref_conv_transpose2d(x, w, k, stride, pad):
    B, C, H, W = x.shape
    hd = H + (H - 1) * (stride - 1)
    wd = W + (W - 1) * (stride - 1)
    xd = jnp.zeros((B, C, hd, wd), x.dtype).at[:, :, ::stride, ::stride].set(x)
    p = k - 1 - pad
    xp = jnp.pad(xd, ((0, 0), (0, 0), (p, p), (p, p)))
    ho = hd + 2 * p - k + 1
    wo = wd + 2 * p - k + 1
    wf = w[:, :, ::-1, ::-1]
    out = jnp.zeros((B, w.shape[1], ho, wo), x.dtype)
    for kh in range(k):
        for kw in range(k):
            out = out + jnp.einsum("bchw,co->bohw",
                                   xp[:, :, kh:kh + ho, kw:kw + wo],
                                   wf[:, :, kh, kw],
                                   precision=jax.lax.Precision.HIGHEST)
    return out


def _ref_bn_relu(x, g, b, eps=_EPS):
    mean = jnp.mean(x, axis=(0, 2, 3), keepdims=True)
    var = jnp.mean(jnp.square(x - mean), axis=(0, 2, 3), keepdims=True)
    y = (x - mean) / jnp.sqrt(var + eps) * g.reshape(1, -1, 1, 1) + b.reshape(1, -1, 1, 1)
    return jnp.maximum(y, 0.0)


def dcgan_g_reference(params, x):
    B = x.shape[0]
    zd = params["w1"].shape[0]
    x2 = x.reshape(B, zd)
    h = jnp.einsum("bc,cohw->bohw", x2, params["w1"],
                   precision=jax.lax.Precision.HIGHEST)
    h = _ref_bn_relu(h, params["g1"], params["b1"])
    h = _ref_conv_transpose2d(h, params["w2"], 4, 2, 1)
    h = _ref_bn_relu(h, params["g2"], params["b2"])
    h = _ref_conv_transpose2d(h, params["w3"], 4, 2, 1)
    return jnp.tanh(h)


if __name__ == "__main__":
    z_dim = 16
    batch = 2
    img_size = 28  # implied by the architecture: 7 -> 14 -> 28

    key = jax.random.PRNGKey(0)
    k_param, k_x = jax.random.split(key)
    params = init_params(k_param, z_dim)

    # Latent input; forward() views it as (B, z_dim, 1, 1).
    x = jax.random.normal(k_x, (batch, z_dim, 1, 1), jnp.float32)

    out = jax.block_until_ready(jax.jit(dcgan_g_forward)(params, x))

    assert out.shape == (batch, 1, img_size, img_size), out.shape
    assert out.dtype == jnp.float32
    assert bool(jnp.all(jnp.isfinite(out)))
    assert bool(jnp.all(jnp.abs(out) <= 1.0))  # tanh range

    ref = jax.block_until_ready(jax.jit(dcgan_g_reference)(params, x))
    max_err = float(jnp.max(jnp.abs(out - ref)))
    assert max_err < 5e-3, f"kernel deviates from reference: max abs err = {max_err}"

    print("KERNEL_OK")
</pallas_src>

<mosaic_0001>
module attributes {stable_mosaic.version = 11 : i64} {
  func.func @_dcgan_g_kernel(%arg0: memref<16x98xf32, #tpu.memory_space<vmem>>, %arg1: memref<16x64x98xf32, #tpu.memory_space<vmem>>, %arg2: memref<16x32x64xf32, #tpu.memory_space<vmem>>, %arg3: memref<16x32x1xf32, #tpu.memory_space<vmem>>, %arg4: memref<64x2xf32, #tpu.memory_space<vmem>>, %arg5: memref<32x2xf32, #tpu.memory_space<vmem>>, %arg6: memref<9x98xf32, #tpu.memory_space<vmem>>, %arg7: memref<16x98xf32, #tpu.memory_space<vmem>>, %arg8: memref<64x114xf32, #tpu.memory_space<vmem>>, %arg9: memref<32x114xf32, #tpu.memory_space<vmem>>, %arg10: memref<32x114xf32, #tpu.memory_space<vmem>>, %arg11: memref<32x114xf32, #tpu.memory_space<vmem>>, %arg12: memref<32x114xf32, #tpu.memory_space<vmem>>) attributes {dimension_semantics = [], scalar_prefetch = 0 : i64, scratch_operands = 5 : i64, tpu.core_type = #tpu.core_type<tc>} {
    %cst = arith.constant 0.000000e+00 : f32
    %0 = vector.broadcast %cst : f32 to vector<64x114xf32>
    %c0 = arith.constant 0 : index
    %c0_0 = arith.constant 0 : index
    %1 = vector.load %arg8[%c0, %c0_0] : memref<64x114xf32, #tpu.memory_space<vmem>>, vector<64x114xf32>
    tpu.vector_store %arg8[%c0, %c0_0], %0 {strides = array<i32>} : memref<64x114xf32, #tpu.memory_space<vmem>>, vector<64x114xf32>,
    %cst_1 = arith.constant 0.000000e+00 : f32
    %2 = vector.broadcast %cst_1 : f32 to vector<32x114xf32>
    %c0_2 = arith.constant 0 : index
    %c0_3 = arith.constant 0 : index
    %3 = vector.load %arg9[%c0_2, %c0_3] : memref<32x114xf32, #tpu.memory_space<vmem>>, vector<32x114xf32>
    tpu.vector_store %arg9[%c0_2, %c0_3], %2 {strides = array<i32>} : memref<32x114xf32, #tpu.memory_space<vmem>>, vector<32x114xf32>,
    %cst_4 = arith.constant 0.000000e+00 : f32
    %4 = vector.broadcast %cst_4 : f32 to vector<32x114xf32>
    %c0_5 = arith.constant 0 : index
    %c0_6 = arith.constant 0 : index
    %5 = vector.load %arg10[%c0_5, %c0_6] : memref<32x114xf32, #tpu.memory_space<vmem>>, vector<32x114xf32>
    tpu.vector_store %arg10[%c0_5, %c0_6], %4 {strides = array<i32>} : memref<32x114xf32, #tpu.memory_space<vmem>>, vector<32x114xf32>,
    %cst_7 = arith.constant 0.000000e+00 : f32
    %6 = vector.broadcast %cst_7 : f32 to vector<32x114xf32>
    %c0_8 = arith.constant 0 : index
    %c0_9 = arith.constant 0 : index
    %7 = vector.load %arg11[%c0_8, %c0_9] : memref<32x114xf32, #tpu.memory_space<vmem>>, vector<32x114xf32>
    tpu.vector_store %arg11[%c0_8, %c0_9], %6 {strides = array<i32>} : memref<32x114xf32, #tpu.memory_space<vmem>>, vector<32x114xf32>,
    %cst_10 = arith.constant 0.000000e+00 : f32
    %8 = vector.broadcast %cst_10 : f32 to vector<32x114xf32>
    %c0_11 = arith.constant 0 : index
    %c0_12 = arith.constant 0 : index
    %9 = vector.load %arg12[%c0_11, %c0_12] : memref<32x114xf32, #tpu.memory_space<vmem>>, vector<32x114xf32>
    tpu.vector_store %arg12[%c0_11, %c0_12], %8 {strides = array<i32>} : memref<32x114xf32, #tpu.memory_space<vmem>>, vector<32x114xf32>,
    %cst_13 = arith.constant 0.000000e+00 : f32
    %10 = vector.broadcast %cst_13 : f32 to vector<64x98xf32>
    %c0_14 = arith.constant 0 : index
    %c0_15 = arith.constant 0 : index
    %c0_16 = arith.constant 0 : index
    %11 = vector.load %arg1[%c0_14, %c0_15, %c0_16] : memref<16x64x98xf32, #tpu.memory_space<vmem>>, vector<1x64x98xf32>
    %12 = vector.shape_cast %11 : vector<1x64x98xf32> to vector<64x98xf32>
    %c0_17 = arith.constant 0 : index
    %c0_18 = arith.constant 0 : index
    %13 = vector.load %arg0[%c0_17, %c0_18] : memref<16x98xf32, #tpu.memory_space<vmem>>, vector<1x98xf32>
    %14 = vector.broadcast %13 : vector<1x98xf32> to vector<64x98xf32>
    %15 = arith.mulf %12, %14 : vector<64x98xf32>
    %16 = arith.addf %10, %15 : vector<64x98xf32>
    %c1 = arith.constant 1 : index
    %c0_19 = arith.constant 0 : index
    %c0_20 = arith.constant 0 : index
    %17 = vector.load %arg1[%c1, %c0_19, %c0_20] : memref<16x64x98xf32, #tpu.memory_space<vmem>>, vector<1x64x98xf32>
    %18 = vector.shape_cast %17 : vector<1x64x98xf32> to vector<64x98xf32>
    %c1_21 = arith.constant 1 : index
    %c0_22 = arith.constant 0 : index
    %19 = vector.load %arg0[%c1_21, %c0_22] : memref<16x98xf32, #tpu.memory_space<vmem>>, vector<1x98xf32>
    %20 = vector.broadcast %19 : vector<1x98xf32> to vector<64x98xf32>
    %21 = arith.mulf %18, %20 : vector<64x98xf32>
    %22 = arith.addf %16, %21 : vector<64x98xf32>
    %c2 = arith.constant 2 : index
    %c0_23 = arith.constant 0 : index
    %c0_24 = arith.constant 0 : index
    %23 = vector.load %arg1[%c2, %c0_23, %c0_24] : memref<16x64x98xf32, #tpu.memory_space<vmem>>, vector<1x64x98xf32>
    %24 = vector.shape_cast %23 : vector<1x64x98xf32> to vector<64x98xf32>
    %c2_25 = arith.constant 2 : index
    %c0_26 = arith.constant 0 : index
    %25 = vector.load %arg0[%c2_25, %c0_26] : memref<16x98xf32, #tpu.memory_space<vmem>>, vector<1x98xf32>
    %26 = vector.broadcast %25 : vector<1x98xf32> to vector<64x98xf32>
    %27 = arith.mulf %24, %26 : vector<64x98xf32>
    %28 = arith.addf %22, %27 : vector<64x98xf32>
    %c3 = arith.constant 3 : index
    %c0_27 = arith.constant 0 : index
    %c0_28 = arith.constant 0 : index
    %29 = vector.load %arg1[%c3, %c0_27, %c0_28] : memref<16x64x98xf32, #tpu.memory_space<vmem>>, vector<1x64x98xf32>
    %30 = vector.shape_cast %29 : vector<1x64x98xf32> to vector<64x98xf32>
    %c3_29 = arith.constant 3 : index
    %c0_30 = arith.constant 0 : index
    %31 = vector.load %arg0[%c3_29, %c0_30] : memref<16x98xf32, #tpu.memory_space<vmem>>, vector<1x98xf32>
    %32 = vector.broadcast %31 : vector<1x98xf32> to vector<64x98xf32>
    %33 = arith.mulf %30, %32 : vector<64x98xf32>
    %34 = arith.addf %28, %33 : vector<64x98xf32>
    %c4 = arith.constant 4 : index
    %c0_31 = arith.constant 0 : index
    %c0_32 = arith.constant 0 : index
    %35 = vector.load %arg1[%c4, %c0_31, %c0_32] : memref<16x64x98xf32, #tpu.memory_space<vmem>>, vector<1x64x98xf32>
    %36 = vector.shape_cast %35 : vector<1x64x98xf32> to vector<64x98xf32>
    %c4_33 = arith.constant 4 : index
    %c0_34 = arith.constant 0 : index
    %37 = vector.load %arg0[%c4_33, %c0_34] : memref<16x98xf32, #tpu.memory_space<vmem>>, vector<1x98xf32>
    %38 = vector.broadcast %37 : vector<1x98xf32> to vector<64x98xf32>
    %39 = arith.mulf %36, %38 : vector<64x98xf32>
    %40 = arith.addf %34, %39 : vector<64x98xf32>
    %c5 = arith.constant 5 : index
    %c0_35 = arith.constant 0 : index
    %c0_36 = arith.constant 0 : index
    %41 = vector.load %arg1[%c5, %c0_35, %c0_36] : memref<16x64x98xf32, #tpu.memory_space<vmem>>, vector<1x64x98xf32>
    %42 = vector.shape_cast %41 : vector<1x64x98xf32> to vector<64x98xf32>
    %c5_37 = arith.constant 5 : index
    %c0_38 = arith.constant 0 : index
    %43 = vector.load %arg0[%c5_37, %c0_38] : memref<16x98xf32, #tpu.memory_space<vmem>>, vector<1x98xf32>
    %44 = vector.broadcast %43 : vector<1x98xf32> to vector<64x98xf32>
    %45 = arith.mulf %42, %44 : vector<64x98xf32>
    %46 = arith.addf %40, %45 : vector<64x98xf32>
    %c6 = arith.constant 6 : index
    %c0_39 = arith.constant 0 : index
    %c0_40 = arith.constant 0 : index
    %47 = vector.load %arg1[%c6, %c0_39, %c0_40] : memref<16x64x98xf32, #tpu.memory_space<vmem>>, vector<1x64x98xf32>
    %48 = vector.shape_cast %47 : vector<1x64x98xf32> to vector<64x98xf32>
    %c6_41 = arith.constant 6 : index
    %c0_42 = arith.constant 0 : index
    %49 = vector.load %arg0[%c6_41, %c0_42] : memref<16x98xf32, #tpu.memory_space<vmem>>, vector<1x98xf32>
    %50 = vector.broadcast %49 : vector<1x98xf32> to vector<64x98xf32>
    %51 = arith.mulf %48, %50 : vector<64x98xf32>
    %52 = arith.addf %46, %51 : vector<64x98xf32>
    %c7 = arith.constant 7 : index
    %c0_43 = arith.constant 0 : index
    %c0_44 = arith.constant 0 : index
    %53 = vector.load %arg1[%c7, %c0_43, %c0_44] : memref<16x64x98xf32, #tpu.memory_space<vmem>>, vector<1x64x98xf32>
    %54 = vector.shape_cast %53 : vector<1x64x98xf32> to vector<64x98xf32>
    %c7_45 = arith.constant 7 : index
    %c0_46 = arith.constant 0 : index
    %55 = vector.load %arg0[%c7_45, %c0_46] : memref<16x98xf32, #tpu.memory_space<vmem>>, vector<1x98xf32>
    %56 = vector.broadcast %55 : vector<1x98xf32> to vector<64x98xf32>
    %57 = arith.mulf %54, %56 : vector<64x98xf32>
    %58 = arith.addf %52, %57 : vector<64x98xf32>
    %c8 = arith.constant 8 : index
    %c0_47 = arith.constant 0 : index
    %c0_48 = arith.constant 0 : index
    %59 = vector.load %arg1[%c8, %c0_47, %c0_48] : memref<16x64x98xf32, #tpu.memory_space<vmem>>, vector<1x64x98xf32>
    %60 = vector.shape_cast %59 : vector<1x64x98xf32> to vector<64x98xf32>
    %c8_49 = arith.constant 8 : index
    %c0_50 = arith.constant 0 : index
    %61 = vector.load %arg0[%c8_49, %c0_50] : memref<16x98xf32, #tpu.memory_space<vmem>>, vector<1x98xf32>
    %62 = vector.broadcast %61 : vector<1x98xf32> to vector<64x98xf32>
    %63 = arith.mulf %60, %62 : vector<64x98xf32>
    %64 = arith.addf %58, %63 : vector<64x98xf32>
    %c9 = arith.constant 9 : index
    %c0_51 = arith.constant 0 : index
    %c0_52 = arith.constant 0 : index
    %65 = vector.load %arg1[%c9, %c0_51, %c0_52] : memref<16x64x98xf32, #tpu.memory_space<vmem>>, vector<1x64x98xf32>
    %66 = vector.shape_cast %65 : vector<1x64x98xf32> to vector<64x98xf32>
    %c9_53 = arith.constant 9 : index
    %c0_54 = arith.constant 0 : index
    %67 = vector.load %arg0[%c9_53, %c0_54] : memref<16x98xf32, #tpu.memory_space<vmem>>, vector<1x98xf32>
    %68 = vector.broadcast %67 : vector<1x98xf32> to vector<64x98xf32>
    %69 = arith.mulf %66, %68 : vector<64x98xf32>
    %70 = arith.addf %64, %69 : vector<64x98xf32>
    %c10 = arith.constant 10 : index
    %c0_55 = arith.constant 0 : index
    %c0_56 = arith.constant 0 : index
    %71 = vector.load %arg1[%c10, %c0_55, %c0_56] : memref<16x64x98xf32, #tpu.memory_space<vmem>>, vector<1x64x98xf32>
    %72 = vector.shape_cast %71 : vector<1x64x98xf32> to vector<64x98xf32>
    %c10_57 = arith.constant 10 : index
    %c0_58 = arith.constant 0 : index
    %73 = vector.load %arg0[%c10_57, %c0_58] : memref<16x98xf32, #tpu.memory_space<vmem>>, vector<1x98xf32>
    %74 = vector.broadcast %73 : vector<1x98xf32> to vector<64x98xf32>
    %75 = arith.mulf %72, %74 : vector<64x98xf32>
    %76 = arith.addf %70, %75 : vector<64x98xf32>
    %c11 = arith.constant 11 : index
    %c0_59 = arith.constant 0 : index
    %c0_60 = arith.constant 0 : index
    %77 = vector.load %arg1[%c11, %c0_59, %c0_60] : memref<16x64x98xf32, #tpu.memory_space<vmem>>, vector<1x64x98xf32>
    %78 = vector.shape_cast %77 : vector<1x64x98xf32> to vector<64x98xf32>
    %c11_61 = arith.constant 11 : index
    %c0_62 = arith.constant 0 : index
    %79 = vector.load %arg0[%c11_61, %c0_62] : memref<16x98xf32, #tpu.memory_space<vmem>>, vector<1x98xf32>
    %80 = vector.broadcast %79 : vector<1x98xf32> to vector<64x98xf32>
    %81 = arith.mulf %78, %80 : vector<64x98xf32>
    %82 = arith.addf %76, %81 : vector<64x98xf32>
    %c12 = arith.constant 12 : index
    %c0_63 = arith.constant 0 : index
    %c0_64 = arith.constant 0 : index
    %83 = vector.load %arg1[%c12, %c0_63, %c0_64] : memref<16x64x98xf32, #tpu.memory_space<vmem>>, vector<1x64x98xf32>
    %84 = vector.shape_cast %83 : vector<1x64x98xf32> to vector<64x98xf32>
    %c12_65 = arith.constant 12 : index
    %c0_66 = arith.constant 0 : index
    %85 = vector.load %arg0[%c12_65, %c0_66] : memref<16x98xf32, #tpu.memory_space<vmem>>, vector<1x98xf32>
    %86 = vector.broadcast %85 : vector<1x98xf32> to vector<64x98xf32>
    %87 = arith.mulf %84, %86 : vector<64x98xf32>
    %88 = arith.addf %82, %87 : vector<64x98xf32>
    %c13 = arith.constant 13 : index
    %c0_67 = arith.constant 0 : index
    %c0_68 = arith.constant 0 : index
    %89 = vector.load %arg1[%c13, %c0_67, %c0_68] : memref<16x64x98xf32, #tpu.memory_space<vmem>>, vector<1x64x98xf32>
    %90 = vector.shape_cast %89 : vector<1x64x98xf32> to vector<64x98xf32>
    %c13_69 = arith.constant 13 : index
    %c0_70 = arith.constant 0 : index
    %91 = vector.load %arg0[%c13_69, %c0_70] : memref<16x98xf32, #tpu.memory_space<vmem>>, vector<1x98xf32>
    %92 = vector.broadcast %91 : vector<1x98xf32> to vector<64x98xf32>
    %93 = arith.mulf %90, %92 : vector<64x98xf32>
    %94 = arith.addf %88, %93 : vector<64x98xf32>
    %c14 = arith.constant 14 : index
    %c0_71 = arith.constant 0 : index
    %c0_72 = arith.constant 0 : index
    %95 = vector.load %arg1[%c14, %c0_71, %c0_72] : memref<16x64x98xf32, #tpu.memory_space<vmem>>, vector<1x64x98xf32>
    %96 = vector.shape_cast %95 : vector<1x64x98xf32> to vector<64x98xf32>
    %c14_73 = arith.constant 14 : index
    %c0_74 = arith.constant 0 : index
    %97 = vector.load %arg0[%c14_73, %c0_74] : memref<16x98xf32, #tpu.memory_space<vmem>>, vector<1x98xf32>
    %98 = vector.broadcast %97 : vector<1x98xf32> to vector<64x98xf32>
    %99 = arith.mulf %96, %98 : vector<64x98xf32>
    %100 = arith.addf %94, %99 : vector<64x98xf32>
    %c15 = arith.constant 15 : index
    %c0_75 = arith.constant 0 : index
    %c0_76 = arith.constant 0 : index
    %101 = vector.load %arg1[%c15, %c0_75, %c0_76] : memref<16x64x98xf32, #tpu.memory_space<vmem>>, vector<1x64x98xf32>
    %102 = vector.shape_cast %101 : vector<1x64x98xf32> to vector<64x98xf32>
    %c15_77 = arith.constant 15 : index
    %c0_78 = arith.constant 0 : index
    %103 = vector.load %arg0[%c15_77, %c0_78] : memref<16x98xf32, #tpu.memory_space<vmem>>, vector<1x98xf32>
    %104 = vector.broadcast %103 : vector<1x98xf32> to vector<64x98xf32>
    %105 = arith.mulf %102, %104 : vector<64x98xf32>
    %106 = arith.addf %100, %105 : vector<64x98xf32>
    %cst_79 = arith.constant dense<0.000000e+00> : vector<64xf32>
    %107 = vector.multi_reduction <add>, %106, %cst_79 [1] : vector<64x98xf32> to vector<64xf32>
    %108 = vector.shape_cast %107 : vector<64xf32> to vector<64x1xf32>
    %cst_80 = arith.constant 0.0102040814 : f32
    %109 = vector.broadcast %cst_80 : f32 to vector<64x1xf32>
    %110 = arith.mulf %108, %109 : vector<64x1xf32>
    %111 = arith.mulf %106, %106 : vector<64x98xf32>
    %cst_81 = arith.constant dense<0.000000e+00> : vector<64xf32>
    %112 = vector.multi_reduction <add>, %111, %cst_81 [1] : vector<64x98xf32> to vector<64xf32>
    %113 = vector.shape_cast %112 : vector<64xf32> to vector<64x1xf32>
    %cst_82 = arith.constant 0.0102040814 : f32
    %114 = vector.broadcast %cst_82 : f32 to vector<64x1xf32>
    %115 = arith.mulf %113, %114 : vector<64x1xf32>
    %116 = arith.mulf %110, %110 : vector<64x1xf32>
    %117 = arith.subf %115, %116 : vector<64x1xf32>
    %c0_83 = arith.constant 0 : index
    %c0_84 = arith.constant 0 : index
    %118 = vector.load %arg4[%c0_83, %c0_84] : memref<64x2xf32, #tpu.memory_space<vmem>>, vector<64x1xf32>
    %cst_85 = arith.constant 9.99999974E-6 : f32
    %119 = vector.broadcast %cst_85 : f32 to vector<64x1xf32>
    %120 = arith.addf %117, %119 : vector<64x1xf32>
    %121 = math.rsqrt %120 : vector<64x1xf32>
    %122 = arith.mulf %118, %121 : vector<64x1xf32>
    %c0_86 = arith.constant 0 : index
    %c1_87 = arith.constant 1 : index
    %123 = vector.load %arg4[%c0_86, %c1_87] : memref<64x2xf32, #tpu.memory_space<vmem>>, vector<64x1xf32>
    %124 = arith.mulf %110, %122 : vector<64x1xf32>
    %125 = arith.subf %123, %124 : vector<64x1xf32>
    %126 = vector.broadcast %122 : vector<64x1xf32> to vector<64x98xf32>
    %127 = arith.mulf %106, %126 : vector<64x98xf32>
    %128 = vector.broadcast %125 : vector<64x1xf32> to vector<64x98xf32>
    %129 = arith.addf %127, %128 : vector<64x98xf32>
    %cst_88 = arith.constant 0.000000e+00 : f32
    %130 = vector.broadcast %cst_88 : f32 to vector<64x98xf32>
    %131 = arith.maximumf %129, %130 : vector<64x98xf32>
    %c0_89 = arith.constant 0 : index
    %c8_90 = arith.constant 8 : index
    %132 = vector.load %arg8[%c0_89, %c8_90] : memref<64x114xf32, #tpu.memory_space<vmem>>, vector<64x98xf32>
    tpu.vector_store %arg8[%c0_89, %c8_90], %131 {strides = array<i32>} : memref<64x114xf32, #tpu.memory_space<vmem>>, vector<64x98xf32>,
    %cst_91 = arith.constant 0.000000e+00 : f32
    %133 = vector.broadcast %cst_91 : f32 to vector<32x98xf32>
    %c0_92 = arith.constant 0 : index
    %c8_93 = arith.constant 8 : index
    %134 = vector.load %arg8[%c0_92, %c8_93] : memref<64x114xf32, #tpu.memory_space<vmem>>, vector<64x98xf32>
    %c5_94 = arith.constant 5 : index
    %c0_95 = arith.constant 0 : index
    %c0_96 = arith.constant 0 : index
    %135 = vector.load %arg2[%c5_94, %c0_95, %c0_96] : memref<16x32x64xf32, #tpu.memory_space<vmem>>, vector<1x32x64xf32>
    %136 = vector.shape_cast %135 : vector<1x32x64xf32> to vector<32x64xf32>
    %cst_97 = arith.constant dense<0.000000e+00> : vector<32x98xf32>
    %137 = tpu.matmul %136, %134, %cst_97 {dimension_numbers = #tpu.dot_dimension_numbers<[1], [0], [0], [1], [0, 0, 1, 1], [], []>} : vector<32x64xf32>, vector<64x98xf32>, vector<32x98xf32> -> vector<32x98xf32>
    %138 = arith.addf %133, %137 : vector<32x98xf32>
    %c0_98 = arith.constant 0 : index
    %c7_99 = arith.constant 7 : index
    %139 = vector.load %arg8[%c0_98, %c7_99] : memref<64x114xf32, #tpu.memory_space<vmem>>, vector<64x98xf32>
    %c3_100 = arith.constant 3 : index
    %c0_101 = arith.constant 0 : index
    %140 = vector.load %arg6[%c3_100, %c0_101] : memref<9x98xf32, #tpu.memory_space<vmem>>, vector<1x98xf32>
    %cst_102 = arith.constant 5.000000e-01 : f32
    %141 = vector.broadcast %cst_102 : f32 to vector<1x98xf32>
    %142 = arith.cmpf ogt, %140, %141 : vector<1x98xf32>
    %cst_103 = arith.constant 0.000000e+00 : f32
    %143 = vector.shape_cast %142 : vector<1x98xi1> to vector<1x98xi1>
    %144 = vector.broadcast %143 : vector<1x98xi1> to vector<64x98xi1>
    %145 = vector.broadcast %cst_103 : f32 to vector<64x98xf32>
    %146 = arith.select %144, %139, %145 : vector<64x98xi1>, vector<64x98xf32>
    %c7_104 = arith.constant 7 : index
    %c0_105 = arith.constant 0 : index
    %c0_106 = arith.constant 0 : index
    %147 = vector.load %arg2[%c7_104, %c0_105, %c0_106] : memref<16x32x64xf32, #tpu.memory_space<vmem>>, vector<1x32x64xf32>
    %148 = vector.shape_cast %147 : vector<1x32x64xf32> to vector<32x64xf32>
    %cst_107 = arith.constant dense<0.000000e+00> : vector<32x98xf32>
    %149 = tpu.matmul %148, %146, %cst_107 {dimension_numbers = #tpu.dot_dimension_numbers<[1], [0], [0], [1], [0, 0, 1, 1], [], []>} : vector<32x64xf32>, vector<64x98xf32>, vector<32x98xf32> -> vector<32x98xf32>
    %150 = arith.addf %138, %149 : vector<32x98xf32>
    %c0_108 = arith.constant 0 : index
    %c1_109 = arith.constant 1 : index
    %151 = vector.load %arg8[%c0_108, %c1_109] : memref<64x114xf32, #tpu.memory_space<vmem>>, vector<64x98xf32>
    %c1_110 = arith.constant 1 : index
    %c0_111 = arith.constant 0 : index
    %152 = vector.load %arg6[%c1_110, %c0_111] : memref<9x98xf32, #tpu.memory_space<vmem>>, vector<1x98xf32>
    %cst_112 = arith.constant 5.000000e-01 : f32
    %153 = vector.broadcast %cst_112 : f32 to vector<1x98xf32>
    %154 = arith.cmpf ogt, %152, %153 : vector<1x98xf32>
    %cst_113 = arith.constant 0.000000e+00 : f32
    %155 = vector.shape_cast %154 : vector<1x98xi1> to vector<1x98xi1>
    %156 = vector.broadcast %155 : vector<1x98xi1> to vector<64x98xi1>
    %157 = vector.broadcast %cst_113 : f32 to vector<64x98xf32>
    %158 = arith.select %156, %151, %157 : vector<64x98xi1>, vector<64x98xf32>
    %c13_114 = arith.constant 13 : index
    %c0_115 = arith.constant 0 : index
    %c0_116 = arith.constant 0 : index
    %159 = vector.load %arg2[%c13_114, %c0_115, %c0_116] : memref<16x32x64xf32, #tpu.memory_space<vmem>>, vector<1x32x64xf32>
    %160 = vector.shape_cast %159 : vector<1x32x64xf32> to vector<32x64xf32>
    %cst_117 = arith.constant dense<0.000000e+00> : vector<32x98xf32>
    %161 = tpu.matmul %160, %158, %cst_117 {dimension_numbers = #tpu.dot_dimension_numbers<[1], [0], [0], [1], [0, 0, 1, 1], [], []>} : vector<32x64xf32>, vector<64x98xf32>, vector<32x98xf32> -> vector<32x98xf32>
    %162 = arith.addf %150, %161 : vector<32x98xf32>
    %c0_118 = arith.constant 0 : index
    %c0_119 = arith.constant 0 : index
    %163 = vector.load %arg8[%c0_118, %c0_119] : memref<64x114xf32, #tpu.memory_space<vmem>>, vector<64x98xf32>
    %c0_120 = arith.constant 0 : index
    %c0_121 = arith.constant 0 : index
    %164 = vector.load %arg6[%c0_120, %c0_121] : memref<9x98xf32, #tpu.memory_space<vmem>>, vector<1x98xf32>
    %cst_122 = arith.constant 5.000000e-01 : f32
    %165 = vector.broadcast %cst_122 : f32 to vector<1x98xf32>
    %166 = arith.cmpf ogt, %164, %165 : vector<1x98xf32>
    %cst_123 = arith.constant 0.000000e+00 : f32
    %167 = vector.shape_cast %166 : vector<1x98xi1> to vector<1x98xi1>
    %168 = vector.broadcast %167 : vector<1x98xi1> to vector<64x98xi1>
    %169 = vector.broadcast %cst_123 : f32 to vector<64x98xf32>
    %170 = arith.select %168, %163, %169 : vector<64x98xi1>, vector<64x98xf32>
    %c15_124 = arith.constant 15 : index
    %c0_125 = arith.constant 0 : index
    %c0_126 = arith.constant 0 : index
    %171 = vector.load %arg2[%c15_124, %c0_125, %c0_126] : memref<16x32x64xf32, #tpu.memory_space<vmem>>, vector<1x32x64xf32>
    %172 = vector.shape_cast %171 : vector<1x32x64xf32> to vector<32x64xf32>
    %cst_127 = arith.constant dense<0.000000e+00> : vector<32x98xf32>
    %173 = tpu.matmul %172, %170, %cst_127 {dimension_numbers = #tpu.dot_dimension_numbers<[1], [0], [0], [1], [0, 0, 1, 1], [], []>} : vector<32x64xf32>, vector<64x98xf32>, vector<32x98xf32> -> vector<32x98xf32>
    %174 = arith.addf %162, %173 : vector<32x98xf32>
    %cst_128 = arith.constant 0.000000e+00 : f32
    %175 = vector.broadcast %cst_128 : f32 to vector<32x98xf32>
    %c0_129 = arith.constant 0 : index
    %c9_130 = arith.constant 9 : index
    %176 = vector.load %arg8[%c0_129, %c9_130] : memref<64x114xf32, #tpu.memory_space<vmem>>, vector<64x98xf32>
    %c5_131 = arith.constant 5 : index
    %c0_132 = arith.constant 0 : index
    %177 = vector.load %arg6[%c5_131, %c0_132] : memref<9x98xf32, #tpu.memory_space<vmem>>, vector<1x98xf32>
    %cst_133 = arith.constant 5.000000e-01 : f32
    %178 = vector.broadcast %cst_133 : f32 to vector<1x98xf32>
    %179 = arith.cmpf ogt, %177, %178 : vector<1x98xf32>
    %cst_134 = arith.constant 0.000000e+00 : f32
    %180 = vector.shape_cast %179 : vector<1x98xi1> to vector<1x98xi1>
    %181 = vector.broadcast %180 : vector<1x98xi1> to vector<64x98xi1>
    %182 = vector.broadcast %cst_134 : f32 to vector<64x98xf32>
    %183 = arith.select %181, %176, %182 : vector<64x98xi1>, vector<64x98xf32>
    %c4_135 = arith.constant 4 : index
    %c0_136 = arith.constant 0 : index
    %c0_137 = arith.constant 0 : index
    %184 = vector.load %arg2[%c4_135, %c0_136, %c0_137] : memref<16x32x64xf32, #tpu.memory_space<vmem>>, vector<1x32x64xf32>
    %185 = vector.shape_cast %184 : vector<1x32x64xf32> to vector<32x64xf32>
    %cst_138 = arith.constant dense<0.000000e+00> : vector<32x98xf32>
    %186 = tpu.matmul %185, %183, %cst_138 {dimension_numbers = #tpu.dot_dimension_numbers<[1], [0], [0], [1], [0, 0, 1, 1], [], []>} : vector<32x64xf32>, vector<64x98xf32>, vector<32x98xf32> -> vector<32x98xf32>
    %187 = arith.addf %175, %186 : vector<32x98xf32>
    %c6_139 = arith.constant 6 : index
    %c0_140 = arith.constant 0 : index
    %c0_141 = arith.constant 0 : index
    %188 = vector.load %arg2[%c6_139, %c0_140, %c0_141] : memref<16x32x64xf32, #tpu.memory_space<vmem>>, vector<1x32x64xf32>
    %189 = vector.shape_cast %188 : vector<1x32x64xf32> to vector<32x64xf32>
    %cst_142 = arith.constant dense<0.000000e+00> : vector<32x98xf32>
    %190 = tpu.matmul %189, %134, %cst_142 {dimension_numbers = #tpu.dot_dimension_numbers<[1], [0], [0], [1], [0, 0, 1, 1], [], []>} : vector<32x64xf32>, vector<64x98xf32>, vector<32x98xf32> -> vector<32x98xf32>
    %191 = arith.addf %187, %190 : vector<32x98xf32>
    %c0_143 = arith.constant 0 : index
    %c2_144 = arith.constant 2 : index
    %192 = vector.load %arg8[%c0_143, %c2_144] : memref<64x114xf32, #tpu.memory_space<vmem>>, vector<64x98xf32>
    %c2_145 = arith.constant 2 : index
    %c0_146 = arith.constant 0 : index
    %193 = vector.load %arg6[%c2_145, %c0_146] : memref<9x98xf32, #tpu.memory_space<vmem>>, vector<1x98xf32>
    %cst_147 = arith.constant 5.000000e-01 : f32
    %194 = vector.broadcast %cst_147 : f32 to vector<1x98xf32>
    %195 = arith.cmpf ogt, %193, %194 : vector<1x98xf32>
    %cst_148 = arith.constant 0.000000e+00 : f32
    %196 = vector.shape_cast %195 : vector<1x98xi1> to vector<1x98xi1>
    %197 = vector.broadcast %196 : vector<1x98xi1> to vector<64x98xi1>
    %198 = vector.broadcast %cst_148 : f32 to vector<64x98xf32>
    %199 = arith.select %197, %192, %198 : vector<64x98xi1>, vector<64x98xf32>
    %c12_149 = arith.constant 12 : index
    %c0_150 = arith.constant 0 : index
    %c0_151 = arith.constant 0 : index
    %200 = vector.load %arg2[%c12_149, %c0_150, %c0_151] : memref<16x32x64xf32, #tpu.memory_space<vmem>>, vector<1x32x64xf32>
    %201 = vector.shape_cast %200 : vector<1x32x64xf32> to vector<32x64xf32>
    %cst_152 = arith.constant dense<0.000000e+00> : vector<32x98xf32>
    %202 = tpu.matmul %201, %199, %cst_152 {dimension_numbers = #tpu.dot_dimension_numbers<[1], [0], [0], [1], [0, 0, 1, 1], [], []>} : vector<32x64xf32>, vector<64x98xf32>, vector<32x98xf32> -> vector<32x98xf32>
    %203 = arith.addf %191, %202 : vector<32x98xf32>
    %c14_153 = arith.constant 14 : index
    %c0_154 = arith.constant 0 : index
    %c0_155 = arith.constant 0 : index
    %204 = vector.load %arg2[%c14_153, %c0_154, %c0_155] : memref<16x32x64xf32, #tpu.memory_space<vmem>>, vector<1x32x64xf32>
    %205 = vector.shape_cast %204 : vector<1x32x64xf32> to vector<32x64xf32>
    %cst_156 = arith.constant dense<0.000000e+00> : vector<32x98xf32>
    %206 = tpu.matmul %205, %158, %cst_156 {dimension_numbers = #tpu.dot_dimension_numbers<[1], [0], [0], [1], [0, 0, 1, 1], [], []>} : vector<32x64xf32>, vector<64x98xf32>, vector<32x98xf32> -> vector<32x98xf32>
    %207 = arith.addf %203, %206 : vector<32x98xf32>
    %cst_157 = arith.constant 0.000000e+00 : f32
    %208 = vector.broadcast %cst_157 : f32 to vector<32x98xf32>
    %c0_158 = arith.constant 0 : index
    %c15_159 = arith.constant 15 : index
    %209 = vector.load %arg8[%c0_158, %c15_159] : memref<64x114xf32, #tpu.memory_space<vmem>>, vector<64x98xf32>
    %c7_160 = arith.constant 7 : index
    %c0_161 = arith.constant 0 : index
    %210 = vector.load %arg6[%c7_160, %c0_161] : memref<9x98xf32, #tpu.memory_space<vmem>>, vector<1x98xf32>
    %cst_162 = arith.constant 5.000000e-01 : f32
    %211 = vector.broadcast %cst_162 : f32 to vector<1x98xf32>
    %212 = arith.cmpf ogt, %210, %211 : vector<1x98xf32>
    %cst_163 = arith.constant 0.000000e+00 : f32
    %213 = vector.shape_cast %212 : vector<1x98xi1> to vector<1x98xi1>
    %214 = vector.broadcast %213 : vector<1x98xi1> to vector<64x98xi1>
    %215 = vector.broadcast %cst_163 : f32 to vector<64x98xf32>
    %216 = arith.select %214, %209, %215 : vector<64x98xi1>, vector<64x98xf32>
    %c1_164 = arith.constant 1 : index
    %c0_165 = arith.constant 0 : index
    %c0_166 = arith.constant 0 : index
    %217 = vector.load %arg2[%c1_164, %c0_165, %c0_166] : memref<16x32x64xf32, #tpu.memory_space<vmem>>, vector<1x32x64xf32>
    %218 = vector.shape_cast %217 : vector<1x32x64xf32> to vector<32x64xf32>
    %cst_167 = arith.constant dense<0.000000e+00> : vector<32x98xf32>
    %219 = tpu.matmul %218, %216, %cst_167 {dimension_numbers = #tpu.dot_dimension_numbers<[1], [0], [0], [1], [0, 0, 1, 1], [], []>} : vector<32x64xf32>, vector<64x98xf32>, vector<32x98xf32> -> vector<32x98xf32>
    %220 = arith.addf %208, %219 : vector<32x98xf32>
    %c0_168 = arith.constant 0 : index
    %c14_169 = arith.constant 14 : index
    %221 = vector.load %arg8[%c0_168, %c14_169] : memref<64x114xf32, #tpu.memory_space<vmem>>, vector<64x98xf32>
    %c6_170 = arith.constant 6 : index
    %c0_171 = arith.constant 0 : index
    %222 = vector.load %arg6[%c6_170, %c0_171] : memref<9x98xf32, #tpu.memory_space<vmem>>, vector<1x98xf32>
    %cst_172 = arith.constant 5.000000e-01 : f32
    %223 = vector.broadcast %cst_172 : f32 to vector<1x98xf32>
    %224 = arith.cmpf ogt, %222, %223 : vector<1x98xf32>
    %cst_173 = arith.constant 0.000000e+00 : f32
    %225 = vector.shape_cast %224 : vector<1x98xi1> to vector<1x98xi1>
    %226 = vector.broadcast %225 : vector<1x98xi1> to vector<64x98xi1>
    %227 = vector.broadcast %cst_173 : f32 to vector<64x98xf32>
    %228 = arith.select %226, %221, %227 : vector<64x98xi1>, vector<64x98xf32>
    %c3_174 = arith.constant 3 : index
    %c0_175 = arith.constant 0 : index
    %c0_176 = arith.constant 0 : index
    %229 = vector.load %arg2[%c3_174, %c0_175, %c0_176] : memref<16x32x64xf32, #tpu.memory_space<vmem>>, vector<1x32x64xf32>
    %230 = vector.shape_cast %229 : vector<1x32x64xf32> to vector<32x64xf32>
    %cst_177 = arith.constant dense<0.000000e+00> : vector<32x98xf32>
    %231 = tpu.matmul %230, %228, %cst_177 {dimension_numbers = #tpu.dot_dimension_numbers<[1], [0], [0], [1], [0, 0, 1, 1], [], []>} : vector<32x64xf32>, vector<64x98xf32>, vector<32x98xf32> -> vector<32x98xf32>
    %232 = arith.addf %220, %231 : vector<32x98xf32>
    %c9_178 = arith.constant 9 : index
    %c0_179 = arith.constant 0 : index
    %c0_180 = arith.constant 0 : index
    %233 = vector.load %arg2[%c9_178, %c0_179, %c0_180] : memref<16x32x64xf32, #tpu.memory_space<vmem>>, vector<1x32x64xf32>
    %234 = vector.shape_cast %233 : vector<1x32x64xf32> to vector<32x64xf32>
    %cst_181 = arith.constant dense<0.000000e+00> : vector<32x98xf32>
    %235 = tpu.matmul %234, %134, %cst_181 {dimension_numbers = #tpu.dot_dimension_numbers<[1], [0], [0], [1], [0, 0, 1, 1], [], []>} : vector<32x64xf32>, vector<64x98xf32>, vector<32x98xf32> -> vector<32x98xf32>
    %236 = arith.addf %232, %235 : vector<32x98xf32>
    %c11_182 = arith.constant 11 : index
    %c0_183 = arith.constant 0 : index
    %c0_184 = arith.constant 0 : index
    %237 = vector.load %arg2[%c11_182, %c0_183, %c0_184] : memref<16x32x64xf32, #tpu.memory_space<vmem>>, vector<1x32x64xf32>
    %238 = vector.shape_cast %237 : vector<1x32x64xf32> to vector<32x64xf32>
    %cst_185 = arith.constant dense<0.000000e+00> : vector<32x98xf32>
    %239 = tpu.matmul %238, %146, %cst_185 {dimension_numbers = #tpu.dot_dimension_numbers<[1], [0], [0], [1], [0, 0, 1, 1], [], []>} : vector<32x64xf32>, vector<64x98xf32>, vector<32x98xf32> -> vector<32x98xf32>
    %240 = arith.addf %236, %239 : vector<32x98xf32>
    %cst_186 = arith.constant 0.000000e+00 : f32
    %241 = vector.broadcast %cst_186 : f32 to vector<32x98xf32>
    %c0_187 = arith.constant 0 : index
    %c16 = arith.constant 16 : index
    %242 = vector.load %arg8[%c0_187, %c16] : memref<64x114xf32, #tpu.memory_space<vmem>>, vector<64x98xf32>
    %c8_188 = arith.constant 8 : index
    %c0_189 = arith.constant 0 : index
    %243 = vector.load %arg6[%c8_188, %c0_189] : memref<9x98xf32, #tpu.memory_space<vmem>>, vector<1x98xf32>
    %cst_190 = arith.constant 5.000000e-01 : f32
    %244 = vector.broadcast %cst_190 : f32 to vector<1x98xf32>
    %245 = arith.cmpf ogt, %243, %244 : vector<1x98xf32>
    %cst_191 = arith.constant 0.000000e+00 : f32
    %246 = vector.shape_cast %245 : vector<1x98xi1> to vector<1x98xi1>
    %247 = vector.broadcast %246 : vector<1x98xi1> to vector<64x98xi1>
    %248 = vector.broadcast %cst_191 : f32 to vector<64x98xf32>
    %249 = arith.select %247, %242, %248 : vector<64x98xi1>, vector<64x98xf32>
    %c0_192 = arith.constant 0 : index
    %c0_193 = arith.constant 0 : index
    %c0_194 = arith.constant 0 : index
    %250 = vector.load %arg2[%c0_192, %c0_193, %c0_194] : memref<16x32x64xf32, #tpu.memory_space<vmem>>, vector<1x32x64xf32>
    %251 = vector.shape_cast %250 : vector<1x32x64xf32> to vector<32x64xf32>
    %cst_195 = arith.constant dense<0.000000e+00> : vector<32x98xf32>
    %252 = tpu.matmul %251, %249, %cst_195 {dimension_numbers = #tpu.dot_dimension_numbers<[1], [0], [0], [1], [0, 0, 1, 1], [], []>} : vector<32x64xf32>, vector<64x98xf32>, vector<32x98xf32> -> vector<32x98xf32>
    %253 = arith.addf %241, %252 : vector<32x98xf32>
    %c2_196 = arith.constant 2 : index
    %c0_197 = arith.constant 0 : index
    %c0_198 = arith.constant 0 : index
    %254 = vector.load %arg2[%c2_196, %c0_197, %c0_198] : memref<16x32x64xf32, #tpu.memory_space<vmem>>, vector<1x32x64xf32>
    %255 = vector.shape_cast %254 : vector<1x32x64xf32> to vector<32x64xf32>
    %cst_199 = arith.constant dense<0.000000e+00> : vector<32x98xf32>
    %256 = tpu.matmul %255, %216, %cst_199 {dimension_numbers = #tpu.dot_dimension_numbers<[1], [0], [0], [1], [0, 0, 1, 1], [], []>} : vector<32x64xf32>, vector<64x98xf32>, vector<32x98xf32> -> vector<32x98xf32>
    %257 = arith.addf %253, %256 : vector<32x98xf32>
    %c8_200 = arith.constant 8 : index
    %c0_201 = arith.constant 0 : index
    %c0_202 = arith.constant 0 : index
    %258 = vector.load %arg2[%c8_200, %c0_201, %c0_202] : memref<16x32x64xf32, #tpu.memory_space<vmem>>, vector<1x32x64xf32>
    %259 = vector.shape_cast %258 : vector<1x32x64xf32> to vector<32x64xf32>
    %cst_203 = arith.constant dense<0.000000e+00> : vector<32x98xf32>
    %260 = tpu.matmul %259, %183, %cst_203 {dimension_numbers = #tpu.dot_dimension_numbers<[1], [0], [0], [1], [0, 0, 1, 1], [], []>} : vector<32x64xf32>, vector<64x98xf32>, vector<32x98xf32> -> vector<32x98xf32>
    %261 = arith.addf %257, %260 : vector<32x98xf32>
    %c10_204 = arith.constant 10 : index
    %c0_205 = arith.constant 0 : index
    %c0_206 = arith.constant 0 : index
    %262 = vector.load %arg2[%c10_204, %c0_205, %c0_206] : memref<16x32x64xf32, #tpu.memory_space<vmem>>, vector<1x32x64xf32>
    %263 = vector.shape_cast %262 : vector<1x32x64xf32> to vector<32x64xf32>
    %cst_207 = arith.constant dense<0.000000e+00> : vector<32x98xf32>
    %264 = tpu.matmul %263, %134, %cst_207 {dimension_numbers = #tpu.dot_dimension_numbers<[1], [0], [0], [1], [0, 0, 1, 1], [], []>} : vector<32x64xf32>, vector<64x98xf32>, vector<32x98xf32> -> vector<32x98xf32>
    %265 = arith.addf %261, %264 : vector<32x98xf32>
    %cst_208 = arith.constant 0.000000e+00 : f32
    %266 = vector.broadcast %cst_208 : f32 to vector<32x1xf32>
    %cst_209 = arith.constant 0.000000e+00 : f32
    %267 = vector.broadcast %cst_209 : f32 to vector<32x1xf32>
    %cst_210 = arith.constant dense<0.000000e+00> : vector<32xf32>
    %268 = vector.multi_reduction <add>, %174, %cst_210 [1] : vector<32x98xf32> to vector<32xf32>
    %269 = vector.shape_cast %268 : vector<32xf32> to vector<32x1xf32>
    %270 = arith.addf %266, %269 : vector<32x1xf32>
    %271 = arith.mulf %174, %174 : vector<32x98xf32>
    %cst_211 = arith.constant dense<0.000000e+00> : vector<32xf32>
    %272 = vector.multi_reduction <add>, %271, %cst_211 [1] : vector<32x98xf32> to vector<32xf32>
    %273 = vector.shape_cast %272 : vector<32xf32> to vector<32x1xf32>
    %274 = arith.addf %267, %273 : vector<32x1xf32>
    %cst_212 = arith.constant dense<0.000000e+00> : vector<32xf32>
    %275 = vector.multi_reduction <add>, %207, %cst_212 [1] : vector<32x98xf32> to vector<32xf32>
    %276 = vector.shape_cast %275 : vector<32xf32> to vector<32x1xf32>
    %277 = arith.addf %270, %276 : vector<32x1xf32>
    %278 = arith.mulf %207, %207 : vector<32x98xf32>
    %cst_213 = arith.constant dense<0.000000e+00> : vector<32xf32>
    %279 = vector.multi_reduction <add>, %278, %cst_213 [1] : vector<32x98xf32> to vector<32xf32>
    %280 = vector.shape_cast %279 : vector<32xf32> to vector<32x1xf32>
    %281 = arith.addf %274, %280 : vector<32x1xf32>
    %cst_214 = arith.constant dense<0.000000e+00> : vector<32xf32>
    %282 = vector.multi_reduction <add>, %240, %cst_214 [1] : vector<32x98xf32> to vector<32xf32>
    %283 = vector.shape_cast %282 : vector<32xf32> to vector<32x1xf32>
    %284 = arith.addf %277, %283 : vector<32x1xf32>
    %285 = arith.mulf %240, %240 : vector<32x98xf32>
    %cst_215 = arith.constant dense<0.000000e+00> : vector<32xf32>
    %286 = vector.multi_reduction <add>, %285, %cst_215 [1] : vector<32x98xf32> to vector<32xf32>
    %287 = vector.shape_cast %286 : vector<32xf32> to vector<32x1xf32>
    %288 = arith.addf %281, %287 : vector<32x1xf32>
    %cst_216 = arith.constant dense<0.000000e+00> : vector<32xf32>
    %289 = vector.multi_reduction <add>, %265, %cst_216 [1] : vector<32x98xf32> to vector<32xf32>
    %290 = vector.shape_cast %289 : vector<32xf32> to vector<32x1xf32>
    %291 = arith.addf %284, %290 : vector<32x1xf32>
    %292 = arith.mulf %265, %265 : vector<32x98xf32>
    %cst_217 = arith.constant dense<0.000000e+00> : vector<32xf32>
    %293 = vector.multi_reduction <add>, %292, %cst_217 [1] : vector<32x98xf32> to vector<32xf32>
    %294 = vector.shape_cast %293 : vector<32xf32> to vector<32x1xf32>
    %295 = arith.addf %288, %294 : vector<32x1xf32>
    %cst_218 = arith.constant 0.00255102036 : f32
    %296 = vector.broadcast %cst_218 : f32 to vector<32x1xf32>
    %297 = arith.mulf %291, %296 : vector<32x1xf32>
    %cst_219 = arith.constant 0.00255102036 : f32
    %298 = vector.broadcast %cst_219 : f32 to vector<32x1xf32>
    %299 = arith.mulf %295, %298 : vector<32x1xf32>
    %300 = arith.mulf %297, %297 : vector<32x1xf32>
    %301 = arith.subf %299, %300 : vector<32x1xf32>
    %c0_220 = arith.constant 0 : index
    %c0_221 = arith.constant 0 : index
    %302 = vector.load %arg5[%c0_220, %c0_221] : memref<32x2xf32, #tpu.memory_space<vmem>>, vector<32x1xf32>
    %cst_222 = arith.constant 9.99999974E-6 : f32
    %303 = vector.broadcast %cst_222 : f32 to vector<32x1xf32>
    %304 = arith.addf %301, %303 : vector<32x1xf32>
    %305 = math.rsqrt %304 : vector<32x1xf32>
    %306 = arith.mulf %302, %305 : vector<32x1xf32>
    %c0_223 = arith.constant 0 : index
    %c1_224 = arith.constant 1 : index
    %307 = vector.load %arg5[%c0_223, %c1_224] : memref<32x2xf32, #tpu.memory_space<vmem>>, vector<32x1xf32>
    %308 = arith.mulf %297, %306 : vector<32x1xf32>
    %309 = arith.subf %307, %308 : vector<32x1xf32>
    %310 = vector.broadcast %306 : vector<32x1xf32> to vector<32x98xf32>
    %311 = arith.mulf %174, %310 : vector<32x98xf32>
    %312 = vector.broadcast %309 : vector<32x1xf32> to vector<32x98xf32>
    %313 = arith.addf %311, %312 : vector<32x98xf32>
    %cst_225 = arith.constant 0.000000e+00 : f32
    %314 = vector.broadcast %cst_225 : f32 to vector<32x98xf32>
    %315 = arith.maximumf %313, %314 : vector<32x98xf32>
    %c0_226 = arith.constant 0 : index
    %c8_227 = arith.constant 8 : index
    %316 = vector.load %arg9[%c0_226, %c8_227] : memref<32x114xf32, #tpu.memory_space<vmem>>, vector<32x98xf32>
    tpu.vector_store %arg9[%c0_226, %c8_227], %315 {strides = array<i32>} : memref<32x114xf32, #tpu.memory_space<vmem>>, vector<32x98xf32>,
    %317 = vector.broadcast %306 : vector<32x1xf32> to vector<32x98xf32>
    %318 = arith.mulf %207, %317 : vector<32x98xf32>
    %319 = vector.broadcast %309 : vector<32x1xf32> to vector<32x98xf32>
    %320 = arith.addf %318, %319 : vector<32x98xf32>
    %cst_228 = arith.constant 0.000000e+00 : f32
    %321 = vector.broadcast %cst_228 : f32 to vector<32x98xf32>
    %322 = arith.maximumf %320, %321 : vector<32x98xf32>
    %c0_229 = arith.constant 0 : index
    %c8_230 = arith.constant 8 : index
    %323 = vector.load %arg10[%c0_229, %c8_230] : memref<32x114xf32, #tpu.memory_space<vmem>>, vector<32x98xf32>
    tpu.vector_store %arg10[%c0_229, %c8_230], %322 {strides = array<i32>} : memref<32x114xf32, #tpu.memory_space<vmem>>, vector<32x98xf32>,
    %324 = vector.broadcast %306 : vector<32x1xf32> to vector<32x98xf32>
    %325 = arith.mulf %240, %324 : vector<32x98xf32>
    %326 = vector.broadcast %309 : vector<32x1xf32> to vector<32x98xf32>
    %327 = arith.addf %325, %326 : vector<32x98xf32>
    %cst_231 = arith.constant 0.000000e+00 : f32
    %328 = vector.broadcast %cst_231 : f32 to vector<32x98xf32>
    %329 = arith.maximumf %327, %328 : vector<32x98xf32>
    %c0_232 = arith.constant 0 : index
    %c8_233 = arith.constant 8 : index
    %330 = vector.load %arg11[%c0_232, %c8_233] : memref<32x114xf32, #tpu.memory_space<vmem>>, vector<32x98xf32>
    tpu.vector_store %arg11[%c0_232, %c8_233], %329 {strides = array<i32>} : memref<32x114xf32, #tpu.memory_space<vmem>>, vector<32x98xf32>,
    %331 = vector.broadcast %306 : vector<32x1xf32> to vector<32x98xf32>
    %332 = arith.mulf %265, %331 : vector<32x98xf32>
    %333 = vector.broadcast %309 : vector<32x1xf32> to vector<32x98xf32>
    %334 = arith.addf %332, %333 : vector<32x98xf32>
    %cst_234 = arith.constant 0.000000e+00 : f32
    %335 = vector.broadcast %cst_234 : f32 to vector<32x98xf32>
    %336 = arith.maximumf %334, %335 : vector<32x98xf32>
    %c0_235 = arith.constant 0 : index
    %c8_236 = arith.constant 8 : index
    %337 = vector.load %arg12[%c0_235, %c8_236] : memref<32x114xf32, #tpu.memory_space<vmem>>, vector<32x98xf32>
    tpu.vector_store %arg12[%c0_235, %c8_236], %336 {strides = array<i32>} : memref<32x114xf32, #tpu.memory_space<vmem>>, vector<32x98xf32>,
    %cst_237 = arith.constant 0.000000e+00 : f32
    %338 = vector.broadcast %cst_237 : f32 to vector<32x98xf32>
    %c0_238 = arith.constant 0 : index
    %c8_239 = arith.constant 8 : index
    %339 = vector.load %arg9[%c0_238, %c8_239] : memref<32x114xf32, #tpu.memory_space<vmem>>, vector<32x98xf32>
    %c5_240 = arith.constant 5 : index
    %c0_241 = arith.constant 0 : index
    %c0_242 = arith.constant 0 : index
    %340 = vector.load %arg3[%c5_240, %c0_241, %c0_242] : memref<16x32x1xf32, #tpu.memory_space<vmem>>, vector<1x32x1xf32>
    %341 = vector.shape_cast %340 : vector<1x32x1xf32> to vector<32x1xf32>
    %342 = vector.broadcast %341 : vector<32x1xf32> to vector<32x98xf32>
    %343 = arith.mulf %342, %339 : vector<32x98xf32>
    %344 = arith.addf %338, %343 : vector<32x98xf32>
    %c0_243 = arith.constant 0 : index
    %c7_244 = arith.constant 7 : index
    %345 = vector.load %arg10[%c0_243, %c7_244] : memref<32x114xf32, #tpu.memory_space<vmem>>, vector<32x98xf32>
    %c3_245 = arith.constant 3 : index
    %c0_246 = arith.constant 0 : index
    %346 = vector.load %arg6[%c3_245, %c0_246] : memref<9x98xf32, #tpu.memory_space<vmem>>, vector<1x98xf32>
    %cst_247 = arith.constant 5.000000e-01 : f32
    %347 = vector.broadcast %cst_247 : f32 to vector<1x98xf32>
    %348 = arith.cmpf ogt, %346, %347 : vector<1x98xf32>
    %cst_248 = arith.constant 0.000000e+00 : f32
    %349 = vector.shape_cast %348 : vector<1x98xi1> to vector<1x98xi1>
    %350 = vector.broadcast %349 : vector<1x98xi1> to vector<32x98xi1>
    %351 = vector.broadcast %cst_248 : f32 to vector<32x98xf32>
    %352 = arith.select %350, %345, %351 : vector<32x98xi1>, vector<32x98xf32>
    %c7_249 = arith.constant 7 : index
    %c0_250 = arith.constant 0 : index
    %c0_251 = arith.constant 0 : index
    %353 = vector.load %arg3[%c7_249, %c0_250, %c0_251] : memref<16x32x1xf32, #tpu.memory_space<vmem>>, vector<1x32x1xf32>
    %354 = vector.shape_cast %353 : vector<1x32x1xf32> to vector<32x1xf32>
    %355 = vector.broadcast %354 : vector<32x1xf32> to vector<32x98xf32>
    %356 = arith.mulf %355, %352 : vector<32x98xf32>
    %357 = arith.addf %344, %356 : vector<32x98xf32>
    %c0_252 = arith.constant 0 : index
    %c1_253 = arith.constant 1 : index
    %358 = vector.load %arg11[%c0_252, %c1_253] : memref<32x114xf32, #tpu.memory_space<vmem>>, vector<32x98xf32>
    %c1_254 = arith.constant 1 : index
    %c0_255 = arith.constant 0 : index
    %359 = vector.load %arg6[%c1_254, %c0_255] : memref<9x98xf32, #tpu.memory_space<vmem>>, vector<1x98xf32>
    %cst_256 = arith.constant 5.000000e-01 : f32
    %360 = vector.broadcast %cst_256 : f32 to vector<1x98xf32>
    %361 = arith.cmpf ogt, %359, %360 : vector<1x98xf32>
    %cst_257 = arith.constant 0.000000e+00 : f32
    %362 = vector.shape_cast %361 : vector<1x98xi1> to vector<1x98xi1>
    %363 = vector.broadcast %362 : vector<1x98xi1> to vector<32x98xi1>
    %364 = vector.broadcast %cst_257 : f32 to vector<32x98xf32>
    %365 = arith.select %363, %358, %364 : vector<32x98xi1>, vector<32x98xf32>
    %c13_258 = arith.constant 13 : index
    %c0_259 = arith.constant 0 : index
    %c0_260 = arith.constant 0 : index
    %366 = vector.load %arg3[%c13_258, %c0_259, %c0_260] : memref<16x32x1xf32, #tpu.memory_space<vmem>>, vector<1x32x1xf32>
    %367 = vector.shape_cast %366 : vector<1x32x1xf32> to vector<32x1xf32>
    %368 = vector.broadcast %367 : vector<32x1xf32> to vector<32x98xf32>
    %369 = arith.mulf %368, %365 : vector<32x98xf32>
    %370 = arith.addf %357, %369 : vector<32x98xf32>
    %c0_261 = arith.constant 0 : index
    %c0_262 = arith.constant 0 : index
    %371 = vector.load %arg12[%c0_261, %c0_262] : memref<32x114xf32, #tpu.memory_space<vmem>>, vector<32x98xf32>
    %c0_263 = arith.constant 0 : index
    %c0_264 = arith.constant 0 : index
    %372 = vector.load %arg6[%c0_263, %c0_264] : memref<9x98xf32, #tpu.memory_space<vmem>>, vector<1x98xf32>
    %cst_265 = arith.constant 5.000000e-01 : f32
    %373 = vector.broadcast %cst_265 : f32 to vector<1x98xf32>
    %374 = arith.cmpf ogt, %372, %373 : vector<1x98xf32>
    %cst_266 = arith.constant 0.000000e+00 : f32
    %375 = vector.shape_cast %374 : vector<1x98xi1> to vector<1x98xi1>
    %376 = vector.broadcast %375 : vector<1x98xi1> to vector<32x98xi1>
    %377 = vector.broadcast %cst_266 : f32 to vector<32x98xf32>
    %378 = arith.select %376, %371, %377 : vector<32x98xi1>, vector<32x98xf32>
    %c15_267 = arith.constant 15 : index
    %c0_268 = arith.constant 0 : index
    %c0_269 = arith.constant 0 : index
    %379 = vector.load %arg3[%c15_267, %c0_268, %c0_269] : memref<16x32x1xf32, #tpu.memory_space<vmem>>, vector<1x32x1xf32>
    %380 = vector.shape_cast %379 : vector<1x32x1xf32> to vector<32x1xf32>
    %381 = vector.broadcast %380 : vector<32x1xf32> to vector<32x98xf32>
    %382 = arith.mulf %381, %378 : vector<32x98xf32>
    %383 = arith.addf %370, %382 : vector<32x98xf32>
    %cst_270 = arith.constant dense<0.000000e+00> : vector<98xf32>
    %384 = vector.multi_reduction <add>, %383, %cst_270 [0] : vector<32x98xf32> to vector<98xf32>
    %385 = vector.shape_cast %384 : vector<98xf32> to vector<1x98xf32>
    %386 = math.tanh %385 : vector<1x98xf32>
    %c0_271 = arith.constant 0 : index
    %c0_272 = arith.constant 0 : index
    %387 = vector.load %arg7[%c0_271, %c0_272] : memref<16x98xf32, #tpu.memory_space<vmem>>, vector<1x98xf32>
    tpu.vector_store %arg7[%c0_271, %c0_272], %386 {strides = array<i32>} : memref<16x98xf32, #tpu.memory_space<vmem>>, vector<1x98xf32>,
    %cst_273 = arith.constant 0.000000e+00 : f32
    %388 = vector.broadcast %cst_273 : f32 to vector<32x98xf32>
    %c0_274 = arith.constant 0 : index
    %c8_275 = arith.constant 8 : index
    %389 = vector.load %arg10[%c0_274, %c8_275] : memref<32x114xf32, #tpu.memory_space<vmem>>, vector<32x98xf32>
    %c4_276 = arith.constant 4 : index
    %c0_277 = arith.constant 0 : index
    %c0_278 = arith.constant 0 : index
    %390 = vector.load %arg3[%c4_276, %c0_277, %c0_278] : memref<16x32x1xf32, #tpu.memory_space<vmem>>, vector<1x32x1xf32>
    %391 = vector.shape_cast %390 : vector<1x32x1xf32> to vector<32x1xf32>
    %392 = vector.broadcast %391 : vector<32x1xf32> to vector<32x98xf32>
    %393 = arith.mulf %392, %389 : vector<32x98xf32>
    %394 = arith.addf %388, %393 : vector<32x98xf32>
    %c6_279 = arith.constant 6 : index
    %c0_280 = arith.constant 0 : index
    %c0_281 = arith.constant 0 : index
    %395 = vector.load %arg3[%c6_279, %c0_280, %c0_281] : memref<16x32x1xf32, #tpu.memory_space<vmem>>, vector<1x32x1xf32>
    %396 = vector.shape_cast %395 : vector<1x32x1xf32> to vector<32x1xf32>
    %397 = vector.broadcast %396 : vector<32x1xf32> to vector<32x98xf32>
    %398 = arith.mulf %397, %339 : vector<32x98xf32>
    %399 = arith.addf %394, %398 : vector<32x98xf32>
    %c0_282 = arith.constant 0 : index
    %c1_283 = arith.constant 1 : index
    %400 = vector.load %arg12[%c0_282, %c1_283] : memref<32x114xf32, #tpu.memory_space<vmem>>, vector<32x98xf32>
    %c1_284 = arith.constant 1 : index
    %c0_285 = arith.constant 0 : index
    %401 = vector.load %arg6[%c1_284, %c0_285] : memref<9x98xf32, #tpu.memory_space<vmem>>, vector<1x98xf32>
    %cst_286 = arith.constant 5.000000e-01 : f32
    %402 = vector.broadcast %cst_286 : f32 to vector<1x98xf32>
    %403 = arith.cmpf ogt, %401, %402 : vector<1x98xf32>
    %cst_287 = arith.constant 0.000000e+00 : f32
    %404 = vector.shape_cast %403 : vector<1x98xi1> to vector<1x98xi1>
    %405 = vector.broadcast %404 : vector<1x98xi1> to vector<32x98xi1>
    %406 = vector.broadcast %cst_287 : f32 to vector<32x98xf32>
    %407 = arith.select %405, %400, %406 : vector<32x98xi1>, vector<32x98xf32>
    %c12_288 = arith.constant 12 : index
    %c0_289 = arith.constant 0 : index
    %c0_290 = arith.constant 0 : index
    %408 = vector.load %arg3[%c12_288, %c0_289, %c0_290] : memref<16x32x1xf32, #tpu.memory_space<vmem>>, vector<1x32x1xf32>
    %409 = vector.shape_cast %408 : vector<1x32x1xf32> to vector<32x1xf32>
    %410 = vector.broadcast %409 : vector<32x1xf32> to vector<32x98xf32>
    %411 = arith.mulf %410, %407 : vector<32x98xf32>
    %412 = arith.addf %399, %411 : vector<32x98xf32>
    %c14_291 = arith.constant 14 : index
    %c0_292 = arith.constant 0 : index
    %c0_293 = arith.constant 0 : index
    %413 = vector.load %arg3[%c14_291, %c0_292, %c0_293] : memref<16x32x1xf32, #tpu.memory_space<vmem>>, vector<1x32x1xf32>
    %414 = vector.shape_cast %413 : vector<1x32x1xf32> to vector<32x1xf32>
    %415 = vector.broadcast %414 : vector<32x1xf32> to vector<32x98xf32>
    %416 = arith.mulf %415, %365 : vector<32x98xf32>
    %417 = arith.addf %412, %416 : vector<32x98xf32>
    %cst_294 = arith.constant dense<0.000000e+00> : vector<98xf32>
    %418 = vector.multi_reduction <add>, %417, %cst_294 [0] : vector<32x98xf32> to vector<98xf32>
    %419 = vector.shape_cast %418 : vector<98xf32> to vector<1x98xf32>
    %420 = math.tanh %419 : vector<1x98xf32>
    %c1_295 = arith.constant 1 : index
    %c0_296 = arith.constant 0 : index
    %421 = vector.load %arg7[%c1_295, %c0_296] : memref<16x98xf32, #tpu.memory_space<vmem>>, vector<1x98xf32>
    tpu.vector_store %arg7[%c1_295, %c0_296], %420 {strides = array<i32>} : memref<16x98xf32, #tpu.memory_space<vmem>>, vector<1x98xf32>,
    %cst_297 = arith.constant 0.000000e+00 : f32
    %422 = vector.broadcast %cst_297 : f32 to vector<32x98xf32>
    %c5_298 = arith.constant 5 : index
    %c0_299 = arith.constant 0 : index
    %c0_300 = arith.constant 0 : index
    %423 = vector.load %arg3[%c5_298, %c0_299, %c0_300] : memref<16x32x1xf32, #tpu.memory_space<vmem>>, vector<1x32x1xf32>
    %424 = vector.shape_cast %423 : vector<1x32x1xf32> to vector<32x1xf32>
    %425 = vector.broadcast %424 : vector<32x1xf32> to vector<32x98xf32>
    %426 = arith.mulf %425, %389 : vector<32x98xf32>
    %427 = arith.addf %422, %426 : vector<32x98xf32>
    %c7_301 = arith.constant 7 : index
    %c0_302 = arith.constant 0 : index
    %c0_303 = arith.constant 0 : index
    %428 = vector.load %arg3[%c7_301, %c0_302, %c0_303] : memref<16x32x1xf32, #tpu.memory_space<vmem>>, vector<1x32x1xf32>
    %429 = vector.shape_cast %428 : vector<1x32x1xf32> to vector<32x1xf32>
    %430 = vector.broadcast %429 : vector<32x1xf32> to vector<32x98xf32>
    %431 = arith.mulf %430, %339 : vector<32x98xf32>
    %432 = arith.addf %427, %431 : vector<32x98xf32>
    %c13_304 = arith.constant 13 : index
    %c0_305 = arith.constant 0 : index
    %c0_306 = arith.constant 0 : index
    %433 = vector.load %arg3[%c13_304, %c0_305, %c0_306] : memref<16x32x1xf32, #tpu.memory_space<vmem>>, vector<1x32x1xf32>
    %434 = vector.shape_cast %433 : vector<1x32x1xf32> to vector<32x1xf32>
    %435 = vector.broadcast %434 : vector<32x1xf32> to vector<32x98xf32>
    %436 = arith.mulf %435, %407 : vector<32x98xf32>
    %437 = arith.addf %432, %436 : vector<32x98xf32>
    %c15_307 = arith.constant 15 : index
    %c0_308 = arith.constant 0 : index
    %c0_309 = arith.constant 0 : index
    %438 = vector.load %arg3[%c15_307, %c0_308, %c0_309] : memref<16x32x1xf32, #tpu.memory_space<vmem>>, vector<1x32x1xf32>
    %439 = vector.shape_cast %438 : vector<1x32x1xf32> to vector<32x1xf32>
    %440 = vector.broadcast %439 : vector<32x1xf32> to vector<32x98xf32>
    %441 = arith.mulf %440, %365 : vector<32x98xf32>
    %442 = arith.addf %437, %441 : vector<32x98xf32>
    %cst_310 = arith.constant dense<0.000000e+00> : vector<98xf32>
    %443 = vector.multi_reduction <add>, %442, %cst_310 [0] : vector<32x98xf32> to vector<98xf32>
    %444 = vector.shape_cast %443 : vector<98xf32> to vector<1x98xf32>
    %445 = math.tanh %444 : vector<1x98xf32>
    %c2_311 = arith.constant 2 : index
    %c0_312 = arith.constant 0 : index
    %446 = vector.load %arg7[%c2_311, %c0_312] : memref<16x98xf32, #tpu.memory_space<vmem>>, vector<1x98xf32>
    tpu.vector_store %arg7[%c2_311, %c0_312], %445 {strides = array<i32>} : memref<16x98xf32, #tpu.memory_space<vmem>>, vector<1x98xf32>,
    %cst_313 = arith.constant 0.000000e+00 : f32
    %447 = vector.broadcast %cst_313 : f32 to vector<32x98xf32>
    %c0_314 = arith.constant 0 : index
    %c9_315 = arith.constant 9 : index
    %448 = vector.load %arg9[%c0_314, %c9_315] : memref<32x114xf32, #tpu.memory_space<vmem>>, vector<32x98xf32>
    %c5_316 = arith.constant 5 : index
    %c0_317 = arith.constant 0 : index
    %449 = vector.load %arg6[%c5_316, %c0_317] : memref<9x98xf32, #tpu.memory_space<vmem>>, vector<1x98xf32>
    %cst_318 = arith.constant 5.000000e-01 : f32
    %450 = vector.broadcast %cst_318 : f32 to vector<1x98xf32>
    %451 = arith.cmpf ogt, %449, %450 : vector<1x98xf32>
    %cst_319 = arith.constant 0.000000e+00 : f32
    %452 = vector.shape_cast %451 : vector<1x98xi1> to vector<1x98xi1>
    %453 = vector.broadcast %452 : vector<1x98xi1> to vector<32x98xi1>
    %454 = vector.broadcast %cst_319 : f32 to vector<32x98xf32>
    %455 = arith.select %453, %448, %454 : vector<32x98xi1>, vector<32x98xf32>
    %c4_320 = arith.constant 4 : index
    %c0_321 = arith.constant 0 : index
    %c0_322 = arith.constant 0 : index
    %456 = vector.load %arg3[%c4_320, %c0_321, %c0_322] : memref<16x32x1xf32, #tpu.memory_space<vmem>>, vector<1x32x1xf32>
    %457 = vector.shape_cast %456 : vector<1x32x1xf32> to vector<32x1xf32>
    %458 = vector.broadcast %457 : vector<32x1xf32> to vector<32x98xf32>
    %459 = arith.mulf %458, %455 : vector<32x98xf32>
    %460 = arith.addf %447, %459 : vector<32x98xf32>
    %c6_323 = arith.constant 6 : index
    %c0_324 = arith.constant 0 : index
    %c0_325 = arith.constant 0 : index
    %461 = vector.load %arg3[%c6_323, %c0_324, %c0_325] : memref<16x32x1xf32, #tpu.memory_space<vmem>>, vector<1x32x1xf32>
    %462 = vector.shape_cast %461 : vector<1x32x1xf32> to vector<32x1xf32>
    %463 = vector.broadcast %462 : vector<32x1xf32> to vector<32x98xf32>
    %464 = arith.mulf %463, %389 : vector<32x98xf32>
    %465 = arith.addf %460, %464 : vector<32x98xf32>
    %c0_326 = arith.constant 0 : index
    %c2_327 = arith.constant 2 : index
    %466 = vector.load %arg11[%c0_326, %c2_327] : memref<32x114xf32, #tpu.memory_space<vmem>>, vector<32x98xf32>
    %c2_328 = arith.constant 2 : index
    %c0_329 = arith.constant 0 : index
    %467 = vector.load %arg6[%c2_328, %c0_329] : memref<9x98xf32, #tpu.memory_space<vmem>>, vector<1x98xf32>
    %cst_330 = arith.constant 5.000000e-01 : f32
    %468 = vector.broadcast %cst_330 : f32 to vector<1x98xf32>
    %469 = arith.cmpf ogt, %467, %468 : vector<1x98xf32>
    %cst_331 = arith.constant 0.000000e+00 : f32
    %470 = vector.shape_cast %469 : vector<1x98xi1> to vector<1x98xi1>
    %471 = vector.broadcast %470 : vector<1x98xi1> to vector<32x98xi1>
    %472 = vector.broadcast %cst_331 : f32 to vector<32x98xf32>
    %473 = arith.select %471, %466, %472 : vector<32x98xi1>, vector<32x98xf32>
    %c12_332 = arith.constant 12 : index
    %c0_333 = arith.constant 0 : index
    %c0_334 = arith.constant 0 : index
    %474 = vector.load %arg3[%c12_332, %c0_333, %c0_334] : memref<16x32x1xf32, #tpu.memory_space<vmem>>, vector<1x32x1xf32>
    %475 = vector.shape_cast %474 : vector<1x32x1xf32> to vector<32x1xf32>
    %476 = vector.broadcast %475 : vector<32x1xf32> to vector<32x98xf32>
    %477 = arith.mulf %476, %473 : vector<32x98xf32>
    %478 = arith.addf %465, %477 : vector<32x98xf32>
    %c14_335 = arith.constant 14 : index
    %c0_336 = arith.constant 0 : index
    %c0_337 = arith.constant 0 : index
    %479 = vector.load %arg3[%c14_335, %c0_336, %c0_337] : memref<16x32x1xf32, #tpu.memory_space<vmem>>, vector<1x32x1xf32>
    %480 = vector.shape_cast %479 : vector<1x32x1xf32> to vector<32x1xf32>
    %481 = vector.broadcast %480 : vector<32x1xf32> to vector<32x98xf32>
    %482 = arith.mulf %481, %407 : vector<32x98xf32>
    %483 = arith.addf %478, %482 : vector<32x98xf32>
    %cst_338 = arith.constant dense<0.000000e+00> : vector<98xf32>
    %484 = vector.multi_reduction <add>, %483, %cst_338 [0] : vector<32x98xf32> to vector<98xf32>
    %485 = vector.shape_cast %484 : vector<98xf32> to vector<1x98xf32>
    %486 = math.tanh %485 : vector<1x98xf32>
    %c3_339 = arith.constant 3 : index
    %c0_340 = arith.constant 0 : index
    %487 = vector.load %arg7[%c3_339, %c0_340] : memref<16x98xf32, #tpu.memory_space<vmem>>, vector<1x98xf32>
    tpu.vector_store %arg7[%c3_339, %c0_340], %486 {strides = array<i32>} : memref<16x98xf32, #tpu.memory_space<vmem>>, vector<1x98xf32>,
    %cst_341 = arith.constant 0.000000e+00 : f32
    %488 = vector.broadcast %cst_341 : f32 to vector<32x98xf32>
    %c0_342 = arith.constant 0 : index
    %c8_343 = arith.constant 8 : index
    %489 = vector.load %arg11[%c0_342, %c8_343] : memref<32x114xf32, #tpu.memory_space<vmem>>, vector<32x98xf32>
    %c1_344 = arith.constant 1 : index
    %c0_345 = arith.constant 0 : index
    %c0_346 = arith.constant 0 : index
    %490 = vector.load %arg3[%c1_344, %c0_345, %c0_346] : memref<16x32x1xf32, #tpu.memory_space<vmem>>, vector<1x32x1xf32>
    %491 = vector.shape_cast %490 : vector<1x32x1xf32> to vector<32x1xf32>
    %492 = vector.broadcast %491 : vector<32x1xf32> to vector<32x98xf32>
    %493 = arith.mulf %492, %489 : vector<32x98xf32>
    %494 = arith.addf %488, %493 : vector<32x98xf32>
    %c0_347 = arith.constant 0 : index
    %c7_348 = arith.constant 7 : index
    %495 = vector.load %arg12[%c0_347, %c7_348] : memref<32x114xf32, #tpu.memory_space<vmem>>, vector<32x98xf32>
    %c3_349 = arith.constant 3 : index
    %c0_350 = arith.constant 0 : index
    %496 = vector.load %arg6[%c3_349, %c0_350] : memref<9x98xf32, #tpu.memory_space<vmem>>, vector<1x98xf32>
    %cst_351 = arith.constant 5.000000e-01 : f32
    %497 = vector.broadcast %cst_351 : f32 to vector<1x98xf32>
    %498 = arith.cmpf ogt, %496, %497 : vector<1x98xf32>
    %cst_352 = arith.constant 0.000000e+00 : f32
    %499 = vector.shape_cast %498 : vector<1x98xi1> to vector<1x98xi1>
    %500 = vector.broadcast %499 : vector<1x98xi1> to vector<32x98xi1>
    %501 = vector.broadcast %cst_352 : f32 to vector<32x98xf32>
    %502 = arith.select %500, %495, %501 : vector<32x98xi1>, vector<32x98xf32>
    %c3_353 = arith.constant 3 : index
    %c0_354 = arith.constant 0 : index
    %c0_355 = arith.constant 0 : index
    %503 = vector.load %arg3[%c3_353, %c0_354, %c0_355] : memref<16x32x1xf32, #tpu.memory_space<vmem>>, vector<1x32x1xf32>
    %504 = vector.shape_cast %503 : vector<1x32x1xf32> to vector<32x1xf32>
    %505 = vector.broadcast %504 : vector<32x1xf32> to vector<32x98xf32>
    %506 = arith.mulf %505, %502 : vector<32x98xf32>
    %507 = arith.addf %494, %506 : vector<32x98xf32>
    %c9_356 = arith.constant 9 : index
    %c0_357 = arith.constant 0 : index
    %c0_358 = arith.constant 0 : index
    %508 = vector.load %arg3[%c9_356, %c0_357, %c0_358] : memref<16x32x1xf32, #tpu.memory_space<vmem>>, vector<1x32x1xf32>
    %509 = vector.shape_cast %508 : vector<1x32x1xf32> to vector<32x1xf32>
    %510 = vector.broadcast %509 : vector<32x1xf32> to vector<32x98xf32>
    %511 = arith.mulf %510, %339 : vector<32x98xf32>
    %512 = arith.addf %507, %511 : vector<32x98xf32>
    %c11_359 = arith.constant 11 : index
    %c0_360 = arith.constant 0 : index
    %c0_361 = arith.constant 0 : index
    %513 = vector.load %arg3[%c11_359, %c0_360, %c0_361] : memref<16x32x1xf32, #tpu.memory_space<vmem>>, vector<1x32x1xf32>
    %514 = vector.shape_cast %513 : vector<1x32x1xf32> to vector<32x1xf32>
    %515 = vector.broadcast %514 : vector<32x1xf32> to vector<32x98xf32>
    %516 = arith.mulf %515, %352 : vector<32x98xf32>
    %517 = arith.addf %512, %516 : vector<32x98xf32>
    %cst_362 = arith.constant dense<0.000000e+00> : vector<98xf32>
    %518 = vector.multi_reduction <add>, %517, %cst_362 [0] : vector<32x98xf32> to vector<98xf32>
    %519 = vector.shape_cast %518 : vector<98xf32> to vector<1x98xf32>
    %520 = math.tanh %519 : vector<1x98xf32>
    %c4_363 = arith.constant 4 : index
    %c0_364 = arith.constant 0 : index
    %521 = vector.load %arg7[%c4_363, %c0_364] : memref<16x98xf32, #tpu.memory_space<vmem>>, vector<1x98xf32>
    tpu.vector_store %arg7[%c4_363, %c0_364], %520 {strides = array<i32>} : memref<16x98xf32, #tpu.memory_space<vmem>>, vector<1x98xf32>,
    %cst_365 = arith.constant 0.000000e+00 : f32
    %522 = vector.broadcast %cst_365 : f32 to vector<32x98xf32>
    %c0_366 = arith.constant 0 : index
    %c8_367 = arith.constant 8 : index
    %523 = vector.load %arg12[%c0_366, %c8_367] : memref<32x114xf32, #tpu.memory_space<vmem>>, vector<32x98xf32>
    %c0_368 = arith.constant 0 : index
    %c0_369 = arith.constant 0 : index
    %c0_370 = arith.constant 0 : index
    %524 = vector.load %arg3[%c0_368, %c0_369, %c0_370] : memref<16x32x1xf32, #tpu.memory_space<vmem>>, vector<1x32x1xf32>
    %525 = vector.shape_cast %524 : vector<1x32x1xf32> to vector<32x1xf32>
    %526 = vector.broadcast %525 : vector<32x1xf32> to vector<32x98xf32>
    %527 = arith.mulf %526, %523 : vector<32x98xf32>
    %528 = arith.addf %522, %527 : vector<32x98xf32>
    %c2_371 = arith.constant 2 : index
    %c0_372 = arith.constant 0 : index
    %c0_373 = arith.constant 0 : index
    %529 = vector.load %arg3[%c2_371, %c0_372, %c0_373] : memref<16x32x1xf32, #tpu.memory_space<vmem>>, vector<1x32x1xf32>
    %530 = vector.shape_cast %529 : vector<1x32x1xf32> to vector<32x1xf32>
    %531 = vector.broadcast %530 : vector<32x1xf32> to vector<32x98xf32>
    %532 = arith.mulf %531, %489 : vector<32x98xf32>
    %533 = arith.addf %528, %532 : vector<32x98xf32>
    %c8_374 = arith.constant 8 : index
    %c0_375 = arith.constant 0 : index
    %c0_376 = arith.constant 0 : index
    %534 = vector.load %arg3[%c8_374, %c0_375, %c0_376] : memref<16x32x1xf32, #tpu.memory_space<vmem>>, vector<1x32x1xf32>
    %535 = vector.shape_cast %534 : vector<1x32x1xf32> to vector<32x1xf32>
    %536 = vector.broadcast %535 : vector<32x1xf32> to vector<32x98xf32>
    %537 = arith.mulf %536, %389 : vector<32x98xf32>
    %538 = arith.addf %533, %537 : vector<32x98xf32>
    %c10_377 = arith.constant 10 : index
    %c0_378 = arith.constant 0 : index
    %c0_379 = arith.constant 0 : index
    %539 = vector.load %arg3[%c10_377, %c0_378, %c0_379] : memref<16x32x1xf32, #tpu.memory_space<vmem>>, vector<1x32x1xf32>
    %540 = vector.shape_cast %539 : vector<1x32x1xf32> to vector<32x1xf32>
    %541 = vector.broadcast %540 : vector<32x1xf32> to vector<32x98xf32>
    %542 = arith.mulf %541, %339 : vector<32x98xf32>
    %543 = arith.addf %538, %542 : vector<32x98xf32>
    %cst_380 = arith.constant dense<0.000000e+00> : vector<98xf32>
    %544 = vector.multi_reduction <add>, %543, %cst_380 [0] : vector<32x98xf32> to vector<98xf32>
    %545 = vector.shape_cast %544 : vector<98xf32> to vector<1x98xf32>
    %546 = math.tanh %545 : vector<1x98xf32>
    %c5_381 = arith.constant 5 : index
    %c0_382 = arith.constant 0 : index
    %547 = vector.load %arg7[%c5_381, %c0_382] : memref<16x98xf32, #tpu.memory_space<vmem>>, vector<1x98xf32>
    tpu.vector_store %arg7[%c5_381, %c0_382], %546 {strides = array<i32>} : memref<16x98xf32, #tpu.memory_space<vmem>>, vector<1x98xf32>,
    %cst_383 = arith.constant 0.000000e+00 : f32
    %548 = vector.broadcast %cst_383 : f32 to vector<32x98xf32>
    %c1_384 = arith.constant 1 : index
    %c0_385 = arith.constant 0 : index
    %c0_386 = arith.constant 0 : index
    %549 = vector.load %arg3[%c1_384, %c0_385, %c0_386] : memref<16x32x1xf32, #tpu.memory_space<vmem>>, vector<1x32x1xf32>
    %550 = vector.shape_cast %549 : vector<1x32x1xf32> to vector<32x1xf32>
    %551 = vector.broadcast %550 : vector<32x1xf32> to vector<32x98xf32>
    %552 = arith.mulf %551, %523 : vector<32x98xf32>
    %553 = arith.addf %548, %552 : vector<32x98xf32>
    %c3_387 = arith.constant 3 : index
    %c0_388 = arith.constant 0 : index
    %c0_389 = arith.constant 0 : index
    %554 = vector.load %arg3[%c3_387, %c0_388, %c0_389] : memref<16x32x1xf32, #tpu.memory_space<vmem>>, vector<1x32x1xf32>
    %555 = vector.shape_cast %554 : vector<1x32x1xf32> to vector<32x1xf32>
    %556 = vector.broadcast %555 : vector<32x1xf32> to vector<32x98xf32>
    %557 = arith.mulf %556, %489 : vector<32x98xf32>
    %558 = arith.addf %553, %557 : vector<32x98xf32>
    %c9_390 = arith.constant 9 : index
    %c0_391 = arith.constant 0 : index
    %c0_392 = arith.constant 0 : index
    %559 = vector.load %arg3[%c9_390, %c0_391, %c0_392] : memref<16x32x1xf32, #tpu.memory_space<vmem>>, vector<1x32x1xf32>
    %560 = vector.shape_cast %559 : vector<1x32x1xf32> to vector<32x1xf32>
    %561 = vector.broadcast %560 : vector<32x1xf32> to vector<32x98xf32>
    %562 = arith.mulf %561, %389 : vector<32x98xf32>
    %563 = arith.addf %558, %562 : vector<32x98xf32>
    %c11_393 = arith.constant 11 : index
    %c0_394 = arith.constant 0 : index
    %c0_395 = arith.constant 0 : index
    %564 = vector.load %arg3[%c11_393, %c0_394, %c0_395] : memref<16x32x1xf32, #tpu.memory_space<vmem>>, vector<1x32x1xf32>
    %565 = vector.shape_cast %564 : vector<1x32x1xf32> to vector<32x1xf32>
    %566 = vector.broadcast %565 : vector<32x1xf32> to vector<32x98xf32>
    %567 = arith.mulf %566, %339 : vector<32x98xf32>
    %568 = arith.addf %563, %567 : vector<32x98xf32>
    %cst_396 = arith.constant dense<0.000000e+00> : vector<98xf32>
    %569 = vector.multi_reduction <add>, %568, %cst_396 [0] : vector<32x98xf32> to vector<98xf32>
    %570 = vector.shape_cast %569 : vector<98xf32> to vector<1x98xf32>
    %571 = math.tanh %570 : vector<1x98xf32>
    %c6_397 = arith.constant 6 : index
    %c0_398 = arith.constant 0 : index
    %572 = vector.load %arg7[%c6_397, %c0_398] : memref<16x98xf32, #tpu.memory_space<vmem>>, vector<1x98xf32>
    tpu.vector_store %arg7[%c6_397, %c0_398], %571 {strides = array<i32>} : memref<16x98xf32, #tpu.memory_space<vmem>>, vector<1x98xf32>,
    %cst_399 = arith.constant 0.000000e+00 : f32
    %573 = vector.broadcast %cst_399 : f32 to vector<32x98xf32>
    %c0_400 = arith.constant 0 : index
    %c9_401 = arith.constant 9 : index
    %574 = vector.load %arg11[%c0_400, %c9_401] : memref<32x114xf32, #tpu.memory_space<vmem>>, vector<32x98xf32>
    %c5_402 = arith.constant 5 : index
    %c0_403 = arith.constant 0 : index
    %575 = vector.load %arg6[%c5_402, %c0_403] : memref<9x98xf32, #tpu.memory_space<vmem>>, vector<1x98xf32>
    %cst_404 = arith.constant 5.000000e-01 : f32
    %576 = vector.broadcast %cst_404 : f32 to vector<1x98xf32>
    %577 = arith.cmpf ogt, %575, %576 : vector<1x98xf32>
    %cst_405 = arith.constant 0.000000e+00 : f32
    %578 = vector.shape_cast %577 : vector<1x98xi1> to vector<1x98xi1>
    %579 = vector.broadcast %578 : vector<1x98xi1> to vector<32x98xi1>
    %580 = vector.broadcast %cst_405 : f32 to vector<32x98xf32>
    %581 = arith.select %579, %574, %580 : vector<32x98xi1>, vector<32x98xf32>
    %c0_406 = arith.constant 0 : index
    %c0_407 = arith.constant 0 : index
    %c0_408 = arith.constant 0 : index
    %582 = vector.load %arg3[%c0_406, %c0_407, %c0_408] : memref<16x32x1xf32, #tpu.memory_space<vmem>>, vector<1x32x1xf32>
    %583 = vector.shape_cast %582 : vector<1x32x1xf32> to vector<32x1xf32>
    %584 = vector.broadcast %583 : vector<32x1xf32> to vector<32x98xf32>
    %585 = arith.mulf %584, %581 : vector<32x98xf32>
    %586 = arith.addf %573, %585 : vector<32x98xf32>
    %c2_409 = arith.constant 2 : index
    %c0_410 = arith.constant 0 : index
    %c0_411 = arith.constant 0 : index
    %587 = vector.load %arg3[%c2_409, %c0_410, %c0_411] : memref<16x32x1xf32, #tpu.memory_space<vmem>>, vector<1x32x1xf32>
    %588 = vector.shape_cast %587 : vector<1x32x1xf32> to vector<32x1xf32>
    %589 = vector.broadcast %588 : vector<32x1xf32> to vector<32x98xf32>
    %590 = arith.mulf %589, %523 : vector<32x98xf32>
    %591 = arith.addf %586, %590 : vector<32x98xf32>
    %c8_412 = arith.constant 8 : index
    %c0_413 = arith.constant 0 : index
    %c0_414 = arith.constant 0 : index
    %592 = vector.load %arg3[%c8_412, %c0_413, %c0_414] : memref<16x32x1xf32, #tpu.memory_space<vmem>>, vector<1x32x1xf32>
    %593 = vector.shape_cast %592 : vector<1x32x1xf32> to vector<32x1xf32>
    %594 = vector.broadcast %593 : vector<32x1xf32> to vector<32x98xf32>
    %595 = arith.mulf %594, %455 : vector<32x98xf32>
    %596 = arith.addf %591, %595 : vector<32x98xf32>
    %c10_415 = arith.constant 10 : index
    %c0_416 = arith.constant 0 : index
    %c0_417 = arith.constant 0 : index
    %597 = vector.load %arg3[%c10_415, %c0_416, %c0_417] : memref<16x32x1xf32, #tpu.memory_space<vmem>>, vector<1x32x1xf32>
    %598 = vector.shape_cast %597 : vector<1x32x1xf32> to vector<32x1xf32>
    %599 = vector.broadcast %598 : vector<32x1xf32> to vector<32x98xf32>
    %600 = arith.mulf %599, %389 : vector<32x98xf32>
    %601 = arith.addf %596, %600 : vector<32x98xf32>
    %cst_418 = arith.constant dense<0.000000e+00> : vector<98xf32>
    %602 = vector.multi_reduction <add>, %601, %cst_418 [0] : vector<32x98xf32> to vector<98xf32>
    %603 = vector.shape_cast %602 : vector<98xf32> to vector<1x98xf32>
    %604 = math.tanh %603 : vector<1x98xf32>
    %c7_419 = arith.constant 7 : index
    %c0_420 = arith.constant 0 : index
    %605 = vector.load %arg7[%c7_419, %c0_420] : memref<16x98xf32, #tpu.memory_space<vmem>>, vector<1x98xf32>
    tpu.vector_store %arg7[%c7_419, %c0_420], %604 {strides = array<i32>} : memref<16x98xf32, #tpu.memory_space<vmem>>, vector<1x98xf32>,
    %cst_421 = arith.constant 0.000000e+00 : f32
    %606 = vector.broadcast %cst_421 : f32 to vector<32x98xf32>
    %c5_422 = arith.constant 5 : index
    %c0_423 = arith.constant 0 : index
    %c0_424 = arith.constant 0 : index
    %607 = vector.load %arg3[%c5_422, %c0_423, %c0_424] : memref<16x32x1xf32, #tpu.memory_space<vmem>>, vector<1x32x1xf32>
    %608 = vector.shape_cast %607 : vector<1x32x1xf32> to vector<32x1xf32>
    %609 = vector.broadcast %608 : vector<32x1xf32> to vector<32x98xf32>
    %610 = arith.mulf %609, %489 : vector<32x98xf32>
    %611 = arith.addf %606, %610 : vector<32x98xf32>
    %c7_425 = arith.constant 7 : index
    %c0_426 = arith.constant 0 : index
    %c0_427 = arith.constant 0 : index
    %612 = vector.load %arg3[%c7_425, %c0_426, %c0_427] : memref<16x32x1xf32, #tpu.memory_space<vmem>>, vector<1x32x1xf32>
    %613 = vector.shape_cast %612 : vector<1x32x1xf32> to vector<32x1xf32>
    %614 = vector.broadcast %613 : vector<32x1xf32> to vector<32x98xf32>
    %615 = arith.mulf %614, %502 : vector<32x98xf32>
    %616 = arith.addf %611, %615 : vector<32x98xf32>
    %c13_428 = arith.constant 13 : index
    %c0_429 = arith.constant 0 : index
    %c0_430 = arith.constant 0 : index
    %617 = vector.load %arg3[%c13_428, %c0_429, %c0_430] : memref<16x32x1xf32, #tpu.memory_space<vmem>>, vector<1x32x1xf32>
    %618 = vector.shape_cast %617 : vector<1x32x1xf32> to vector<32x1xf32>
    %619 = vector.broadcast %618 : vector<32x1xf32> to vector<32x98xf32>
    %620 = arith.mulf %619, %339 : vector<32x98xf32>
    %621 = arith.addf %616, %620 : vector<32x98xf32>
    %c15_431 = arith.constant 15 : index
    %c0_432 = arith.constant 0 : index
    %c0_433 = arith.constant 0 : index
    %622 = vector.load %arg3[%c15_431, %c0_432, %c0_433] : memref<16x32x1xf32, #tpu.memory_space<vmem>>, vector<1x32x1xf32>
    %623 = vector.shape_cast %622 : vector<1x32x1xf32> to vector<32x1xf32>
    %624 = vector.broadcast %623 : vector<32x1xf32> to vector<32x98xf32>
    %625 = arith.mulf %624, %352 : vector<32x98xf32>
    %626 = arith.addf %621, %625 : vector<32x98xf32>
    %cst_434 = arith.constant dense<0.000000e+00> : vector<98xf32>
    %627 = vector.multi_reduction <add>, %626, %cst_434 [0] : vector<32x98xf32> to vector<98xf32>
    %628 = vector.shape_cast %627 : vector<98xf32> to vector<1x98xf32>
    %629 = math.tanh %628 : vector<1x98xf32>
    %c8_435 = arith.constant 8 : index
    %c0_436 = arith.constant 0 : index
    %630 = vector.load %arg7[%c8_435, %c0_436] : memref<16x98xf32, #tpu.memory_space<vmem>>, vector<1x98xf32>
    tpu.vector_store %arg7[%c8_435, %c0_436], %629 {strides = array<i32>} : memref<16x98xf32, #tpu.memory_space<vmem>>, vector<1x98xf32>,
    %cst_437 = arith.constant 0.000000e+00 : f32
    %631 = vector.broadcast %cst_437 : f32 to vector<32x98xf32>
    %c4_438 = arith.constant 4 : index
    %c0_439 = arith.constant 0 : index
    %c0_440 = arith.constant 0 : index
    %632 = vector.load %arg3[%c4_438, %c0_439, %c0_440] : memref<16x32x1xf32, #tpu.memory_space<vmem>>, vector<1x32x1xf32>
    %633 = vector.shape_cast %632 : vector<1x32x1xf32> to vector<32x1xf32>
    %634 = vector.broadcast %633 : vector<32x1xf32> to vector<32x98xf32>
    %635 = arith.mulf %634, %523 : vector<32x98xf32>
    %636 = arith.addf %631, %635 : vector<32x98xf32>
    %c6_441 = arith.constant 6 : index
    %c0_442 = arith.constant 0 : index
    %c0_443 = arith.constant 0 : index
    %637 = vector.load %arg3[%c6_441, %c0_442, %c0_443] : memref<16x32x1xf32, #tpu.memory_space<vmem>>, vector<1x32x1xf32>
    %638 = vector.shape_cast %637 : vector<1x32x1xf32> to vector<32x1xf32>
    %639 = vector.broadcast %638 : vector<32x1xf32> to vector<32x98xf32>
    %640 = arith.mulf %639, %489 : vector<32x98xf32>
    %641 = arith.addf %636, %640 : vector<32x98xf32>
    %c12_444 = arith.constant 12 : index
    %c0_445 = arith.constant 0 : index
    %c0_446 = arith.constant 0 : index
    %642 = vector.load %arg3[%c12_444, %c0_445, %c0_446] : memref<16x32x1xf32, #tpu.memory_space<vmem>>, vector<1x32x1xf32>
    %643 = vector.shape_cast %642 : vector<1x32x1xf32> to vector<32x1xf32>
    %644 = vector.broadcast %643 : vector<32x1xf32> to vector<32x98xf32>
    %645 = arith.mulf %644, %389 : vector<32x98xf32>
    %646 = arith.addf %641, %645 : vector<32x98xf32>
    %c14_447 = arith.constant 14 : index
    %c0_448 = arith.constant 0 : index
    %c0_449 = arith.constant 0 : index
    %647 = vector.load %arg3[%c14_447, %c0_448, %c0_449] : memref<16x32x1xf32, #tpu.memory_space<vmem>>, vector<1x32x1xf32>
    %648 = vector.shape_cast %647 : vector<1x32x1xf32> to vector<32x1xf32>
    %649 = vector.broadcast %648 : vector<32x1xf32> to vector<32x98xf32>
    %650 = arith.mulf %649, %339 : vector<32x98xf32>
    %651 = arith.addf %646, %650 : vector<32x98xf32>
    %cst_450 = arith.constant dense<0.000000e+00> : vector<98xf32>
    %652 = vector.multi_reduction <add>, %651, %cst_450 [0] : vector<32x98xf32> to vector<98xf32>
    %653 = vector.shape_cast %652 : vector<98xf32> to vector<1x98xf32>
    %654 = math.tanh %653 : vector<1x98xf32>
    %c9_451 = arith.constant 9 : index
    %c0_452 = arith.constant 0 : index
    %655 = vector.load %arg7[%c9_451, %c0_452] : memref<16x98xf32, #tpu.memory_space<vmem>>, vector<1x98xf32>
    tpu.vector_store %arg7[%c9_451, %c0_452], %654 {strides = array<i32>} : memref<16x98xf32, #tpu.memory_space<vmem>>, vector<1x98xf32>,
    %cst_453 = arith.constant 0.000000e+00 : f32
    %656 = vector.broadcast %cst_453 : f32 to vector<32x98xf32>
    %c5_454 = arith.constant 5 : index
    %c0_455 = arith.constant 0 : index
    %c0_456 = arith.constant 0 : index
    %657 = vector.load %arg3[%c5_454, %c0_455, %c0_456] : memref<16x32x1xf32, #tpu.memory_space<vmem>>, vector<1x32x1xf32>
    %658 = vector.shape_cast %657 : vector<1x32x1xf32> to vector<32x1xf32>
    %659 = vector.broadcast %658 : vector<32x1xf32> to vector<32x98xf32>
    %660 = arith.mulf %659, %523 : vector<32x98xf32>
    %661 = arith.addf %656, %660 : vector<32x98xf32>
    %c7_457 = arith.constant 7 : index
    %c0_458 = arith.constant 0 : index
    %c0_459 = arith.constant 0 : index
    %662 = vector.load %arg3[%c7_457, %c0_458, %c0_459] : memref<16x32x1xf32, #tpu.memory_space<vmem>>, vector<1x32x1xf32>
    %663 = vector.shape_cast %662 : vector<1x32x1xf32> to vector<32x1xf32>
    %664 = vector.broadcast %663 : vector<32x1xf32> to vector<32x98xf32>
    %665 = arith.mulf %664, %489 : vector<32x98xf32>
    %666 = arith.addf %661, %665 : vector<32x98xf32>
    %c13_460 = arith.constant 13 : index
    %c0_461 = arith.constant 0 : index
    %c0_462 = arith.constant 0 : index
    %667 = vector.load %arg3[%c13_460, %c0_461, %c0_462] : memref<16x32x1xf32, #tpu.memory_space<vmem>>, vector<1x32x1xf32>
    %668 = vector.shape_cast %667 : vector<1x32x1xf32> to vector<32x1xf32>
    %669 = vector.broadcast %668 : vector<32x1xf32> to vector<32x98xf32>
    %670 = arith.mulf %669, %389 : vector<32x98xf32>
    %671 = arith.addf %666, %670 : vector<32x98xf32>
    %c15_463 = arith.constant 15 : index
    %c0_464 = arith.constant 0 : index
    %c0_465 = arith.constant 0 : index
    %672 = vector.load %arg3[%c15_463, %c0_464, %c0_465] : memref<16x32x1xf32, #tpu.memory_space<vmem>>, vector<1x32x1xf32>
    %673 = vector.shape_cast %672 : vector<1x32x1xf32> to vector<32x1xf32>
    %674 = vector.broadcast %673 : vector<32x1xf32> to vector<32x98xf32>
    %675 = arith.mulf %674, %339 : vector<32x98xf32>
    %676 = arith.addf %671, %675 : vector<32x98xf32>
    %cst_466 = arith.constant dense<0.000000e+00> : vector<98xf32>
    %677 = vector.multi_reduction <add>, %676, %cst_466 [0] : vector<32x98xf32> to vector<98xf32>
    %678 = vector.shape_cast %677 : vector<98xf32> to vector<1x98xf32>
    %679 = math.tanh %678 : vector<1x98xf32>
    %c10_467 = arith.constant 10 : index
    %c0_468 = arith.constant 0 : index
    %680 = vector.load %arg7[%c10_467, %c0_468] : memref<16x98xf32, #tpu.memory_space<vmem>>, vector<1x98xf32>
    tpu.vector_store %arg7[%c10_467, %c0_468], %679 {strides = array<i32>} : memref<16x98xf32, #tpu.memory_space<vmem>>, vector<1x98xf32>,
    %cst_469 = arith.constant 0.000000e+00 : f32
    %681 = vector.broadcast %cst_469 : f32 to vector<32x98xf32>
    %c4_470 = arith.constant 4 : index
    %c0_471 = arith.constant 0 : index
    %c0_472 = arith.constant 0 : index
    %682 = vector.load %arg3[%c4_470, %c0_471, %c0_472] : memref<16x32x1xf32, #tpu.memory_space<vmem>>, vector<1x32x1xf32>
    %683 = vector.shape_cast %682 : vector<1x32x1xf32> to vector<32x1xf32>
    %684 = vector.broadcast %683 : vector<32x1xf32> to vector<32x98xf32>
    %685 = arith.mulf %684, %581 : vector<32x98xf32>
    %686 = arith.addf %681, %685 : vector<32x98xf32>
    %c6_473 = arith.constant 6 : index
    %c0_474 = arith.constant 0 : index
    %c0_475 = arith.constant 0 : index
    %687 = vector.load %arg3[%c6_473, %c0_474, %c0_475] : memref<16x32x1xf32, #tpu.memory_space<vmem>>, vector<1x32x1xf32>
    %688 = vector.shape_cast %687 : vector<1x32x1xf32> to vector<32x1xf32>
    %689 = vector.broadcast %688 : vector<32x1xf32> to vector<32x98xf32>
    %690 = arith.mulf %689, %523 : vector<32x98xf32>
    %691 = arith.addf %686, %690 : vector<32x98xf32>
    %c12_476 = arith.constant 12 : index
    %c0_477 = arith.constant 0 : index
    %c0_478 = arith.constant 0 : index
    %692 = vector.load %arg3[%c12_476, %c0_477, %c0_478] : memref<16x32x1xf32, #tpu.memory_space<vmem>>, vector<1x32x1xf32>
    %693 = vector.shape_cast %692 : vector<1x32x1xf32> to vector<32x1xf32>
    %694 = vector.broadcast %693 : vector<32x1xf32> to vector<32x98xf32>
    %695 = arith.mulf %694, %455 : vector<32x98xf32>
    %696 = arith.addf %691, %695 : vector<32x98xf32>
    %c14_479 = arith.constant 14 : index
    %c0_480 = arith.constant 0 : index
    %c0_481 = arith.constant 0 : index
    %697 = vector.load %arg3[%c14_479, %c0_480, %c0_481] : memref<16x32x1xf32, #tpu.memory_space<vmem>>, vector<1x32x1xf32>
    %698 = vector.shape_cast %697 : vector<1x32x1xf32> to vector<32x1xf32>
    %699 = vector.broadcast %698 : vector<32x1xf32> to vector<32x98xf32>
    %700 = arith.mulf %699, %389 : vector<32x98xf32>
    %701 = arith.addf %696, %700 : vector<32x98xf32>
    %cst_482 = arith.constant dense<0.000000e+00> : vector<98xf32>
    %702 = vector.multi_reduction <add>, %701, %cst_482 [0] : vector<32x98xf32> to vector<98xf32>
    %703 = vector.shape_cast %702 : vector<98xf32> to vector<1x98xf32>
    %704 = math.tanh %703 : vector<1x98xf32>
    %c11_483 = arith.constant 11 : index
    %c0_484 = arith.constant 0 : index
    %705 = vector.load %arg7[%c11_483, %c0_484] : memref<16x98xf32, #tpu.memory_space<vmem>>, vector<1x98xf32>
    tpu.vector_store %arg7[%c11_483, %c0_484], %704 {strides = array<i32>} : memref<16x98xf32, #tpu.memory_space<vmem>>, vector<1x98xf32>,
    %cst_485 = arith.constant 0.000000e+00 : f32
    %706 = vector.broadcast %cst_485 : f32 to vector<32x98xf32>
    %c0_486 = arith.constant 0 : index
    %c15_487 = arith.constant 15 : index
    %707 = vector.load %arg9[%c0_486, %c15_487] : memref<32x114xf32, #tpu.memory_space<vmem>>, vector<32x98xf32>
    %c7_488 = arith.constant 7 : index
    %c0_489 = arith.constant 0 : index
    %708 = vector.load %arg6[%c7_488, %c0_489] : memref<9x98xf32, #tpu.memory_space<vmem>>, vector<1x98xf32>
    %cst_490 = arith.constant 5.000000e-01 : f32
    %709 = vector.broadcast %cst_490 : f32 to vector<1x98xf32>
    %710 = arith.cmpf ogt, %708, %709 : vector<1x98xf32>
    %cst_491 = arith.constant 0.000000e+00 : f32
    %711 = vector.shape_cast %710 : vector<1x98xi1> to vector<1x98xi1>
    %712 = vector.broadcast %711 : vector<1x98xi1> to vector<32x98xi1>
    %713 = vector.broadcast %cst_491 : f32 to vector<32x98xf32>
    %714 = arith.select %712, %707, %713 : vector<32x98xi1>, vector<32x98xf32>
    %c1_492 = arith.constant 1 : index
    %c0_493 = arith.constant 0 : index
    %c0_494 = arith.constant 0 : index
    %715 = vector.load %arg3[%c1_492, %c0_493, %c0_494] : memref<16x32x1xf32, #tpu.memory_space<vmem>>, vector<1x32x1xf32>
    %716 = vector.shape_cast %715 : vector<1x32x1xf32> to vector<32x1xf32>
    %717 = vector.broadcast %716 : vector<32x1xf32> to vector<32x98xf32>
    %718 = arith.mulf %717, %714 : vector<32x98xf32>
    %719 = arith.addf %706, %718 : vector<32x98xf32>
    %c0_495 = arith.constant 0 : index
    %c14_496 = arith.constant 14 : index
    %720 = vector.load %arg10[%c0_495, %c14_496] : memref<32x114xf32, #tpu.memory_space<vmem>>, vector<32x98xf32>
    %c6_497 = arith.constant 6 : index
    %c0_498 = arith.constant 0 : index
    %721 = vector.load %arg6[%c6_497, %c0_498] : memref<9x98xf32, #tpu.memory_space<vmem>>, vector<1x98xf32>
    %cst_499 = arith.constant 5.000000e-01 : f32
    %722 = vector.broadcast %cst_499 : f32 to vector<1x98xf32>
    %723 = arith.cmpf ogt, %721, %722 : vector<1x98xf32>
    %cst_500 = arith.constant 0.000000e+00 : f32
    %724 = vector.shape_cast %723 : vector<1x98xi1> to vector<1x98xi1>
    %725 = vector.broadcast %724 : vector<1x98xi1> to vector<32x98xi1>
    %726 = vector.broadcast %cst_500 : f32 to vector<32x98xf32>
    %727 = arith.select %725, %720, %726 : vector<32x98xi1>, vector<32x98xf32>
    %c3_501 = arith.constant 3 : index
    %c0_502 = arith.constant 0 : index
    %c0_503 = arith.constant 0 : index
    %728 = vector.load %arg3[%c3_501, %c0_502, %c0_503] : memref<16x32x1xf32, #tpu.memory_space<vmem>>, vector<1x32x1xf32>
    %729 = vector.shape_cast %728 : vector<1x32x1xf32> to vector<32x1xf32>
    %730 = vector.broadcast %729 : vector<32x1xf32> to vector<32x98xf32>
    %731 = arith.mulf %730, %727 : vector<32x98xf32>
    %732 = arith.addf %719, %731 : vector<32x98xf32>
    %c9_504 = arith.constant 9 : index
    %c0_505 = arith.constant 0 : index
    %c0_506 = arith.constant 0 : index
    %733 = vector.load %arg3[%c9_504, %c0_505, %c0_506] : memref<16x32x1xf32, #tpu.memory_space<vmem>>, vector<1x32x1xf32>
    %734 = vector.shape_cast %733 : vector<1x32x1xf32> to vector<32x1xf32>
    %735 = vector.broadcast %734 : vector<32x1xf32> to vector<32x98xf32>
    %736 = arith.mulf %735, %489 : vector<32x98xf32>
    %737 = arith.addf %732, %736 : vector<32x98xf32>
    %c11_507 = arith.constant 11 : index
    %c0_508 = arith.constant 0 : index
    %c0_509 = arith.constant 0 : index
    %738 = vector.load %arg3[%c11_507, %c0_508, %c0_509] : memref<16x32x1xf32, #tpu.memory_space<vmem>>, vector<1x32x1xf32>
    %739 = vector.shape_cast %738 : vector<1x32x1xf32> to vector<32x1xf32>
    %740 = vector.broadcast %739 : vector<32x1xf32> to vector<32x98xf32>
    %741 = arith.mulf %740, %502 : vector<32x98xf32>
    %742 = arith.addf %737, %741 : vector<32x98xf32>
    %cst_510 = arith.constant dense<0.000000e+00> : vector<98xf32>
    %743 = vector.multi_reduction <add>, %742, %cst_510 [0] : vector<32x98xf32> to vector<98xf32>
    %744 = vector.shape_cast %743 : vector<98xf32> to vector<1x98xf32>
    %745 = math.tanh %744 : vector<1x98xf32>
    %c12_511 = arith.constant 12 : index
    %c0_512 = arith.constant 0 : index
    %746 = vector.load %arg7[%c12_511, %c0_512] : memref<16x98xf32, #tpu.memory_space<vmem>>, vector<1x98xf32>
    tpu.vector_store %arg7[%c12_511, %c0_512], %745 {strides = array<i32>} : memref<16x98xf32, #tpu.memory_space<vmem>>, vector<1x98xf32>,
    %cst_513 = arith.constant 0.000000e+00 : f32
    %747 = vector.broadcast %cst_513 : f32 to vector<32x98xf32>
    %c0_514 = arith.constant 0 : index
    %c15_515 = arith.constant 15 : index
    %748 = vector.load %arg10[%c0_514, %c15_515] : memref<32x114xf32, #tpu.memory_space<vmem>>, vector<32x98xf32>
    %c7_516 = arith.constant 7 : index
    %c0_517 = arith.constant 0 : index
    %749 = vector.load %arg6[%c7_516, %c0_517] : memref<9x98xf32, #tpu.memory_space<vmem>>, vector<1x98xf32>
    %cst_518 = arith.constant 5.000000e-01 : f32
    %750 = vector.broadcast %cst_518 : f32 to vector<1x98xf32>
    %751 = arith.cmpf ogt, %749, %750 : vector<1x98xf32>
    %cst_519 = arith.constant 0.000000e+00 : f32
    %752 = vector.shape_cast %751 : vector<1x98xi1> to vector<1x98xi1>
    %753 = vector.broadcast %752 : vector<1x98xi1> to vector<32x98xi1>
    %754 = vector.broadcast %cst_519 : f32 to vector<32x98xf32>
    %755 = arith.select %753, %748, %754 : vector<32x98xi1>, vector<32x98xf32>
    %c0_520 = arith.constant 0 : index
    %c0_521 = arith.constant 0 : index
    %c0_522 = arith.constant 0 : index
    %756 = vector.load %arg3[%c0_520, %c0_521, %c0_522] : memref<16x32x1xf32, #tpu.memory_space<vmem>>, vector<1x32x1xf32>
    %757 = vector.shape_cast %756 : vector<1x32x1xf32> to vector<32x1xf32>
    %758 = vector.broadcast %757 : vector<32x1xf32> to vector<32x98xf32>
    %759 = arith.mulf %758, %755 : vector<32x98xf32>
    %760 = arith.addf %747, %759 : vector<32x98xf32>
    %c2_523 = arith.constant 2 : index
    %c0_524 = arith.constant 0 : index
    %c0_525 = arith.constant 0 : index
    %761 = vector.load %arg3[%c2_523, %c0_524, %c0_525] : memref<16x32x1xf32, #tpu.memory_space<vmem>>, vector<1x32x1xf32>
    %762 = vector.shape_cast %761 : vector<1x32x1xf32> to vector<32x1xf32>
    %763 = vector.broadcast %762 : vector<32x1xf32> to vector<32x98xf32>
    %764 = arith.mulf %763, %714 : vector<32x98xf32>
    %765 = arith.addf %760, %764 : vector<32x98xf32>
    %c8_526 = arith.constant 8 : index
    %c0_527 = arith.constant 0 : index
    %c0_528 = arith.constant 0 : index
    %766 = vector.load %arg3[%c8_526, %c0_527, %c0_528] : memref<16x32x1xf32, #tpu.memory_space<vmem>>, vector<1x32x1xf32>
    %767 = vector.shape_cast %766 : vector<1x32x1xf32> to vector<32x1xf32>
    %768 = vector.broadcast %767 : vector<32x1xf32> to vector<32x98xf32>
    %769 = arith.mulf %768, %523 : vector<32x98xf32>
    %770 = arith.addf %765, %769 : vector<32x98xf32>
    %c10_529 = arith.constant 10 : index
    %c0_530 = arith.constant 0 : index
    %c0_531 = arith.constant 0 : index
    %771 = vector.load %arg3[%c10_529, %c0_530, %c0_531] : memref<16x32x1xf32, #tpu.memory_space<vmem>>, vector<1x32x1xf32>
    %772 = vector.shape_cast %771 : vector<1x32x1xf32> to vector<32x1xf32>
    %773 = vector.broadcast %772 : vector<32x1xf32> to vector<32x98xf32>
    %774 = arith.mulf %773, %489 : vector<32x98xf32>
    %775 = arith.addf %770, %774 : vector<32x98xf32>
    %cst_532 = arith.constant dense<0.000000e+00> : vector<98xf32>
    %776 = vector.multi_reduction <add>, %775, %cst_532 [0] : vector<32x98xf32> to vector<98xf32>
    %777 = vector.shape_cast %776 : vector<98xf32> to vector<1x98xf32>
    %778 = math.tanh %777 : vector<1x98xf32>
    %c13_533 = arith.constant 13 : index
    %c0_534 = arith.constant 0 : index
    %779 = vector.load %arg7[%c13_533, %c0_534] : memref<16x98xf32, #tpu.memory_space<vmem>>, vector<1x98xf32>
    tpu.vector_store %arg7[%c13_533, %c0_534], %778 {strides = array<i32>} : memref<16x98xf32, #tpu.memory_space<vmem>>, vector<1x98xf32>,
    %cst_535 = arith.constant 0.000000e+00 : f32
    %780 = vector.broadcast %cst_535 : f32 to vector<32x98xf32>
    %c1_536 = arith.constant 1 : index
    %c0_537 = arith.constant 0 : index
    %c0_538 = arith.constant 0 : index
    %781 = vector.load %arg3[%c1_536, %c0_537, %c0_538] : memref<16x32x1xf32, #tpu.memory_space<vmem>>, vector<1x32x1xf32>
    %782 = vector.shape_cast %781 : vector<1x32x1xf32> to vector<32x1xf32>
    %783 = vector.broadcast %782 : vector<32x1xf32> to vector<32x98xf32>
    %784 = arith.mulf %783, %755 : vector<32x98xf32>
    %785 = arith.addf %780, %784 : vector<32x98xf32>
    %c3_539 = arith.constant 3 : index
    %c0_540 = arith.constant 0 : index
    %c0_541 = arith.constant 0 : index
    %786 = vector.load %arg3[%c3_539, %c0_540, %c0_541] : memref<16x32x1xf32, #tpu.memory_space<vmem>>, vector<1x32x1xf32>
    %787 = vector.shape_cast %786 : vector<1x32x1xf32> to vector<32x1xf32>
    %788 = vector.broadcast %787 : vector<32x1xf32> to vector<32x98xf32>
    %789 = arith.mulf %788, %714 : vector<32x98xf32>
    %790 = arith.addf %785, %789 : vector<32x98xf32>
    %c9_542 = arith.constant 9 : index
    %c0_543 = arith.constant 0 : index
    %c0_544 = arith.constant 0 : index
    %791 = vector.load %arg3[%c9_542, %c0_543, %c0_544] : memref<16x32x1xf32, #tpu.memory_space<vmem>>, vector<1x32x1xf32>
    %792 = vector.shape_cast %791 : vector<1x32x1xf32> to vector<32x1xf32>
    %793 = vector.broadcast %792 : vector<32x1xf32> to vector<32x98xf32>
    %794 = arith.mulf %793, %523 : vector<32x98xf32>
    %795 = arith.addf %790, %794 : vector<32x98xf32>
    %c11_545 = arith.constant 11 : index
    %c0_546 = arith.constant 0 : index
    %c0_547 = arith.constant 0 : index
    %796 = vector.load %arg3[%c11_545, %c0_546, %c0_547] : memref<16x32x1xf32, #tpu.memory_space<vmem>>, vector<1x32x1xf32>
    %797 = vector.shape_cast %796 : vector<1x32x1xf32> to vector<32x1xf32>
    %798 = vector.broadcast %797 : vector<32x1xf32> to vector<32x98xf32>
    %799 = arith.mulf %798, %489 : vector<32x98xf32>
    %800 = arith.addf %795, %799 : vector<32x98xf32>
    %cst_548 = arith.constant dense<0.000000e+00> : vector<98xf32>
    %801 = vector.multi_reduction <add>, %800, %cst_548 [0] : vector<32x98xf32> to vector<98xf32>
    %802 = vector.shape_cast %801 : vector<98xf32> to vector<1x98xf32>
    %803 = math.tanh %802 : vector<1x98xf32>
    %c14_549 = arith.constant 14 : index
    %c0_550 = arith.constant 0 : index
    %804 = vector.load %arg7[%c14_549, %c0_550] : memref<16x98xf32, #tpu.memory_space<vmem>>, vector<1x98xf32>
    tpu.vector_store %arg7[%c14_549, %c0_550], %803 {strides = array<i32>} : memref<16x98xf32, #tpu.memory_space<vmem>>, vector<1x98xf32>,
    %cst_551 = arith.constant 0.000000e+00 : f32
    %805 = vector.broadcast %cst_551 : f32 to vector<32x98xf32>
    %c0_552 = arith.constant 0 : index
    %c16_553 = arith.constant 16 : index
    %806 = vector.load %arg9[%c0_552, %c16_553] : memref<32x114xf32, #tpu.memory_space<vmem>>, vector<32x98xf32>
    %c8_554 = arith.constant 8 : index
    %c0_555 = arith.constant 0 : index
    %807 = vector.load %arg6[%c8_554, %c0_555] : memref<9x98xf32, #tpu.memory_space<vmem>>, vector<1x98xf32>
    %cst_556 = arith.constant 5.000000e-01 : f32
    %808 = vector.broadcast %cst_556 : f32 to vector<1x98xf32>
    %809 = arith.cmpf ogt, %807, %808 : vector<1x98xf32>
    %cst_557 = arith.constant 0.000000e+00 : f32
    %810 = vector.shape_cast %809 : vector<1x98xi1> to vector<1x98xi1>
    %811 = vector.broadcast %810 : vector<1x98xi1> to vector<32x98xi1>
    %812 = vector.broadcast %cst_557 : f32 to vector<32x98xf32>
    %813 = arith.select %811, %806, %812 : vector<32x98xi1>, vector<32x98xf32>
    %c0_558 = arith.constant 0 : index
    %c0_559 = arith.constant 0 : index
    %c0_560 = arith.constant 0 : index
    %814 = vector.load %arg3[%c0_558, %c0_559, %c0_560] : memref<16x32x1xf32, #tpu.memory_space<vmem>>, vector<1x32x1xf32>
    %815 = vector.shape_cast %814 : vector<1x32x1xf32> to vector<32x1xf32>
    %816 = vector.broadcast %815 : vector<32x1xf32> to vector<32x98xf32>
    %817 = arith.mulf %816, %813 : vector<32x98xf32>
    %818 = arith.addf %805, %817 : vector<32x98xf32>
    %c2_561 = arith.constant 2 : index
    %c0_562 = arith.constant 0 : index
    %c0_563 = arith.constant 0 : index
    %819 = vector.load %arg3[%c2_561, %c0_562, %c0_563] : memref<16x32x1xf32, #tpu.memory_space<vmem>>, vector<1x32x1xf32>
    %820 = vector.shape_cast %819 : vector<1x32x1xf32> to vector<32x1xf32>
    %821 = vector.broadcast %820 : vector<32x1xf32> to vector<32x98xf32>
    %822 = arith.mulf %821, %755 : vector<32x98xf32>
    %823 = arith.addf %818, %822 : vector<32x98xf32>
    %c8_564 = arith.constant 8 : index
    %c0_565 = arith.constant 0 : index
    %c0_566 = arith.constant 0 : index
    %824 = vector.load %arg3[%c8_564, %c0_565, %c0_566] : memref<16x32x1xf32, #tpu.memory_space<vmem>>, vector<1x32x1xf32>
    %825 = vector.shape_cast %824 : vector<1x32x1xf32> to vector<32x1xf32>
    %826 = vector.broadcast %825 : vector<32x1xf32> to vector<32x98xf32>
    %827 = arith.mulf %826, %581 : vector<32x98xf32>
    %828 = arith.addf %823, %827 : vector<32x98xf32>
    %c10_567 = arith.constant 10 : index
    %c0_568 = arith.constant 0 : index
    %c0_569 = arith.constant 0 : index
    %829 = vector.load %arg3[%c10_567, %c0_568, %c0_569] : memref<16x32x1xf32, #tpu.memory_space<vmem>>, vector<1x32x1xf32>
    %830 = vector.shape_cast %829 : vector<1x32x1xf32> to vector<32x1xf32>
    %831 = vector.broadcast %830 : vector<32x1xf32> to vector<32x98xf32>
    %832 = arith.mulf %831, %523 : vector<32x98xf32>
    %833 = arith.addf %828, %832 : vector<32x98xf32>
    %cst_570 = arith.constant dense<0.000000e+00> : vector<98xf32>
    %834 = vector.multi_reduction <add>, %833, %cst_570 [0] : vector<32x98xf32> to vector<98xf32>
    %835 = vector.shape_cast %834 : vector<98xf32> to vector<1x98xf32>
    %836 = math.tanh %835 : vector<1x98xf32>
    %c15_571 = arith.constant 15 : index
    %c0_572 = arith.constant 0 : index
    %837 = vector.load %arg7[%c15_571, %c0_572] : memref<16x98xf32, #tpu.memory_space<vmem>>, vector<1x98xf32>
    tpu.vector_store %arg7[%c15_571, %c0_572], %836 {strides = array<i32>} : memref<16x98xf32, #tpu.memory_space<vmem>>, vector<1x98xf32>,
    return
  }
}

</mosaic_0001>

<llo_original>
// kernel: dcgan_g_forward.1
$region0: #{dcgan_g_forward.1}
  #allocation0 [shape = 'u32[]', space=smem, size = 0x4, offset = 0x4, fixed_abs, tag = 'smem constant byte address 0x4 - core index']
  #allocation1 [shape = 'u32[72,128]{1,0:T(1,128)}', space=vmem, size = 0x9000, scoped, tag = 'internal scratch']
  #allocation2 [shape = 'f32[64,114]{1,0:T(8,128)}', space=vmem, size = 0x8000, scoped, tag = 'scratch operand']
  #allocation3 [shape = 'f32[32,114]{1,0:T(8,128)}', space=vmem, size = 0x4000, scoped, tag = 'scratch operand']
  #allocation4 [shape = 'f32[32,114]{1,0:T(8,128)}', space=vmem, size = 0x4000, scoped, tag = 'scratch operand']
  #allocation5 [shape = 'f32[32,114]{1,0:T(8,128)}', space=vmem, size = 0x4000, scoped, tag = 'scratch operand']
  #allocation6 [shape = 'f32[32,114]{1,0:T(8,128)}', space=vmem, size = 0x4000, scoped, tag = 'scratch operand']
  %s0 = inlined_call_operand.vmem [shape: f32[16,98], index: 0, kind: input, shape index: {}]
  %s1 = inlined_call_operand.vmem [shape: f32[16,64,98], index: 1, kind: input, shape index: {}]
  %s2 = inlined_call_operand.vmem [shape: f32[16,32,64], index: 2, kind: input, shape index: {}]
  %s3 = inlined_call_operand.vmem [shape: f32[16,32,1], index: 3, kind: input, shape index: {}]
  %s4 = inlined_call_operand.vmem [shape: f32[64,2], index: 4, kind: input, shape index: {}]
  %s5 = inlined_call_operand.vmem [shape: f32[32,2], index: 5, kind: input, shape index: {}]
  %s6 = inlined_call_operand.vmem [shape: f32[9,98], index: 6, kind: input, shape index: {}]
  %s7 = inlined_call_operand.vmem [shape: f32[16,98], index: 7, kind: output, shape index: {}]
  %s8 = sld [smem:[#allocation0]]
  $region38: #{dcgan_g_forward.1} parent=0
    _
  %s10 = ssub.s32 1, %s8
  %s11 = scalar_select 0, %s10, %s8
  // Predicated region
  $region2: #{dcgan_g_forward.1} parent=0 // pred_check
    _
  $region3: #{dcgan_g_forward.1} parent=0 // pred_check_branch
    %13 = sbr.rel (0) target = $region5
  $region4: #{dcgan_g_forward.1} parent=0 // pred_region
    _
  $region5: #{dcgan_g_forward.1} parent=0 // pred_fallthru
    _
  // Predicated region
  $region6: #{dcgan_g_forward.1} parent=0 // pred_check
    _
  $region7: #{dcgan_g_forward.1} parent=0 // pred_check_branch
    %15 = sbr.rel (0) target = $region9
  $region8: #{dcgan_g_forward.1} parent=0 // pred_region
    _
  $region9: #{dcgan_g_forward.1} parent=0 // pred_fallthru
    _
  // Predicated region
  $region10: #{dcgan_g_forward.1} parent=0 // pred_check
    _
  $region11: #{dcgan_g_forward.1} parent=0 // pred_check_branch
    %17 = sbr.rel (0) target = $region13
  $region12: #{dcgan_g_forward.1} parent=0 // pred_region
    _
  $region13: #{dcgan_g_forward.1} parent=0 // pred_fallthru
    _
  // Predicated region
  $region14: #{dcgan_g_forward.1} parent=0 // pred_check
    _
  $region15: #{dcgan_g_forward.1} parent=0 // pred_check_branch
    %19 = sbr.rel (0) target = $region17
  $region16: #{dcgan_g_forward.1} parent=0 // pred_region
    _
  $region17: #{dcgan_g_forward.1} parent=0 // pred_fallthru
    _
  // Predicated region
  $region18: #{dcgan_g_forward.1} parent=0 // pred_check
    _
  $region19: #{dcgan_g_forward.1} parent=0 // pred_check_branch
    %21 = sbr.rel (0) target = $region21
  $region20: #{dcgan_g_forward.1} parent=0 // pred_region
    _
  $region21: #{dcgan_g_forward.1} parent=0 // pred_fallthru
    _
  // Predicated region
  $region22: #{dcgan_g_forward.1} parent=0 // pred_check
    _
  $region23: #{dcgan_g_forward.1} parent=0 // pred_check_branch
    %23 = sbr.rel (0) target = $region25
  $region24: #{dcgan_g_forward.1} parent=0 // pred_region
    _
  $region25: #{dcgan_g_forward.1} parent=0 // pred_fallthru
    _
  // Predicated region
  $region26: #{dcgan_g_forward.1} parent=0 // pred_check
    _
  $region27: #{dcgan_g_forward.1} parent=0 // pred_check_branch
    %25 = sbr.rel (0) target = $region29
  $region28: #{dcgan_g_forward.1} parent=0 // pred_region
    _
  $region29: #{dcgan_g_forward.1} parent=0 // pred_fallthru
    _
  %vm26 = vcmask 932864
  %27 = vst.msk [vmem:[#allocation2] sm:$0xff] %vm26, 0.0
  %28 = vst.msk [vmem:[#allocation2 + $0x8] sm:$0xff] %vm26, 0.0
  %29 = vst.msk [vmem:[#allocation2 + $0x10] sm:$0xff] %vm26, 0.0
  %30 = vst.msk [vmem:[#allocation2 + $0x18] sm:$0xff] %vm26, 0.0
  %31 = vst.msk [vmem:[#allocation2 + $0x20] sm:$0xff] %vm26, 0.0
  %32 = vst.msk [vmem:[#allocation2 + $0x28] sm:$0xff] %vm26, 0.0
  %33 = vst.msk [vmem:[#allocation2 + $0x30] sm:$0xff] %vm26, 0.0
  %34 = vst.msk [vmem:[#allocation2 + $0x38] sm:$0xff] %vm26, 0.0
  %35 = vst.msk [vmem:[#allocation3] sm:$0xff] %vm26, 0.0
  %36 = vst.msk [vmem:[#allocation3 + $0x8] sm:$0xff] %vm26, 0.0
  %37 = vst.msk [vmem:[#allocation3 + $0x10] sm:$0xff] %vm26, 0.0
  %38 = vst.msk [vmem:[#allocation3 + $0x18] sm:$0xff] %vm26, 0.0
  %39 = vst.msk [vmem:[#allocation4] sm:$0xff] %vm26, 0.0
  %40 = vst.msk [vmem:[#allocation4 + $0x8] sm:$0xff] %vm26, 0.0
  %41 = vst.msk [vmem:[#allocation4 + $0x10] sm:$0xff] %vm26, 0.0
  %42 = vst.msk [vmem:[#allocation4 + $0x18] sm:$0xff] %vm26, 0.0
  %43 = vst.msk [vmem:[#allocation5] sm:$0xff] %vm26, 0.0
  %44 = vst.msk [vmem:[#allocation5 + $0x8] sm:$0xff] %vm26, 0.0
  %45 = vst.msk [vmem:[#allocation5 + $0x10] sm:$0xff] %vm26, 0.0
  %46 = vst.msk [vmem:[#allocation5 + $0x18] sm:$0xff] %vm26, 0.0
  %47 = vst.msk [vmem:[#allocation6] sm:$0xff] %vm26, 0.0
  %48 = vst.msk [vmem:[#allocation6 + $0x8] sm:$0xff] %vm26, 0.0
  %49 = vst.msk [vmem:[#allocation6 + $0x10] sm:$0xff] %vm26, 0.0
  %50 = vst.msk [vmem:[#allocation6 + $0x18] sm:$0xff] %vm26, 0.0
  %v51 = vld [vmem:[%s1] sm:$0xff]
  %v52 = vld [vmem:[%s1 + $0x8] sm:$0xff]
  %v53 = vld [vmem:[%s1 + $0x10] sm:$0xff]
  %v54 = vld [vmem:[%s1 + $0x18] sm:$0xff]
  %v55 = vld [vmem:[%s1 + $0x20] sm:$0xff]
  %v56 = vld [vmem:[%s1 + $0x28] sm:$0xff]
  %v57 = vld [vmem:[%s1 + $0x30] sm:$0xff]
  %v58 = vld [vmem:[%s1 + $0x38] sm:$0xff]
  %v59 = vld [vmem:[%s0] sm:$0x1]
  %v60 = vperm.slane %v59, 0
  %v61 = vmul.f32 %v51, %v60
  %v62 = vmul.f32 %v52, %v60
  %v63 = vmul.f32 %v53, %v60
  %v64 = vmul.f32 %v54, %v60
  %v65 = vmul.f32 %v55, %v60
  %v66 = vmul.f32 %v56, %v60
  %v67 = vmul.f32 %v57, %v60
  %v68 = vmul.f32 %v58, %v60
  %v69 = vadd.f32 %v61, 0.0
  %v70 = vadd.f32 %v62, 0.0
  %v71 = vadd.f32 %v63, 0.0
  %v72 = vadd.f32 %v64, 0.0
  %v73 = vadd.f32 %v65, 0.0
  %v74 = vadd.f32 %v66, 0.0
  %v75 = vadd.f32 %v67, 0.0
  %v76 = vadd.f32 %v68, 0.0
  %s77 = scalar_lea.vmem %s1, 64
  %v78 = vld [vmem:[%s77] sm:$0xff]
  %v79 = vld [vmem:[%s77 + $0x8] sm:$0xff]
  %v80 = vld [vmem:[%s77 + $0x10] sm:$0xff]
  %v81 = vld [vmem:[%s77 + $0x18] sm:$0xff]
  %v82 = vld [vmem:[%s77 + $0x20] sm:$0xff]
  %v83 = vld [vmem:[%s77 + $0x28] sm:$0xff]
  %v84 = vld [vmem:[%s77 + $0x30] sm:$0xff]
  %v85 = vld [vmem:[%s77 + $0x38] sm:$0xff]
  %v86 = vld [vmem:[%s0 + $0x1] sm:$0x1]
  %v87 = vperm.slane %v86, 0
  %v88 = vmul.f32 %v78, %v87
  %v89 = vmul.f32 %v79, %v87
  %v90 = vmul.f32 %v80, %v87
  %v91 = vmul.f32 %v81, %v87
  %v92 = vmul.f32 %v82, %v87
  %v93 = vmul.f32 %v83, %v87
  %v94 = vmul.f32 %v84, %v87
  %v95 = vmul.f32 %v85, %v87
  %v96 = vadd.f32 %v69, %v88
  %v97 = vadd.f32 %v70, %v89
  %v98 = vadd.f32 %v71, %v90
  %v99 = vadd.f32 %v72, %v91
  %v100 = vadd.f32 %v73, %v92
  %v101 = vadd.f32 %v74, %v93
  %v102 = vadd.f32 %v75, %v94
  %v103 = vadd.f32 %v76, %v95
  %s104 = scalar_lea.vmem %s1, 128
  %v105 = vld [vmem:[%s104] sm:$0xff]
  %v106 = vld [vmem:[%s104 + $0x8] sm:$0xff]
  %v107 = vld [vmem:[%s104 + $0x10] sm:$0xff]
  %v108 = vld [vmem:[%s104 + $0x18] sm:$0xff]
  %v109 = vld [vmem:[%s104 + $0x20] sm:$0xff]
  %v110 = vld [vmem:[%s104 + $0x28] sm:$0xff]
  %v111 = vld [vmem:[%s104 + $0x30] sm:$0xff]
  %v112 = vld [vmem:[%s104 + $0x38] sm:$0xff]
  %v113 = vld [vmem:[%s0 + $0x2] sm:$0x1]
  %v114 = vperm.slane %v113, 0
  %v115 = vmul.f32 %v105, %v114
  %v116 = vmul.f32 %v106, %v114
  %v117 = vmul.f32 %v107, %v114
  %v118 = vmul.f32 %v108, %v114
  %v119 = vmul.f32 %v109, %v114
  %v120 = vmul.f32 %v110, %v114
  %v121 = vmul.f32 %v111, %v114
  %v122 = vmul.f32 %v112, %v114
  %v123 = vadd.f32 %v96, %v115
  %v124 = vadd.f32 %v97, %v116
  %v125 = vadd.f32 %v98, %v117
  %v126 = vadd.f32 %v99, %v118
  %v127 = vadd.f32 %v100, %v119
  %v128 = vadd.f32 %v101, %v120
  %v129 = vadd.f32 %v102, %v121
  %v130 = vadd.f32 %v103, %v122
  %s131 = scalar_lea.vmem %s1, 192
  %v132 = vld [vmem:[%s131] sm:$0xff]
  %v133 = vld [vmem:[%s131 + $0x8] sm:$0xff]
  %v134 = vld [vmem:[%s131 + $0x10] sm:$0xff]
  %v135 = vld [vmem:[%s131 + $0x18] sm:$0xff]
  %v136 = vld [vmem:[%s131 + $0x20] sm:$0xff]
  %v137 = vld [vmem:[%s131 + $0x28] sm:$0xff]
  %v138 = vld [vmem:[%s131 + $0x30] sm:$0xff]
  %v139 = vld [vmem:[%s131 + $0x38] sm:$0xff]
  %v140 = vld [vmem:[%s0 + $0x3] sm:$0x1]
  %v141 = vperm.slane %v140, 0
  %v142 = vmul.f32 %v132, %v141
  %v143 = vmul.f32 %v133, %v141
  %v144 = vmul.f32 %v134, %v141
  %v145 = vmul.f32 %v135, %v141
  %v146 = vmul.f32 %v136, %v141
  %v147 = vmul.f32 %v137, %v141
  %v148 = vmul.f32 %v138, %v141
  %v149 = vmul.f32 %v139, %v141
  %v150 = vadd.f32 %v123, %v142
  %v151 = vadd.f32 %v124, %v143
  %v152 = vadd.f32 %v125, %v144
  %v153 = vadd.f32 %v126, %v145
  %v154 = vadd.f32 %v127, %v146
  %v155 = vadd.f32 %v128, %v147
  %v156 = vadd.f32 %v129, %v148
  %v157 = vadd.f32 %v130, %v149
  %s158 = scalar_lea.vmem %s1, 256
  %v159 = vld [vmem:[%s158] sm:$0xff]
  %v160 = vld [vmem:[%s158 + $0x8] sm:$0xff]
  %v161 = vld [vmem:[%s158 + $0x10] sm:$0xff]
  %v162 = vld [vmem:[%s158 + $0x18] sm:$0xff]
  %v163 = vld [vmem:[%s158 + $0x20] sm:$0xff]
  %v164 = vld [vmem:[%s158 + $0x28] sm:$0xff]
  %v165 = vld [vmem:[%s158 + $0x30] sm:$0xff]
  %v166 = vld [vmem:[%s158 + $0x38] sm:$0xff]
  %v167 = vld [vmem:[%s0 + $0x4] sm:$0x1]
  %v168 = vperm.slane %v167, 0
  %v169 = vmul.f32 %v159, %v168
  %v170 = vmul.f32 %v160, %v168
  %v171 = vmul.f32 %v161, %v168
  %v172 = vmul.f32 %v162, %v168
  %v173 = vmul.f32 %v163, %v168
  %v174 = vmul.f32 %v164, %v168
  %v175 = vmul.f32 %v165, %v168
  %v176 = vmul.f32 %v166, %v168
  %v177 = vadd.f32 %v150, %v169
  %v178 = vadd.f32 %v151, %v170
  %v179 = vadd.f32 %v152, %v171
  %v180 = vadd.f32 %v153, %v172
  %v181 = vadd.f32 %v154, %v173
  %v182 = vadd.f32 %v155, %v174
  %v183 = vadd.f32 %v156, %v175
  %v184 = vadd.f32 %v157, %v176
  %s185 = scalar_lea.vmem %s1, 320
  %v186 = vld [vmem:[%s185] sm:$0xff]
  %v187 = vld [vmem:[%s185 + $0x8] sm:$0xff]
  %v188 = vld [vmem:[%s185 + $0x10] sm:$0xff]
  %v189 = vld [vmem:[%s185 + $0x18] sm:$0xff]
  %v190 = vld [vmem:[%s185 + $0x20] sm:$0xff]
  %v191 = vld [vmem:[%s185 + $0x28] sm:$0xff]
  %v192 = vld [vmem:[%s185 + $0x30] sm:$0xff]
  %v193 = vld [vmem:[%s185 + $0x38] sm:$0xff]
  %v194 = vld [vmem:[%s0 + $0x5] sm:$0x1]
  %v195 = vperm.slane %v194, 0
  %v196 = vmul.f32 %v186, %v195
  %v197 = vmul.f32 %v187, %v195
  %v198 = vmul.f32 %v188, %v195
  %v199 = vmul.f32 %v189, %v195
  %v200 = vmul.f32 %v190, %v195
  %v201 = vmul.f32 %v191, %v195
  %v202 = vmul.f32 %v192, %v195
  %v203 = vmul.f32 %v193, %v195
  %v204 = vadd.f32 %v177, %v196
  %v205 = vadd.f32 %v178, %v197
  %v206 = vadd.f32 %v179, %v198
  %v207 = vadd.f32 %v180, %v199
  %v208 = vadd.f32 %v181, %v200
  %v209 = vadd.f32 %v182, %v201
  %v210 = vadd.f32 %v183, %v202
  %v211 = vadd.f32 %v184, %v203
  %s212 = scalar_lea.vmem %s1, 384
  %v213 = vld [vmem:[%s212] sm:$0xff]
  %v214 = vld [vmem:[%s212 + $0x8] sm:$0xff]
  %v215 = vld [vmem:[%s212 + $0x10] sm:$0xff]
  %v216 = vld [vmem:[%s212 + $0x18] sm:$0xff]
  %v217 = vld [vmem:[%s212 + $0x20] sm:$0xff]
  %v218 = vld [vmem:[%s212 + $0x28] sm:$0xff]
  %v219 = vld [vmem:[%s212 + $0x30] sm:$0xff]
  %v220 = vld [vmem:[%s212 + $0x38] sm:$0xff]
  %v221 = vld [vmem:[%s0 + $0x6] sm:$0x1]
  %v222 = vperm.slane %v221, 0
  %v223 = vmul.f32 %v213, %v222
  %v224 = vmul.f32 %v214, %v222
  %v225 = vmul.f32 %v215, %v222
  %v226 = vmul.f32 %v216, %v222
  %v227 = vmul.f32 %v217, %v222
  %v228 = vmul.f32 %v218, %v222
  %v229 = vmul.f32 %v219, %v222
  %v230 = vmul.f32 %v220, %v222
  %v231 = vadd.f32 %v204, %v223
  %v232 = vadd.f32 %v205, %v224
  %v233 = vadd.f32 %v206, %v225
  %v234 = vadd.f32 %v207, %v226
  %v235 = vadd.f32 %v208, %v227
  %v236 = vadd.f32 %v209, %v228
  %v237 = vadd.f32 %v210, %v229
  %v238 = vadd.f32 %v211, %v230
  %s239 = scalar_lea.vmem %s1, 448
  %v240 = vld [vmem:[%s239] sm:$0xff]
  %v241 = vld [vmem:[%s239 + $0x8] sm:$0xff]
  %v242 = vld [vmem:[%s239 + $0x10] sm:$0xff]
  %v243 = vld [vmem:[%s239 + $0x18] sm:$0xff]
  %v244 = vld [vmem:[%s239 + $0x20] sm:$0xff]
  %v245 = vld [vmem:[%s239 + $0x28] sm:$0xff]
  %v246 = vld [vmem:[%s239 + $0x30] sm:$0xff]
  %v247 = vld [vmem:[%s239 + $0x38] sm:$0xff]
  %v248 = vld [vmem:[%s0 + $0x7] sm:$0x1]
  %v249 = vperm.slane %v248, 0
  %v250 = vmul.f32 %v240, %v249
  %v251 = vmul.f32 %v241, %v249
  %v252 = vmul.f32 %v242, %v249
  %v253 = vmul.f32 %v243, %v249
  %v254 = vmul.f32 %v244, %v249
  %v255 = vmul.f32 %v245, %v249
  %v256 = vmul.f32 %v246, %v249
  %v257 = vmul.f32 %v247, %v249
  %v258 = vadd.f32 %v231, %v250
  %v259 = vadd.f32 %v232, %v251
  %v260 = vadd.f32 %v233, %v252
  %v261 = vadd.f32 %v234, %v253
  %v262 = vadd.f32 %v235, %v254
  %v263 = vadd.f32 %v236, %v255
  %v264 = vadd.f32 %v237, %v256
  %v265 = vadd.f32 %v238, %v257
  %s266 = scalar_lea.vmem %s1, 512
  %v267 = vld [vmem:[%s266] sm:$0xff]
  %v268 = vld [vmem:[%s266 + $0x8] sm:$0xff]
  %v269 = vld [vmem:[%s266 + $0x10] sm:$0xff]
  %v270 = vld [vmem:[%s266 + $0x18] sm:$0xff]
  %v271 = vld [vmem:[%s266 + $0x20] sm:$0xff]
  %v272 = vld [vmem:[%s266 + $0x28] sm:$0xff]
  %v273 = vld [vmem:[%s266 + $0x30] sm:$0xff]
  %v274 = vld [vmem:[%s266 + $0x38] sm:$0xff]
  %v275 = vld [vmem:[%s0 + $0x8] sm:$0x1]
  %v276 = vperm.slane %v275, 0
  %v277 = vmul.f32 %v267, %v276
  %v278 = vmul.f32 %v268, %v276
  %v279 = vmul.f32 %v269, %v276
  %v280 = vmul.f32 %v270, %v276
  %v281 = vmul.f32 %v271, %v276
  %v282 = vmul.f32 %v272, %v276
  %v283 = vmul.f32 %v273, %v276
  %v284 = vmul.f32 %v274, %v276
  %v285 = vadd.f32 %v258, %v277
  %v286 = vadd.f32 %v259, %v278
  %v287 = vadd.f32 %v260, %v279
  %v288 = vadd.f32 %v261, %v280
  %v289 = vadd.f32 %v262, %v281
  %v290 = vadd.f32 %v263, %v282
  %v291 = vadd.f32 %v264, %v283
  %v292 = vadd.f32 %v265, %v284
  %s293 = scalar_lea.vmem %s1, 576
  %v294 = vld [vmem:[%s293] sm:$0xff]
  %v295 = vld [vmem:[%s293 + $0x8] sm:$0xff]
  %v296 = vld [vmem:[%s293 + $0x10] sm:$0xff]
  %v297 = vld [vmem:[%s293 + $0x18] sm:$0xff]
  %v298 = vld [vmem:[%s293 + $0x20] sm:$0xff]
  %v299 = vld [vmem:[%s293 + $0x28] sm:$0xff]
  %v300 = vld [vmem:[%s293 + $0x30] sm:$0xff]
  %v301 = vld [vmem:[%s293 + $0x38] sm:$0xff]
  %v302 = vld [vmem:[%s0 + $0x9] sm:$0x1]
  %v303 = vperm.slane %v302, 0
  %v304 = vmul.f32 %v294, %v303
  %v305 = vmul.f32 %v295, %v303
  %v306 = vmul.f32 %v296, %v303
  %v307 = vmul.f32 %v297, %v303
  %v308 = vmul.f32 %v298, %v303
  %v309 = vmul.f32 %v299, %v303
  %v310 = vmul.f32 %v300, %v303
  %v311 = vmul.f32 %v301, %v303
  %v312 = vadd.f32 %v285, %v304
  %v313 = vadd.f32 %v286, %v305
  %v314 = vadd.f32 %v287, %v306
  %v315 = vadd.f32 %v288, %v307
  %v316 = vadd.f32 %v289, %v308
  %v317 = vadd.f32 %v290, %v309
  %v318 = vadd.f32 %v291, %v310
  %v319 = vadd.f32 %v292, %v311
  %s320 = scalar_lea.vmem %s1, 640
  %v321 = vld [vmem:[%s320] sm:$0xff]
  %v322 = vld [vmem:[%s320 + $0x8] sm:$0xff]
  %v323 = vld [vmem:[%s320 + $0x10] sm:$0xff]
  %v324 = vld [vmem:[%s320 + $0x18] sm:$0xff]
  %v325 = vld [vmem:[%s320 + $0x20] sm:$0xff]
  %v326 = vld [vmem:[%s320 + $0x28] sm:$0xff]
  %v327 = vld [vmem:[%s320 + $0x30] sm:$0xff]
  %v328 = vld [vmem:[%s320 + $0x38] sm:$0xff]
  %v329 = vld [vmem:[%s0 + $0xa] sm:$0x1]
  %v330 = vperm.slane %v329, 0
  %v331 = vmul.f32 %v321, %v330
  %v332 = vmul.f32 %v322, %v330
  %v333 = vmul.f32 %v323, %v330
  %v334 = vmul.f32 %v324, %v330
  %v335 = vmul.f32 %v325, %v330
  %v336 = vmul.f32 %v326, %v330
  %v337 = vmul.f32 %v327, %v330
  %v338 = vmul.f32 %v328, %v330
  %v339 = vadd.f32 %v312, %v331
  %v340 = vadd.f32 %v313, %v332
  %v341 = vadd.f32 %v314, %v333
  %v342 = vadd.f32 %v315, %v334
  %v343 = vadd.f32 %v316, %v335
  %v344 = vadd.f32 %v317, %v336
  %v345 = vadd.f32 %v318, %v337
  %v346 = vadd.f32 %v319, %v338
  %s347 = scalar_lea.vmem %s1, 704
  %v348 = vld [vmem:[%s347] sm:$0xff]
  %v349 = vld [vmem:[%s347 + $0x8] sm:$0xff]
  %v350 = vld [vmem:[%s347 + $0x10] sm:$0xff]
  %v351 = vld [vmem:[%s347 + $0x18] sm:$0xff]
  %v352 = vld [vmem:[%s347 + $0x20] sm:$0xff]
  %v353 = vld [vmem:[%s347 + $0x28] sm:$0xff]
  %v354 = vld [vmem:[%s347 + $0x30] sm:$0xff]
  %v355 = vld [vmem:[%s347 + $0x38] sm:$0xff]
  %v356 = vld [vmem:[%s0 + $0xb] sm:$0x1]
  %v357 = vperm.slane %v356, 0
  %v358 = vmul.f32 %v348, %v357
  %v359 = vmul.f32 %v349, %v357
  %v360 = vmul.f32 %v350, %v357
  %v361 = vmul.f32 %v351, %v357
  %v362 = vmul.f32 %v352, %v357
  %v363 = vmul.f32 %v353, %v357
  %v364 = vmul.f32 %v354, %v357
  %v365 = vmul.f32 %v355, %v357
  %v366 = vadd.f32 %v339, %v358
  %v367 = vadd.f32 %v340, %v359
  %v368 = vadd.f32 %v341, %v360
  %v369 = vadd.f32 %v342, %v361
  %v370 = vadd.f32 %v343, %v362
  %v371 = vadd.f32 %v344, %v363
  %v372 = vadd.f32 %v345, %v364
  %v373 = vadd.f32 %v346, %v365
  %s374 = scalar_lea.vmem %s1, 768
  %v375 = vld [vmem:[%s374] sm:$0xff]
  %v376 = vld [vmem:[%s374 + $0x8] sm:$0xff]
  %v377 = vld [vmem:[%s374 + $0x10] sm:$0xff]
  %v378 = vld [vmem:[%s374 + $0x18] sm:$0xff]
  %v379 = vld [vmem:[%s374 + $0x20] sm:$0xff]
  %v380 = vld [vmem:[%s374 + $0x28] sm:$0xff]
  %v381 = vld [vmem:[%s374 + $0x30] sm:$0xff]
  %v382 = vld [vmem:[%s374 + $0x38] sm:$0xff]
  %v383 = vld [vmem:[%s0 + $0xc] sm:$0x1]
  %v384 = vperm.slane %v383, 0
  %v385 = vmul.f32 %v375, %v384
  %v386 = vmul.f32 %v376, %v384
  %v387 = vmul.f32 %v377, %v384
  %v388 = vmul.f32 %v378, %v384
  %v389 = vmul.f32 %v379, %v384
  %v390 = vmul.f32 %v380, %v384
  %v391 = vmul.f32 %v381, %v384
  %v392 = vmul.f32 %v382, %v384
  %v393 = vadd.f32 %v366, %v385
  %v394 = vadd.f32 %v367, %v386
  %v395 = vadd.f32 %v368, %v387
  %v396 = vadd.f32 %v369, %v388
  %v397 = vadd.f32 %v370, %v389
  %v398 = vadd.f32 %v371, %v390
  %v399 = vadd.f32 %v372, %v391
  %v400 = vadd.f32 %v373, %v392
  %s401 = scalar_lea.vmem %s1, 832
  %v402 = vld [vmem:[%s401] sm:$0xff]
  %v403 = vld [vmem:[%s401 + $0x8] sm:$0xff]
  %v404 = vld [vmem:[%s401 + $0x10] sm:$0xff]
  %v405 = vld [vmem:[%s401 + $0x18] sm:$0xff]
  %v406 = vld [vmem:[%s401 + $0x20] sm:$0xff]
  %v407 = vld [vmem:[%s401 + $0x28] sm:$0xff]
  %v408 = vld [vmem:[%s401 + $0x30] sm:$0xff]
  %v409 = vld [vmem:[%s401 + $0x38] sm:$0xff]
  %v410 = vld [vmem:[%s0 + $0xd] sm:$0x1]
  %v411 = vperm.slane %v410, 0
  %v412 = vmul.f32 %v402, %v411
  %v413 = vmul.f32 %v403, %v411
  %v414 = vmul.f32 %v404, %v411
  %v415 = vmul.f32 %v405, %v411
  %v416 = vmul.f32 %v406, %v411
  %v417 = vmul.f32 %v407, %v411
  %v418 = vmul.f32 %v408, %v411
  %v419 = vmul.f32 %v409, %v411
  %v420 = vadd.f32 %v393, %v412
  %v421 = vadd.f32 %v394, %v413
  %v422 = vadd.f32 %v395, %v414
  %v423 = vadd.f32 %v396, %v415
  %v424 = vadd.f32 %v397, %v416
  %v425 = vadd.f32 %v398, %v417
  %v426 = vadd.f32 %v399, %v418
  %v427 = vadd.f32 %v400, %v419
  %s428 = scalar_lea.vmem %s1, 896
  %v429 = vld [vmem:[%s428] sm:$0xff]
  %v430 = vld [vmem:[%s428 + $0x8] sm:$0xff]
  %v431 = vld [vmem:[%s428 + $0x10] sm:$0xff]
  %v432 = vld [vmem:[%s428 + $0x18] sm:$0xff]
  %v433 = vld [vmem:[%s428 + $0x20] sm:$0xff]
  %v434 = vld [vmem:[%s428 + $0x28] sm:$0xff]
  %v435 = vld [vmem:[%s428 + $0x30] sm:$0xff]
  %v436 = vld [vmem:[%s428 + $0x38] sm:$0xff]
  %v437 = vld [vmem:[%s0 + $0xe] sm:$0x1]
  %v438 = vperm.slane %v437, 0
  %v439 = vmul.f32 %v429, %v438
  %v440 = vmul.f32 %v430, %v438
  %v441 = vmul.f32 %v431, %v438
  %v442 = vmul.f32 %v432, %v438
  %v443 = vmul.f32 %v433, %v438
  %v444 = vmul.f32 %v434, %v438
  %v445 = vmul.f32 %v435, %v438
  %v446 = vmul.f32 %v436, %v438
  %v447 = vadd.f32 %v420, %v439
  %v448 = vadd.f32 %v421, %v440
  %v449 = vadd.f32 %v422, %v441
  %v450 = vadd.f32 %v423, %v442
  %v451 = vadd.f32 %v424, %v443
  %v452 = vadd.f32 %v425, %v444
  %v453 = vadd.f32 %v426, %v445
  %v454 = vadd.f32 %v427, %v446
  %s455 = scalar_lea.vmem %s1, 960
  %v456 = vld [vmem:[%s455] sm:$0xff]
  %v457 = vld [vmem:[%s455 + $0x8] sm:$0xff]
  %v458 = vld [vmem:[%s455 + $0x10] sm:$0xff]
  %v459 = vld [vmem:[%s455 + $0x18] sm:$0xff]
  %v460 = vld [vmem:[%s455 + $0x20] sm:$0xff]
  %v461 = vld [vmem:[%s455 + $0x28] sm:$0xff]
  %v462 = vld [vmem:[%s455 + $0x30] sm:$0xff]
  %v463 = vld [vmem:[%s455 + $0x38] sm:$0xff]
  %v464 = vld [vmem:[%s0 + $0xf] sm:$0x1]
  %v465 = vperm.slane %v464, 0
  %v466 = vmul.f32 %v456, %v465
  %v467 = vmul.f32 %v457, %v465
  %v468 = vmul.f32 %v458, %v465
  %v469 = vmul.f32 %v459, %v465
  %v470 = vmul.f32 %v460, %v465
  %v471 = vmul.f32 %v461, %v465
  %v472 = vmul.f32 %v462, %v465
  %v473 = vmul.f32 %v463, %v465
  %v474 = vadd.f32 %v447, %v466
  %v475 = vadd.f32 %v448, %v467
  %v476 = vadd.f32 %v449, %v468
  %v477 = vadd.f32 %v450, %v469
  %v478 = vadd.f32 %v451, %v470
  %v479 = vadd.f32 %v452, %v471
  %v480 = vadd.f32 %v453, %v472
  %v481 = vadd.f32 %v454, %v473
  %vm482 = vcmask 801792
  %v483 = vsel %vm482, %v474, 0.0
  %484 = vadd.xlane.f32.xlu0 %v483
  %v485 = vpop.xlane.xlu0 %484
  %v486 = vsel %vm482, %v475, 0.0
  %487 = vadd.xlane.f32.xlu0 %v486
  %v488 = vpop.xlane.xlu0 %487
  %v489 = vsel %vm482, %v476, 0.0
  %490 = vadd.xlane.f32.xlu0 %v489
  %v491 = vpop.xlane.xlu0 %490
  %v492 = vsel %vm482, %v477, 0.0
  %493 = vadd.xlane.f32.xlu0 %v492
  %v494 = vpop.xlane.xlu0 %493
  %v495 = vsel %vm482, %v478, 0.0
  %496 = vadd.xlane.f32.xlu0 %v495
  %v497 = vpop.xlane.xlu0 %496
  %v498 = vsel %vm482, %v479, 0.0
  %499 = vadd.xlane.f32.xlu0 %v498
  %v500 = vpop.xlane.xlu0 %499
  %v501 = vsel %vm482, %v480, 0.0
  %502 = vadd.xlane.f32.xlu0 %v501
  %v503 = vpop.xlane.xlu0 %502
  %v504 = vsel %vm482, %v481, 0.0
  %505 = vadd.xlane.f32.xlu0 %v504
  %v506 = vpop.xlane.xlu0 %505
  %v507 = vmul.f32 %v485, 0.010204081
  %v508 = vmul.f32 %v488, 0.010204081
  %v509 = vmul.f32 %v491, 0.010204081
  %v510 = vmul.f32 %v494, 0.010204081
  %v511 = vmul.f32 %v497, 0.010204081
  %v512 = vmul.f32 %v500, 0.010204081
  %v513 = vmul.f32 %v503, 0.010204081
  %v514 = vmul.f32 %v506, 0.010204081
  %v515 = vmul.f32 %v474, %v474
  %v516 = vmul.f32 %v475, %v475
  %v517 = vmul.f32 %v476, %v476
  %v518 = vmul.f32 %v477, %v477
  %v519 = vmul.f32 %v478, %v478
  %v520 = vmul.f32 %v479, %v479
  %v521 = vmul.f32 %v480, %v480
  %v522 = vmul.f32 %v481, %v481
  %v523 = vsel %vm482, %v515, 0.0
  %524 = vadd.xlane.f32.xlu0 %v523
  %v525 = vpop.xlane.xlu0 %524
  %v526 = vsel %vm482, %v516, 0.0
  %527 = vadd.xlane.f32.xlu0 %v526
  %v528 = vpop.xlane.xlu0 %527
  %v529 = vsel %vm482, %v517, 0.0
  %530 = vadd.xlane.f32.xlu0 %v529
  %v531 = vpop.xlane.xlu0 %530
  %v532 = vsel %vm482, %v518, 0.0
  %533 = vadd.xlane.f32.xlu0 %v532
  %v534 = vpop.xlane.xlu0 %533
  %v535 = vsel %vm482, %v519, 0.0
  %536 = vadd.xlane.f32.xlu0 %v535
  %v537 = vpop.xlane.xlu0 %536
  %v538 = vsel %vm482, %v520, 0.0
  %539 = vadd.xlane.f32.xlu0 %v538
  %v540 = vpop.xlane.xlu0 %539
  %v541 = vsel %vm482, %v521, 0.0
  %542 = vadd.xlane.f32.xlu0 %v541
  %v543 = vpop.xlane.xlu0 %542
  %v544 = vsel %vm482, %v522, 0.0
  %545 = vadd.xlane.f32.xlu0 %v544
  %v546 = vpop.xlane.xlu0 %545
  %v547 = vmul.f32 %v525, 0.010204081
  %v548 = vmul.f32 %v528, 0.010204081
  %v549 = vmul.f32 %v531, 0.010204081
  %v550 = vmul.f32 %v534, 0.010204081
  %v551 = vmul.f32 %v537, 0.010204081
  %v552 = vmul.f32 %v540, 0.010204081
  %v553 = vmul.f32 %v543, 0.010204081
  %v554 = vmul.f32 %v546, 0.010204081
  %v555 = vmul.f32 %v507, %v507
  %v556 = vmul.f32 %v508, %v508
  %v557 = vmul.f32 %v509, %v509
  %v558 = vmul.f32 %v510, %v510
  %v559 = vmul.f32 %v511, %v511
  %v560 = vmul.f32 %v512, %v512
  %v561 = vmul.f32 %v513, %v513
  %v562 = vmul.f32 %v514, %v514
  %v563 = vsub.f32 %v547, %v555
  %v564 = vsub.f32 %v548, %v556
  %v565 = vsub.f32 %v549, %v557
  %v566 = vsub.f32 %v550, %v558
  %v567 = vsub.f32 %v551, %v559
  %v568 = vsub.f32 %v552, %v560
  %v569 = vsub.f32 %v553, %v561
  %v570 = vsub.f32 %v554, %v562
  %v571 = vld [vmem:[%s4] sm:$0xff]
  %v572 = vld [vmem:[%s4 + $0x8] sm:$0xff]
  %v573 = vld [vmem:[%s4 + $0x10] sm:$0xff]
  %v574 = vld [vmem:[%s4 + $0x18] sm:$0xff]
  %v575 = vld [vmem:[%s4 + $0x20] sm:$0xff]
  %v576 = vld [vmem:[%s4 + $0x28] sm:$0xff]
  %v577 = vld [vmem:[%s4 + $0x30] sm:$0xff]
  %v578 = vld [vmem:[%s4 + $0x38] sm:$0xff]
  %v579 = vadd.f32 %v563, 1e-05
  %v580 = vadd.f32 %v564, 1e-05
  %v581 = vadd.f32 %v565, 1e-05
  %v582 = vadd.f32 %v566, 1e-05
  %v583 = vadd.f32 %v567, 1e-05
  %v584 = vadd.f32 %v568, 1e-05
  %v585 = vadd.f32 %v569, 1e-05
  %v586 = vadd.f32 %v570, 1e-05
  %v587 = vrsqrt.pop %v579
  %v588 = vmul.f32 %v587, %v579
  %v589 = vmul.f32 %v588, %v587
  %v590 = vmul.f32 0.5, %v589
  %v591 = vsub.f32 1.5, %v590
  %v592 = vmul.f32 %v587, %v591
  %vm593 = vweird.f32 %v579
  %vm594 = vweird.f32 %v587
  %vm595 = vmor %vm593, %vm594
  %v596 = vsel %vm595, %v587, %v592
  %v597 = vrsqrt.pop %v580
  %v598 = vmul.f32 %v597, %v580
  %v599 = vmul.f32 %v598, %v597
  %v600 = vmul.f32 0.5, %v599
  %v601 = vsub.f32 1.5, %v600
  %v602 = vmul.f32 %v597, %v601
  %vm603 = vweird.f32 %v580
  %vm604 = vweird.f32 %v597
  %vm605 = vmor %vm603, %vm604
  %v606 = vsel %vm605, %v597, %v602
  %v607 = vrsqrt.pop %v581
  %v608 = vmul.f32 %v607, %v581
  %v609 = vmul.f32 %v608, %v607
  %v610 = vmul.f32 0.5, %v609
  %v611 = vsub.f32 1.5, %v610
  %v612 = vmul.f32 %v607, %v611
  %vm613 = vweird.f32 %v581
  %vm614 = vweird.f32 %v607
  %vm615 = vmor %vm613, %vm614
  %v616 = vsel %vm615, %v607, %v612
  %v617 = vrsqrt.pop %v582
  %v618 = vmul.f32 %v617, %v582
  %v619 = vmul.f32 %v618, %v617
  %v620 = vmul.f32 0.5, %v619
  %v621 = vsub.f32 1.5, %v620
  %v622 = vmul.f32 %v617, %v621
  %vm623 = vweird.f32 %v582
  %vm624 = vweird.f32 %v617
  %vm625 = vmor %vm623, %vm624
  %v626 = vsel %vm625, %v617, %v622
  %v627 = vrsqrt.pop %v583
  %v628 = vmul.f32 %v627, %v583
  %v629 = vmul.f32 %v628, %v627
  %v630 = vmul.f32 0.5, %v629
  %v631 = vsub.f32 1.5, %v630
  %v632 = vmul.f32 %v627, %v631
  %vm633 = vweird.f32 %v583
  %vm634 = vweird.f32 %v627
  %vm635 = vmor %vm633, %vm634
  %v636 = vsel %vm635, %v627, %v632
  %v637 = vrsqrt.pop %v584
  %v638 = vmul.f32 %v637, %v584
  %v639 = vmul.f32 %v638, %v637
  %v640 = vmul.f32 0.5, %v639
  %v641 = vsub.f32 1.5, %v640
  %v642 = vmul.f32 %v637, %v641
  %vm643 = vweird.f32 %v584
  %vm644 = vweird.f32 %v637
  %vm645 = vmor %vm643, %vm644
  %v646 = vsel %vm645, %v637, %v642
  %v647 = vrsqrt.pop %v585
  %v648 = vmul.f32 %v647, %v585
  %v649 = vmul.f32 %v648, %v647
  %v650 = vmul.f32 0.5, %v649
  %v651 = vsub.f32 1.5, %v650
  %v652 = vmul.f32 %v647, %v651
  %vm653 = vweird.f32 %v585
  %vm654 = vweird.f32 %v647
  %vm655 = vmor %vm653, %vm654
  %v656 = vsel %vm655, %v647, %v652
  %v657 = vrsqrt.pop %v586
  %v658 = vmul.f32 %v657, %v586
  %v659 = vmul.f32 %v658, %v657
  %v660 = vmul.f32 0.5, %v659
  %v661 = vsub.f32 1.5, %v660
  %v662 = vmul.f32 %v657, %v661
  %vm663 = vweird.f32 %v586
  %vm664 = vweird.f32 %v657
  %vm665 = vmor %vm663, %vm664
  %v666 = vsel %vm665, %v657, %v662
  %v667 = vmul.f32 %v571, %v596
  %v668 = vmul.f32 %v572, %v606
  %v669 = vmul.f32 %v573, %v616
  %v670 = vmul.f32 %v574, %v626
  %v671 = vmul.f32 %v575, %v636
  %v672 = vmul.f32 %v576, %v646
  %v673 = vmul.f32 %v577, %v656
  %v674 = vmul.f32 %v578, %v666
  %v675 = vmul.f32 %v507, %v667
  %v676 = vmul.f32 %v508, %v668
  %v677 = vmul.f32 %v509, %v669
  %v678 = vmul.f32 %v510, %v670
  %v679 = vmul.f32 %v511, %v671
  %v680 = vmul.f32 %v512, %v672
  %v681 = vmul.f32 %v513, %v673
  %v682 = vmul.f32 %v514, %v674
  %691 = vrot.lane.b32.xlu0 %v675, 1
  %v692 = vpop.permute.xlu0 %691
  %693 = vrot.lane.b32.xlu0 %v676, 1
  %v694 = vpop.permute.xlu0 %693
  %695 = vrot.lane.b32.xlu0 %v677, 1
  %v696 = vpop.permute.xlu0 %695
  %697 = vrot.lane.b32.xlu0 %v678, 1
  %v698 = vpop.permute.xlu0 %697
  %699 = vrot.lane.b32.xlu0 %v679, 1
  %v700 = vpop.permute.xlu0 %699
  %701 = vrot.lane.b32.xlu0 %v680, 1
  %v702 = vpop.permute.xlu0 %701
  %703 = vrot.lane.b32.xlu0 %v681, 1
  %v704 = vpop.permute.xlu0 %703
  %705 = vrot.lane.b32.xlu0 %v682, 1
  %v706 = vpop.permute.xlu0 %705
  %v715 = vsub.f32 %v571, %v692
  %v716 = vsub.f32 %v572, %v694
  %v717 = vsub.f32 %v573, %v696
  %v718 = vsub.f32 %v574, %v698
  %v719 = vsub.f32 %v575, %v700
  %v720 = vsub.f32 %v576, %v702
  %v721 = vsub.f32 %v577, %v704
  %v722 = vsub.f32 %v578, %v706
  %724 = vset.pattern.permute.xlu0 0
  %725 = vperm.xlu0 %724, %v667
  %v726 = vpop.permute.xlu0 %725
  %729 = vset.pattern.permute.xlu0 0
  %730 = vperm.xlu0 %729, %v668
  %v731 = vpop.permute.xlu0 %730
  %734 = vset.pattern.permute.xlu0 0
  %735 = vperm.xlu0 %734, %v669
  %v736 = vpop.permute.xlu0 %735
  %739 = vset.pattern.permute.xlu0 0
  %740 = vperm.xlu0 %739, %v670
  %v741 = vpop.permute.xlu0 %740
  %744 = vset.pattern.permute.xlu0 0
  %745 = vperm.xlu0 %744, %v671
  %v746 = vpop.permute.xlu0 %745
  %749 = vset.pattern.permute.xlu0 0
  %750 = vperm.xlu0 %749, %v672
  %v751 = vpop.permute.xlu0 %750
  %754 = vset.pattern.permute.xlu0 0
  %755 = vperm.xlu0 %754, %v673
  %v756 = vpop.permute.xlu0 %755
  %759 = vset.pattern.permute.xlu0 0
  %760 = vperm.xlu0 %759, %v674
  %v761 = vpop.permute.xlu0 %760
  %v763 = vmul.f32 %v474, %v726
  %v764 = vmul.f32 %v475, %v731
  %v765 = vmul.f32 %v476, %v736
  %v766 = vmul.f32 %v477, %v741
  %v767 = vmul.f32 %v478, %v746
  %v768 = vmul.f32 %v479, %v751
  %v769 = vmul.f32 %v480, %v756
  %v770 = vmul.f32 %v481, %v761
  %772 = vset.pattern.permute.xlu0 1
  %773 = vperm.xlu0 %772, %v715
  %v774 = vpop.permute.xlu0 %773
  %777 = vset.pattern.permute.xlu0 1
  %778 = vperm.xlu0 %777, %v716
  %v779 = vpop.permute.xlu0 %778
  %782 = vset.pattern.permute.xlu0 1
  %783 = vperm.xlu0 %782, %v717
  %v784 = vpop.permute.xlu0 %783
  %787 = vset.pattern.permute.xlu0 1
  %788 = vperm.xlu0 %787, %v718
  %v789 = vpop.permute.xlu0 %788
  %792 = vset.pattern.permute.xlu0 1
  %793 = vperm.xlu0 %792, %v719
  %v794 = vpop.permute.xlu0 %793
  %797 = vset.pattern.permute.xlu0 1
  %798 = vperm.xlu0 %797, %v720
  %v799 = vpop.permute.xlu0 %798
  %802 = vset.pattern.permute.xlu0 1
  %803 = vperm.xlu0 %802, %v721
  %v804 = vpop.permute.xlu0 %803
  %807 = vset.pattern.permute.xlu0 1
  %808 = vperm.xlu0 %807, %v722
  %v809 = vpop.permute.xlu0 %808
  %v811 = vadd.f32 %v763, %v774
  %v812 = vadd.f32 %v764, %v779
  %v813 = vadd.f32 %v765, %v784
  %v814 = vadd.f32 %v766, %v789
  %v815 = vadd.f32 %v767, %v794
  %v816 = vadd.f32 %v768, %v799
  %v817 = vadd.f32 %v769, %v804
  %v818 = vadd.f32 %v770, %v809
  %v819 = vmax.f32 %v811, 0.0
  %v820 = vmax.f32 %v812, 0.0
  %v821 = vmax.f32 %v813, 0.0
  %v822 = vmax.f32 %v814, 0.0
  %v823 = vmax.f32 %v815, 0.0
  %v824 = vmax.f32 %v816, 0.0
  %v825 = vmax.f32 %v817, 0.0
  %v826 = vmax.f32 %v818, 0.0
  %835 = vrot.lane.b32.xlu0 %v819, 8
  %v836 = vpop.permute.xlu0 %835
  %837 = vrot.lane.b32.xlu0 %v820, 8
  %v838 = vpop.permute.xlu0 %837
  %839 = vrot.lane.b32.xlu0 %v821, 8
  %v840 = vpop.permute.xlu0 %839
  %841 = vrot.lane.b32.xlu0 %v822, 8
  %v842 = vpop.permute.xlu0 %841
  %843 = vrot.lane.b32.xlu0 %v823, 8
  %v844 = vpop.permute.xlu0 %843
  %845 = vrot.lane.b32.xlu0 %v824, 8
  %v846 = vpop.permute.xlu0 %845
  %847 = vrot.lane.b32.xlu0 %v825, 8
  %v848 = vpop.permute.xlu0 %847
  %849 = vrot.lane.b32.xlu0 %v826, 8
  %v850 = vpop.permute.xlu0 %849
  %vm859 = vcmask 867392
  %860 = vst.msk [vmem:[#allocation2] sm:$0xff] %vm859, %v836
  %861 = vst.msk [vmem:[#allocation2 + $0x8] sm:$0xff] %vm859, %v838
  %862 = vst.msk [vmem:[#allocation2 + $0x10] sm:$0xff] %vm859, %v840
  %863 = vst.msk [vmem:[#allocation2 + $0x18] sm:$0xff] %vm859, %v842
  %864 = vst.msk [vmem:[#allocation2 + $0x20] sm:$0xff] %vm859, %v844
  %865 = vst.msk [vmem:[#allocation2 + $0x28] sm:$0xff] %vm859, %v846
  %866 = vst.msk [vmem:[#allocation2 + $0x30] sm:$0xff] %vm859, %v848
  %867 = vst.msk [vmem:[#allocation2 + $0x38] sm:$0xff] %vm859, %v850
  %v868 = vld [vmem:[#allocation2] sm:$0xff]
  %v869 = vld [vmem:[#allocation2 + $0x8] sm:$0xff]
  %v870 = vld [vmem:[#allocation2 + $0x10] sm:$0xff]
  %v871 = vld [vmem:[#allocation2 + $0x18] sm:$0xff]
  %v872 = vld [vmem:[#allocation2 + $0x20] sm:$0xff]
  %v873 = vld [vmem:[#allocation2 + $0x28] sm:$0xff]
  %v874 = vld [vmem:[#allocation2 + $0x30] sm:$0xff]
  %v875 = vld [vmem:[#allocation2 + $0x38] sm:$0xff]
  %s876 = scalar_lea.vmem %s2, 160
  %v877 = vld [vmem:[%s876] sm:$0xff]
  %v878 = vld [vmem:[%s876 + $0x8] sm:$0xff]
  %v879 = vld [vmem:[%s876 + $0x10] sm:$0xff]
  %v880 = vld [vmem:[%s876 + $0x18] sm:$0xff]
  %v881 = vld [vmem:[%s6 + $0x3] sm:$0x1]
  %vm882 = vcmp.gt.f32.partialorder %v881, 0.5
  %v883 = vsel %vm882, 1, 0
  %v884 = vperm.slane %v883, 0
  %vm885 = vcmp.eq.s32.totalorder %v884, 1
  %894 = vrot.lane.b32.xlu0 %v868, 121
  %v895 = vpop.permute.xlu0 %894
  %896 = vrot.lane.b32.xlu0 %v869, 121
  %v897 = vpop.permute.xlu0 %896
  %898 = vrot.lane.b32.xlu0 %v870, 121
  %v899 = vpop.permute.xlu0 %898
  %900 = vrot.lane.b32.xlu0 %v871, 121
  %v901 = vpop.permute.xlu0 %900
  %902 = vrot.lane.b32.xlu0 %v872, 121
  %v903 = vpop.permute.xlu0 %902
  %904 = vrot.lane.b32.xlu0 %v873, 121
  %v905 = vpop.permute.xlu0 %904
  %906 = vrot.lane.b32.xlu0 %v874, 121
  %v907 = vpop.permute.xlu0 %906
  %908 = vrot.lane.b32.xlu0 %v875, 121
  %v909 = vpop.permute.xlu0 %908
  %v918 = vsel %vm885, %v895, 0.0
  %v919 = vsel %vm885, %v897, 0.0
  %v920 = vsel %vm885, %v899, 0.0
  %v921 = vsel %vm885, %v901, 0.0
  %v922 = vsel %vm885, %v903, 0.0
  %v923 = vsel %vm885, %v905, 0.0
  %v924 = vsel %vm885, %v907, 0.0
  %v925 = vsel %vm885, %v909, 0.0
  %s926 = scalar_lea.vmem %s2, 224
  %v927 = vld [vmem:[%s926] sm:$0xff]
  %v928 = vld [vmem:[%s926 + $0x8] sm:$0xff]
  %v929 = vld [vmem:[%s926 + $0x10] sm:$0xff]
  %v930 = vld [vmem:[%s926 + $0x18] sm:$0xff]
  %vm931 = vcmask 523264
  %v933 = vsel %vm931, %v927, 0
  %v936 = vsel %vm931, %v928, 0
  %v939 = vsel %vm931, %v929, 0
  %v942 = vsel %vm931, %v930, 0
  %944 = vmatpush.msra.mxu0 0.0
  %945 = vmatpush.msra.mxu0 0.0
  %946 = vmatpush.msra.mxu0 0.0
  %947 = vmatpush.msra.mxu0 0.0
  %948 = vmatpush.msra.mxu0 0.0
  %949 = vmatpush.msra.mxu0 0.0
  %950 = vmatpush.msra.mxu0 0.0
  %951 = vmatpush.msra.mxu0 0.0
  %952 = vmatpush.msra.mxu0 %v925
  %953 = vmatpush.msra.mxu0 %v924
  %954 = vmatpush.msra.mxu0 %v923
  %955 = vmatpush.msra.mxu0 %v922
  %956 = vmatpush.msra.mxu0 %v921
  %957 = vmatpush.msra.mxu0 %v920
  %958 = vmatpush.msra.mxu0 %v919
  %959 = vmatpush.msra.mxu0 %v918
  %960 = vmatmul.f32.gmra.mxu0 %v933
  %v961 = vpop.f32.mrf.mxu0
  %v962 = vadd.f32 0.0, %v961
  %963 = vmatmul.f32.gmra.mxu0 %v936
  %v964 = vpop.f32.mrf.mxu0
  %v965 = vadd.f32 0.0, %v964
  %966 = vmatmul.f32.gmra.mxu0 %v939
  %v967 = vpop.f32.mrf.mxu0
  %v968 = vadd.f32 0.0, %v967
  %969 = vmatmul.f32.gmra.mxu0 %v942
  %v970 = vpop.f32.mrf.mxu0
  %v971 = vadd.f32 0.0, %v970
  %972 = vdwg.mxu0
  %973 = vrot.lane.b32.xlu0 %v868, 120
  %v974 = vpop.permute.xlu0 %973
  %975 = vrot.lane.b32.xlu0 %v869, 120
  %v976 = vpop.permute.xlu0 %975
  %977 = vrot.lane.b32.xlu0 %v870, 120
  %v978 = vpop.permute.xlu0 %977
  %979 = vrot.lane.b32.xlu0 %v871, 120
  %v980 = vpop.permute.xlu0 %979
  %981 = vrot.lane.b32.xlu0 %v872, 120
  %v982 = vpop.permute.xlu0 %981
  %983 = vrot.lane.b32.xlu0 %v873, 120
  %v984 = vpop.permute.xlu0 %983
  %985 = vrot.lane.b32.xlu0 %v874, 120
  %v986 = vpop.permute.xlu0 %985
  %987 = vrot.lane.b32.xlu0 %v875, 120
  %v988 = vpop.permute.xlu0 %987
  %v998 = vsel %vm931, %v877, 0
  %v1001 = vsel %vm931, %v878, 0
  %v1004 = vsel %vm931, %v879, 0
  %v1007 = vsel %vm931, %v880, 0
  %1009 = vmatpush.msra.mxu0 0.0
  %1010 = vmatpush.msra.mxu0 0.0
  %1011 = vmatpush.msra.mxu0 0.0
  %1012 = vmatpush.msra.mxu0 0.0
  %1013 = vmatpush.msra.mxu0 0.0
  %1014 = vmatpush.msra.mxu0 0.0
  %1015 = vmatpush.msra.mxu0 0.0
  %1016 = vmatpush.msra.mxu0 0.0
  %1017 = vmatpush.msra.mxu0 %v988
  %1018 = vmatpush.msra.mxu0 %v986
  %1019 = vmatpush.msra.mxu0 %v984
  %1020 = vmatpush.msra.mxu0 %v982
  %1021 = vmatpush.msra.mxu0 %v980
  %1022 = vmatpush.msra.mxu0 %v978
  %1023 = vmatpush.msra.mxu0 %v976
  %1024 = vmatpush.msra.mxu0 %v974
  %1025 = vmatmul.f32.gmra.mxu0 %v998
  %v1026 = vpop.f32.mrf.mxu0
  %v1027 = vadd.f32 %v962, %v1026
  %1028 = vmatmul.f32.gmra.mxu0 %v1001
  %v1029 = vpop.f32.mrf.mxu0
  %v1030 = vadd.f32 %v965, %v1029
  %1031 = vmatmul.f32.gmra.mxu0 %v1004
  %v1032 = vpop.f32.mrf.mxu0
  %v1033 = vadd.f32 %v968, %v1032
  %1034 = vmatmul.f32.gmra.mxu0 %v1007
  %v1035 = vpop.f32.mrf.mxu0
  %v1036 = vadd.f32 %v971, %v1035
  %1037 = vdwg.mxu0
  %v1038 = vld [vmem:[%s6 + $0x1] sm:$0x1]
  %vm1039 = vcmp.gt.f32.partialorder %v1038, 0.5
  %v1040 = vsel %vm1039, 1, 0
  %v1041 = vperm.slane %v1040, 0
  %vm1042 = vcmp.eq.s32.totalorder %v1041, 1
  %1043 = vrot.lane.b32.xlu0 %v868, 127
  %v1044 = vpop.permute.xlu0 %1043
  %1045 = vrot.lane.b32.xlu0 %v869, 127
  %v1046 = vpop.permute.xlu0 %1045
  %1047 = vrot.lane.b32.xlu0 %v870, 127
  %v1048 = vpop.permute.xlu0 %1047
  %1049 = vrot.lane.b32.xlu0 %v871, 127
  %v1050 = vpop.permute.xlu0 %1049
  %1051 = vrot.lane.b32.xlu0 %v872, 127
  %v1052 = vpop.permute.xlu0 %1051
  %1053 = vrot.lane.b32.xlu0 %v873, 127
  %v1054 = vpop.permute.xlu0 %1053
  %1055 = vrot.lane.b32.xlu0 %v874, 127
  %v1056 = vpop.permute.xlu0 %1055
  %1057 = vrot.lane.b32.xlu0 %v875, 127
  %v1058 = vpop.permute.xlu0 %1057
  %v1067 = vsel %vm1042, %v1044, 0.0
  %v1068 = vsel %vm1042, %v1046, 0.0
  %v1069 = vsel %vm1042, %v1048, 0.0
  %v1070 = vsel %vm1042, %v1050, 0.0
  %v1071 = vsel %vm1042, %v1052, 0.0
  %v1072 = vsel %vm1042, %v1054, 0.0
  %v1073 = vsel %vm1042, %v1056, 0.0
  %v1074 = vsel %vm1042, %v1058, 0.0
  %s1075 = scalar_lea.vmem %s2, 416
  %v1076 = vld [vmem:[%s1075] sm:$0xff]
  %v1077 = vld [vmem:[%s1075 + $0x8] sm:$0xff]
  %v1078 = vld [vmem:[%s1075 + $0x10] sm:$0xff]
  %v1079 = vld [vmem:[%s1075 + $0x18] sm:$0xff]
  %v1081 = vsel %vm931, %v1076, 0
  %v1084 = vsel %vm931, %v1077, 0
  %v1087 = vsel %vm931, %v1078, 0
  %v1090 = vsel %vm931, %v1079, 0
  %1092 = vmatpush.msra.mxu0 0.0
  %1093 = vmatpush.msra.mxu0 0.0
  %1094 = vmatpush.msra.mxu0 0.0
  %1095 = vmatpush.msra.mxu0 0.0
  %1096 = vmatpush.msra.mxu0 0.0
  %1097 = vmatpush.msra.mxu0 0.0
  %1098 = vmatpush.msra.mxu0 0.0
  %1099 = vmatpush.msra.mxu0 0.0
  %1100 = vmatpush.msra.mxu0 %v1074
  %1101 = vmatpush.msra.mxu0 %v1073
  %1102 = vmatpush.msra.mxu0 %v1072
  %1103 = vmatpush.msra.mxu0 %v1071
  %1104 = vmatpush.msra.mxu0 %v1070
  %1105 = vmatpush.msra.mxu0 %v1069
  %1106 = vmatpush.msra.mxu0 %v1068
  %1107 = vmatpush.msra.mxu0 %v1067
  %1108 = vmatmul.f32.gmra.mxu0 %v1081
  %v1109 = vpop.f32.mrf.mxu0
  %v1110 = vadd.f32 0.0, %v1109
  %1111 = vmatmul.f32.gmra.mxu0 %v1084
  %v1112 = vpop.f32.mrf.mxu0
  %v1113 = vadd.f32 0.0, %v1112
  %1114 = vmatmul.f32.gmra.mxu0 %v1087
  %v1115 = vpop.f32.mrf.mxu0
  %v1116 = vadd.f32 0.0, %v1115
  %1117 = vmatmul.f32.gmra.mxu0 %v1090
  %v1118 = vpop.f32.mrf.mxu0
  %v1119 = vadd.f32 0.0, %v1118
  %1120 = vdwg.mxu0
  %v1121 = vadd.f32 %v1027, %v1110
  %v1122 = vadd.f32 %v1030, %v1113
  %v1123 = vadd.f32 %v1033, %v1116
  %v1124 = vadd.f32 %v1036, %v1119
  %v1125 = vld [vmem:[%s6] sm:$0x1]
  %vm1126 = vcmp.gt.f32.partialorder %v1125, 0.5
  %v1127 = vsel %vm1126, 1, 0
  %v1128 = vperm.slane %v1127, 0
  %vm1129 = vcmp.eq.s32.totalorder %v1128, 1
  %v1130 = vsel %vm1129, %v868, 0.0
  %v1131 = vsel %vm1129, %v869, 0.0
  %v1132 = vsel %vm1129, %v870, 0.0
  %v1133 = vsel %vm1129, %v871, 0.0
  %v1134 = vsel %vm1129, %v872, 0.0
  %v1135 = vsel %vm1129, %v873, 0.0
  %v1136 = vsel %vm1129, %v874, 0.0
  %v1137 = vsel %vm1129, %v875, 0.0
  %s1138 = scalar_lea.vmem %s2, 480
  %v1139 = vld [vmem:[%s1138] sm:$0xff]
  %v1140 = vld [vmem:[%s1138 + $0x8] sm:$0xff]
  %v1141 = vld [vmem:[%s1138 + $0x10] sm:$0xff]
  %v1142 = vld [vmem:[%s1138 + $0x18] sm:$0xff]
  %v1144 = vsel %vm931, %v1139, 0
  %v1147 = vsel %vm931, %v1140, 0
  %v1150 = vsel %vm931, %v1141, 0
  %v1153 = vsel %vm931, %v1142, 0
  %1155 = vmatpush.msra.mxu0 0.0
  %1156 = vmatpush.msra.mxu0 0.0
  %1157 = vmatpush.msra.mxu0 0.0
  %1158 = vmatpush.msra.mxu0 0.0
  %1159 = vmatpush.msra.mxu0 0.0
  %1160 = vmatpush.msra.mxu0 0.0
  %1161 = vmatpush.msra.mxu0 0.0
  %1162 = vmatpush.msra.mxu0 0.0
  %1163 = vmatpush.msra.mxu0 %v1137
  %1164 = vmatpush.msra.mxu0 %v1136
  %1165 = vmatpush.msra.mxu0 %v1135
  %1166 = vmatpush.msra.mxu0 %v1134
  %1167 = vmatpush.msra.mxu0 %v1133
  %1168 = vmatpush.msra.mxu0 %v1132
  %1169 = vmatpush.msra.mxu0 %v1131
  %1170 = vmatpush.msra.mxu0 %v1130
  %1171 = vmatmul.f32.gmra.mxu0 %v1144
  %v1172 = vpop.f32.mrf.mxu0
  %v1173 = vadd.f32 0.0, %v1172
  %1174 = vmatmul.f32.gmra.mxu0 %v1147
  %v1175 = vpop.f32.mrf.mxu0
  %v1176 = vadd.f32 0.0, %v1175
  %1177 = vmatmul.f32.gmra.mxu0 %v1150
  %v1178 = vpop.f32.mrf.mxu0
  %v1179 = vadd.f32 0.0, %v1178
  %1180 = vmatmul.f32.gmra.mxu0 %v1153
  %v1181 = vpop.f32.mrf.mxu0
  %v1182 = vadd.f32 0.0, %v1181
  %1183 = vdwg.mxu0
  %v1184 = vadd.f32 %v1121, %v1173
  %v1185 = vadd.f32 %v1122, %v1176
  %v1186 = vadd.f32 %v1123, %v1179
  %v1187 = vadd.f32 %v1124, %v1182
  %v1188 = vld [vmem:[%s6 + $0x5] sm:$0x1]
  %vm1189 = vcmp.gt.f32.partialorder %v1188, 0.5
  %v1190 = vsel %vm1189, 1, 0
  %v1191 = vperm.slane %v1190, 0
  %vm1192 = vcmp.eq.s32.totalorder %v1191, 1
  %1193 = vrot.lane.b32.xlu0 %v868, 119
  %v1194 = vpop.permute.xlu0 %1193
  %1195 = vrot.lane.b32.xlu0 %v869, 119
  %v1196 = vpop.permute.xlu0 %1195
  %1197 = vrot.lane.b32.xlu0 %v870, 119
  %v1198 = vpop.permute.xlu0 %1197
  %1199 = vrot.lane.b32.xlu0 %v871, 119
  %v1200 = vpop.permute.xlu0 %1199
  %1201 = vrot.lane.b32.xlu0 %v872, 119
  %v1202 = vpop.permute.xlu0 %1201
  %1203 = vrot.lane.b32.xlu0 %v873, 119
  %v1204 = vpop.permute.xlu0 %1203
  %1205 = vrot.lane.b32.xlu0 %v874, 119
  %v1206 = vpop.permute.xlu0 %1205
  %1207 = vrot.lane.b32.xlu0 %v875, 119
  %v1208 = vpop.permute.xlu0 %1207
  %v1217 = vsel %vm1192, %v1194, 0.0
  %v1218 = vsel %vm1192, %v1196, 0.0
  %v1219 = vsel %vm1192, %v1198, 0.0
  %v1220 = vsel %vm1192, %v1200, 0.0
  %v1221 = vsel %vm1192, %v1202, 0.0
  %v1222 = vsel %vm1192, %v1204, 0.0
  %v1223 = vsel %vm1192, %v1206, 0.0
  %v1224 = vsel %vm1192, %v1208, 0.0
  %s1225 = scalar_lea.vmem %s2, 128
  %v1226 = vld [vmem:[%s1225] sm:$0xff]
  %v1227 = vld [vmem:[%s1225 + $0x8] sm:$0xff]
  %v1228 = vld [vmem:[%s1225 + $0x10] sm:$0xff]
  %v1229 = vld [vmem:[%s1225 + $0x18] sm:$0xff]
  %s1230 = scalar_lea.vmem %s2, 192
  %v1231 = vld [vmem:[%s1230] sm:$0xff]
  %v1232 = vld [vmem:[%s1230 + $0x8] sm:$0xff]
  %v1233 = vld [vmem:[%s1230 + $0x10] sm:$0xff]
  %v1234 = vld [vmem:[%s1230 + $0x18] sm:$0xff]
  %v1236 = vsel %vm931, %v1231, 0
  %v1239 = vsel %vm931, %v1232, 0
  %v1242 = vsel %vm931, %v1233, 0
  %v1245 = vsel %vm931, %v1234, 0
  %1247 = vmatpush.msra.mxu0 0.0
  %1248 = vmatpush.msra.mxu0 0.0
  %1249 = vmatpush.msra.mxu0 0.0
  %1250 = vmatpush.msra.mxu0 0.0
  %1251 = vmatpush.msra.mxu0 0.0
  %1252 = vmatpush.msra.mxu0 0.0
  %1253 = vmatpush.msra.mxu0 0.0
  %1254 = vmatpush.msra.mxu0 0.0
  %1255 = vmatpush.msra.mxu0 %v988
  %1256 = vmatpush.msra.mxu0 %v986
  %1257 = vmatpush.msra.mxu0 %v984
  %1258 = vmatpush.msra.mxu0 %v982
  %1259 = vmatpush.msra.mxu0 %v980
  %1260 = vmatpush.msra.mxu0 %v978
  %1261 = vmatpush.msra.mxu0 %v976
  %1262 = vmatpush.msra.mxu0 %v974
  %1263 = vmatmul.f32.gmra.mxu0 %v1236
  %v1264 = vpop.f32.mrf.mxu0
  %v1265 = vadd.f32 0.0, %v1264
  %1266 = vmatmul.f32.gmra.mxu0 %v1239
  %v1267 = vpop.f32.mrf.mxu0
  %v1268 = vadd.f32 0.0, %v1267
  %1269 = vmatmul.f32.gmra.mxu0 %v1242
  %v1270 = vpop.f32.mrf.mxu0
  %v1271 = vadd.f32 0.0, %v1270
  %1272 = vmatmul.f32.gmra.mxu0 %v1245
  %v1273 = vpop.f32.mrf.mxu0
  %v1274 = vadd.f32 0.0, %v1273
  %1275 = vdwg.mxu0
  %v1277 = vsel %vm931, %v1226, 0
  %v1280 = vsel %vm931, %v1227, 0
  %v1283 = vsel %vm931, %v1228, 0
  %v1286 = vsel %vm931, %v1229, 0
  %1288 = vmatpush.msra.mxu0 0.0
  %1289 = vmatpush.msra.mxu0 0.0
  %1290 = vmatpush.msra.mxu0 0.0
  %1291 = vmatpush.msra.mxu0 0.0
  %1292 = vmatpush.msra.mxu0 0.0
  %1293 = vmatpush.msra.mxu0 0.0
  %1294 = vmatpush.msra.mxu0 0.0
  %1295 = vmatpush.msra.mxu0 0.0
  %1296 = vmatpush.msra.mxu0 %v1224
  %1297 = vmatpush.msra.mxu0 %v1223
  %1298 = vmatpush.msra.mxu0 %v1222
  %1299 = vmatpush.msra.mxu0 %v1221
  %1300 = vmatpush.msra.mxu0 %v1220
  %1301 = vmatpush.msra.mxu0 %v1219
  %1302 = vmatpush.msra.mxu0 %v1218
  %1303 = vmatpush.msra.mxu0 %v1217
  %1304 = vmatmul.f32.gmra.mxu0 %v1277
  %v1305 = vpop.f32.mrf.mxu0
  %v1306 = vadd.f32 %v1265, %v1305
  %1307 = vmatmul.f32.gmra.mxu0 %v1280
  %v1308 = vpop.f32.mrf.mxu0
  %v1309 = vadd.f32 %v1268, %v1308
  %1310 = vmatmul.f32.gmra.mxu0 %v1283
  %v1311 = vpop.f32.mrf.mxu0
  %v1312 = vadd.f32 %v1271, %v1311
  %1313 = vmatmul.f32.gmra.mxu0 %v1286
  %v1314 = vpop.f32.mrf.mxu0
  %v1315 = vadd.f32 %v1274, %v1314
  %1316 = vdwg.mxu0
  %v1317 = vld [vmem:[%s6 + $0x2] sm:$0x1]
  %vm1318 = vcmp.gt.f32.partialorder %v1317, 0.5
  %v1319 = vsel %vm1318, 1, 0
  %v1320 = vperm.slane %v1319, 0
  %vm1321 = vcmp.eq.s32.totalorder %v1320, 1
  %1322 = vrot.lane.b32.xlu0 %v868, 126
  %v1323 = vpop.permute.xlu0 %1322
  %1324 = vrot.lane.b32.xlu0 %v869, 126
  %v1325 = vpop.permute.xlu0 %1324
  %1326 = vrot.lane.b32.xlu0 %v870, 126
  %v1327 = vpop.permute.xlu0 %1326
  %1328 = vrot.lane.b32.xlu0 %v871, 126
  %v1329 = vpop.permute.xlu0 %1328
  %1330 = vrot.lane.b32.xlu0 %v872, 126
  %v1331 = vpop.permute.xlu0 %1330
  %1332 = vrot.lane.b32.xlu0 %v873, 126
  %v1333 = vpop.permute.xlu0 %1332
  %1334 = vrot.lane.b32.xlu0 %v874, 126
  %v1335 = vpop.permute.xlu0 %1334
  %1336 = vrot.lane.b32.xlu0 %v875, 126
  %v1337 = vpop.permute.xlu0 %1336
  %v1346 = vsel %vm1321, %v1323, 0.0
  %v1347 = vsel %vm1321, %v1325, 0.0
  %v1348 = vsel %vm1321, %v1327, 0.0
  %v1349 = vsel %vm1321, %v1329, 0.0
  %v1350 = vsel %vm1321, %v1331, 0.0
  %v1351 = vsel %vm1321, %v1333, 0.0
  %v1352 = vsel %vm1321, %v1335, 0.0
  %v1353 = vsel %vm1321, %v1337, 0.0
  %s1354 = scalar_lea.vmem %s2, 384
  %v1355 = vld [vmem:[%s1354] sm:$0xff]
  %v1356 = vld [vmem:[%s1354 + $0x8] sm:$0xff]
  %v1357 = vld [vmem:[%s1354 + $0x10] sm:$0xff]
  %v1358 = vld [vmem:[%s1354 + $0x18] sm:$0xff]
  %v1360 = vsel %vm931, %v1355, 0
  %v1363 = vsel %vm931, %v1356, 0
  %v1366 = vsel %vm931, %v1357, 0
  %v1369 = vsel %vm931, %v1358, 0
  %1371 = vmatpush.msra.mxu0 0.0
  %1372 = vmatpush.msra.mxu0 0.0
  %1373 = vmatpush.msra.mxu0 0.0
  %1374 = vmatpush.msra.mxu0 0.0
  %1375 = vmatpush.msra.mxu0 0.0
  %1376 = vmatpush.msra.mxu0 0.0
  %1377 = vmatpush.msra.mxu0 0.0
  %1378 = vmatpush.msra.mxu0 0.0
  %1379 = vmatpush.msra.mxu0 %v1353
  %1380 = vmatpush.msra.mxu0 %v1352
  %1381 = vmatpush.msra.mxu0 %v1351
  %1382 = vmatpush.msra.mxu0 %v1350
  %1383 = vmatpush.msra.mxu0 %v1349
  %1384 = vmatpush.msra.mxu0 %v1348
  %1385 = vmatpush.msra.mxu0 %v1347
  %1386 = vmatpush.msra.mxu0 %v1346
  %1387 = vmatmul.f32.gmra.mxu0 %v1360
  %v1388 = vpop.f32.mrf.mxu0
  %v1389 = vadd.f32 0.0, %v1388
  %1390 = vmatmul.f32.gmra.mxu0 %v1363
  %v1391 = vpop.f32.mrf.mxu0
  %v1392 = vadd.f32 0.0, %v1391
  %1393 = vmatmul.f32.gmra.mxu0 %v1366
  %v1394 = vpop.f32.mrf.mxu0
  %v1395 = vadd.f32 0.0, %v1394
  %1396 = vmatmul.f32.gmra.mxu0 %v1369
  %v1397 = vpop.f32.mrf.mxu0
  %v1398 = vadd.f32 0.0, %v1397
  %1399 = vdwg.mxu0
  %v1400 = vadd.f32 %v1306, %v1389
  %v1401 = vadd.f32 %v1309, %v1392
  %v1402 = vadd.f32 %v1312, %v1395
  %v1403 = vadd.f32 %v1315, %v1398
  %s1404 = scalar_lea.vmem %s2, 448
  %v1405 = vld [vmem:[%s1404] sm:$0xff]
  %v1406 = vld [vmem:[%s1404 + $0x8] sm:$0xff]
  %v1407 = vld [vmem:[%s1404 + $0x10] sm:$0xff]
  %v1408 = vld [vmem:[%s1404 + $0x18] sm:$0xff]
  %v1410 = vsel %vm931, %v1405, 0
  %v1413 = vsel %vm931, %v1406, 0
  %v1416 = vsel %vm931, %v1407, 0
  %v1419 = vsel %vm931, %v1408, 0
  %1421 = vmatpush.msra.mxu0 0.0
  %1422 = vmatpush.msra.mxu0 0.0
  %1423 = vmatpush.msra.mxu0 0.0
  %1424 = vmatpush.msra.mxu0 0.0
  %1425 = vmatpush.msra.mxu0 0.0
  %1426 = vmatpush.msra.mxu0 0.0
  %1427 = vmatpush.msra.mxu0 0.0
  %1428 = vmatpush.msra.mxu0 0.0
  %1429 = vmatpush.msra.mxu0 %v1074
  %1430 = vmatpush.msra.mxu0 %v1073
  %1431 = vmatpush.msra.mxu0 %v1072
  %1432 = vmatpush.msra.mxu0 %v1071
  %1433 = vmatpush.msra.mxu0 %v1070
  %1434 = vmatpush.msra.mxu0 %v1069
  %1435 = vmatpush.msra.mxu0 %v1068
  %1436 = vmatpush.msra.mxu0 %v1067
  %1437 = vmatmul.f32.gmra.mxu0 %v1410
  %v1438 = vpop.f32.mrf.mxu0
  %v1439 = vadd.f32 0.0, %v1438
  %1440 = vmatmul.f32.gmra.mxu0 %v1413
  %v1441 = vpop.f32.mrf.mxu0
  %v1442 = vadd.f32 0.0, %v1441
  %1443 = vmatmul.f32.gmra.mxu0 %v1416
  %v1444 = vpop.f32.mrf.mxu0
  %v1445 = vadd.f32 0.0, %v1444
  %1446 = vmatmul.f32.gmra.mxu0 %v1419
  %v1447 = vpop.f32.mrf.mxu0
  %v1448 = vadd.f32 0.0, %v1447
  %1449 = vdwg.mxu0
  %v1450 = vadd.f32 %v1400, %v1439
  %v1451 = vadd.f32 %v1401, %v1442
  %v1452 = vadd.f32 %v1402, %v1445
  %v1453 = vadd.f32 %v1403, %v1448
  %v1454 = vld [vmem:[%s6 + $0x7] sm:$0x1]
  %vm1455 = vcmp.gt.f32.partialorder %v1454, 0.5
  %v1456 = vsel %vm1455, 1, 0
  %v1457 = vperm.slane %v1456, 0
  %vm1458 = vcmp.eq.s32.totalorder %v1457, 1
  %1459 = vrot.lane.b32.xlu0 %v868, 113
  %v1460 = vpop.permute.xlu0 %1459
  %1461 = vrot.lane.b32.xlu0 %v869, 113
  %v1462 = vpop.permute.xlu0 %1461
  %1463 = vrot.lane.b32.xlu0 %v870, 113
  %v1464 = vpop.permute.xlu0 %1463
  %1465 = vrot.lane.b32.xlu0 %v871, 113
  %v1466 = vpop.permute.xlu0 %1465
  %1467 = vrot.lane.b32.xlu0 %v872, 113
  %v1468 = vpop.permute.xlu0 %1467
  %1469 = vrot.lane.b32.xlu0 %v873, 113
  %v1470 = vpop.permute.xlu0 %1469
  %1471 = vrot.lane.b32.xlu0 %v874, 113
  %v1472 = vpop.permute.xlu0 %1471
  %1473 = vrot.lane.b32.xlu0 %v875, 113
  %v1474 = vpop.permute.xlu0 %1473
  %v1483 = vsel %vm1458, %v1460, 0.0
  %v1484 = vsel %vm1458, %v1462, 0.0
  %v1485 = vsel %vm1458, %v1464, 0.0
  %v1486 = vsel %vm1458, %v1466, 0.0
  %v1487 = vsel %vm1458, %v1468, 0.0
  %v1488 = vsel %vm1458, %v1470, 0.0
  %v1489 = vsel %vm1458, %v1472, 0.0
  %v1490 = vsel %vm1458, %v1474, 0.0
  %s1491 = scalar_lea.vmem %s2, 32
  %v1492 = vld [vmem:[%s1491] sm:$0xff]
  %v1493 = vld [vmem:[%s1491 + $0x8] sm:$0xff]
  %v1494 = vld [vmem:[%s1491 + $0x10] sm:$0xff]
  %v1495 = vld [vmem:[%s1491 + $0x18] sm:$0xff]
  %v1496 = vld [vmem:[%s6 + $0x6] sm:$0x1]
  %vm1497 = vcmp.gt.f32.partialorder %v1496, 0.5
  %v1498 = vsel %vm1497, 1, 0
  %v1499 = vperm.slane %v1498, 0
  %vm1500 = vcmp.eq.s32.totalorder %v1499, 1
  %1501 = vrot.lane.b32.xlu0 %v868, 114
  %v1502 = vpop.permute.xlu0 %1501
  %1503 = vrot.lane.b32.xlu0 %v869, 114
  %v1504 = vpop.permute.xlu0 %1503
  %1505 = vrot.lane.b32.xlu0 %v870, 114
  %v1506 = vpop.permute.xlu0 %1505
  %1507 = vrot.lane.b32.xlu0 %v871, 114
  %v1508 = vpop.permute.xlu0 %1507
  %1509 = vrot.lane.b32.xlu0 %v872, 114
  %v1510 = vpop.permute.xlu0 %1509
  %1511 = vrot.lane.b32.xlu0 %v873, 114
  %v1512 = vpop.permute.xlu0 %1511
  %1513 = vrot.lane.b32.xlu0 %v874, 114
  %v1514 = vpop.permute.xlu0 %1513
  %1515 = vrot.lane.b32.xlu0 %v875, 114
  %v1516 = vpop.permute.xlu0 %1515
  %v1525 = vsel %vm1500, %v1502, 0.0
  %v1526 = vsel %vm1500, %v1504, 0.0
  %v1527 = vsel %vm1500, %v1506, 0.0
  %v1528 = vsel %vm1500, %v1508, 0.0
  %v1529 = vsel %vm1500, %v1510, 0.0
  %v1530 = vsel %vm1500, %v1512, 0.0
  %v1531 = vsel %vm1500, %v1514, 0.0
  %v1532 = vsel %vm1500, %v1516, 0.0
  %s1533 = scalar_lea.vmem %s2, 96
  %v1534 = vld [vmem:[%s1533] sm:$0xff]
  %v1535 = vld [vmem:[%s1533 + $0x8] sm:$0xff]
  %v1536 = vld [vmem:[%s1533 + $0x10] sm:$0xff]
  %v1537 = vld [vmem:[%s1533 + $0x18] sm:$0xff]
  %v1539 = vsel %vm931, %v1534, 0
  %v1542 = vsel %vm931, %v1535, 0
  %v1545 = vsel %vm931, %v1536, 0
  %v1548 = vsel %vm931, %v1537, 0
  %1550 = vmatpush.msra.mxu0 0.0
  %1551 = vmatpush.msra.mxu0 0.0
  %1552 = vmatpush.msra.mxu0 0.0
  %1553 = vmatpush.msra.mxu0 0.0
  %1554 = vmatpush.msra.mxu0 0.0
  %1555 = vmatpush.msra.mxu0 0.0
  %1556 = vmatpush.msra.mxu0 0.0
  %1557 = vmatpush.msra.mxu0 0.0
  %1558 = vmatpush.msra.mxu0 %v1532
  %1559 = vmatpush.msra.mxu0 %v1531
  %1560 = vmatpush.msra.mxu0 %v1530
  %1561 = vmatpush.msra.mxu0 %v1529
  %1562 = vmatpush.msra.mxu0 %v1528
  %1563 = vmatpush.msra.mxu0 %v1527
  %1564 = vmatpush.msra.mxu0 %v1526
  %1565 = vmatpush.msra.mxu0 %v1525
  %1566 = vmatmul.f32.gmra.mxu0 %v1539
  %v1567 = vpop.f32.mrf.mxu0
  %v1568 = vadd.f32 0.0, %v1567
  %1569 = vmatmul.f32.gmra.mxu0 %v1542
  %v1570 = vpop.f32.mrf.mxu0
  %v1571 = vadd.f32 0.0, %v1570
  %1572 = vmatmul.f32.gmra.mxu0 %v1545
  %v1573 = vpop.f32.mrf.mxu0
  %v1574 = vadd.f32 0.0, %v1573
  %1575 = vmatmul.f32.gmra.mxu0 %v1548
  %v1576 = vpop.f32.mrf.mxu0
  %v1577 = vadd.f32 0.0, %v1576
  %1578 = vdwg.mxu0
  %v1580 = vsel %vm931, %v1492, 0
  %v1583 = vsel %vm931, %v1493, 0
  %v1586 = vsel %vm931, %v1494, 0
  %v1589 = vsel %vm931, %v1495, 0
  %1591 = vmatpush.msra.mxu0 0.0
  %1592 = vmatpush.msra.mxu0 0.0
  %1593 = vmatpush.msra.mxu0 0.0
  %1594 = vmatpush.msra.mxu0 0.0
  %1595 = vmatpush.msra.mxu0 0.0
  %1596 = vmatpush.msra.mxu0 0.0
  %1597 = vmatpush.msra.mxu0 0.0
  %1598 = vmatpush.msra.mxu0 0.0
  %1599 = vmatpush.msra.mxu0 %v1490
  %1600 = vmatpush.msra.mxu0 %v1489
  %1601 = vmatpush.msra.mxu0 %v1488
  %1602 = vmatpush.msra.mxu0 %v1487
  %1603 = vmatpush.msra.mxu0 %v1486
  %1604 = vmatpush.msra.mxu0 %v1485
  %1605 = vmatpush.msra.mxu0 %v1484
  %1606 = vmatpush.msra.mxu0 %v1483
  %1607 = vmatmul.f32.gmra.mxu0 %v1580
  %v1608 = vpop.f32.mrf.mxu0
  %v1609 = vadd.f32 %v1568, %v1608
  %1610 = vmatmul.f32.gmra.mxu0 %v1583
  %v1611 = vpop.f32.mrf.mxu0
  %v1612 = vadd.f32 %v1571, %v1611
  %1613 = vmatmul.f32.gmra.mxu0 %v1586
  %v1614 = vpop.f32.mrf.mxu0
  %v1615 = vadd.f32 %v1574, %v1614
  %1616 = vmatmul.f32.gmra.mxu0 %v1589
  %v1617 = vpop.f32.mrf.mxu0
  %v1618 = vadd.f32 %v1577, %v1617
  %1619 = vdwg.mxu0
  %s1620 = scalar_lea.vmem %s2, 288
  %v1621 = vld [vmem:[%s1620] sm:$0xff]
  %v1622 = vld [vmem:[%s1620 + $0x8] sm:$0xff]
  %v1623 = vld [vmem:[%s1620 + $0x10] sm:$0xff]
  %v1624 = vld [vmem:[%s1620 + $0x18] sm:$0xff]
  %v1626 = vsel %vm931, %v1621, 0
  %v1629 = vsel %vm931, %v1622, 0
  %v1632 = vsel %vm931, %v1623, 0
  %v1635 = vsel %vm931, %v1624, 0
  %1637 = vmatpush.msra.mxu0 0.0
  %1638 = vmatpush.msra.mxu0 0.0
  %1639 = vmatpush.msra.mxu0 0.0
  %1640 = vmatpush.msra.mxu0 0.0
  %1641 = vmatpush.msra.mxu0 0.0
  %1642 = vmatpush.msra.mxu0 0.0
  %1643 = vmatpush.msra.mxu0 0.0
  %1644 = vmatpush.msra.mxu0 0.0
  %1645 = vmatpush.msra.mxu0 %v988
  %1646 = vmatpush.msra.mxu0 %v986
  %1647 = vmatpush.msra.mxu0 %v984
  %1648 = vmatpush.msra.mxu0 %v982
  %1649 = vmatpush.msra.mxu0 %v980
  %1650 = vmatpush.msra.mxu0 %v978
  %1651 = vmatpush.msra.mxu0 %v976
  %1652 = vmatpush.msra.mxu0 %v974
  %1653 = vmatmul.f32.gmra.mxu0 %v1626
  %v1654 = vpop.f32.mrf.mxu0
  %v1655 = vadd.f32 0.0, %v1654
  %1656 = vmatmul.f32.gmra.mxu0 %v1629
  %v1657 = vpop.f32.mrf.mxu0
  %v1658 = vadd.f32 0.0, %v1657
  %1659 = vmatmul.f32.gmra.mxu0 %v1632
  %v1660 = vpop.f32.mrf.mxu0
  %v1661 = vadd.f32 0.0, %v1660
  %1662 = vmatmul.f32.gmra.mxu0 %v1635
  %v1663 = vpop.f32.mrf.mxu0
  %v1664 = vadd.f32 0.0, %v1663
  %1665 = vdwg.mxu0
  %v1666 = vadd.f32 %v1609, %v1655
  %v1667 = vadd.f32 %v1612, %v1658
  %v1668 = vadd.f32 %v1615, %v1661
  %v1669 = vadd.f32 %v1618, %v1664
  %s1670 = scalar_lea.vmem %s2, 352
  %v1671 = vld [vmem:[%s1670] sm:$0xff]
  %v1672 = vld [vmem:[%s1670 + $0x8] sm:$0xff]
  %v1673 = vld [vmem:[%s1670 + $0x10] sm:$0xff]
  %v1674 = vld [vmem:[%s1670 + $0x18] sm:$0xff]
  %v1676 = vsel %vm931, %v1671, 0
  %v1679 = vsel %vm931, %v1672, 0
  %v1682 = vsel %vm931, %v1673, 0
  %v1685 = vsel %vm931, %v1674, 0
  %1687 = vmatpush.msra.mxu0 0.0
  %1688 = vmatpush.msra.mxu0 0.0
  %1689 = vmatpush.msra.mxu0 0.0
  %1690 = vmatpush.msra.mxu0 0.0
  %1691 = vmatpush.msra.mxu0 0.0
  %1692 = vmatpush.msra.mxu0 0.0
  %1693 = vmatpush.msra.mxu0 0.0
  %1694 = vmatpush.msra.mxu0 0.0
  %1695 = vmatpush.msra.mxu0 %v925
  %1696 = vmatpush.msra.mxu0 %v924
  %1697 = vmatpush.msra.mxu0 %v923
  %1698 = vmatpush.msra.mxu0 %v922
  %1699 = vmatpush.msra.mxu0 %v921
  %1700 = vmatpush.msra.mxu0 %v920
  %1701 = vmatpush.msra.mxu0 %v919
  %1702 = vmatpush.msra.mxu0 %v918
  %1703 = vmatmul.f32.gmra.mxu0 %v1676
  %v1704 = vpop.f32.mrf.mxu0
  %v1705 = vadd.f32 0.0, %v1704
  %1706 = vmatmul.f32.gmra.mxu0 %v1679
  %v1707 = vpop.f32.mrf.mxu0
  %v1708 = vadd.f32 0.0, %v1707
  %1709 = vmatmul.f32.gmra.mxu0 %v1682
  %v1710 = vpop.f32.mrf.mxu0
  %v1711 = vadd.f32 0.0, %v1710
  %1712 = vmatmul.f32.gmra.mxu0 %v1685
  %v1713 = vpop.f32.mrf.mxu0
  %v1714 = vadd.f32 0.0, %v1713
  %1715 = vdwg.mxu0
  %v1716 = vadd.f32 %v1666, %v1705
  %v1717 = vadd.f32 %v1667, %v1708
  %v1718 = vadd.f32 %v1668, %v1711
  %v1719 = vadd.f32 %v1669, %v1714
  %v1720 = vld [vmem:[%s6 + $0x8] sm:$0x1]
  %vm1721 = vcmp.gt.f32.partialorder %v1720, 0.5
  %v1722 = vsel %vm1721, 1, 0
  %v1723 = vperm.slane %v1722, 0
  %vm1724 = vcmp.eq.s32.totalorder %v1723, 1
  %1725 = vrot.lane.b32.xlu0 %v868, 112
  %v1726 = vpop.permute.xlu0 %1725
  %1727 = vrot.lane.b32.xlu0 %v869, 112
  %v1728 = vpop.permute.xlu0 %1727
  %1729 = vrot.lane.b32.xlu0 %v870, 112
  %v1730 = vpop.permute.xlu0 %1729
  %1731 = vrot.lane.b32.xlu0 %v871, 112
  %v1732 = vpop.permute.xlu0 %1731
  %1733 = vrot.lane.b32.xlu0 %v872, 112
  %v1734 = vpop.permute.xlu0 %1733
  %1735 = vrot.lane.b32.xlu0 %v873, 112
  %v1736 = vpop.permute.xlu0 %1735
  %1737 = vrot.lane.b32.xlu0 %v874, 112
  %v1738 = vpop.permute.xlu0 %1737
  %1739 = vrot.lane.b32.xlu0 %v875, 112
  %v1740 = vpop.permute.xlu0 %1739
  %v1749 = vsel %vm1724, %v1726, 0.0
  %v1750 = vsel %vm1724, %v1728, 0.0
  %v1751 = vsel %vm1724, %v1730, 0.0
  %v1752 = vsel %vm1724, %v1732, 0.0
  %v1753 = vsel %vm1724, %v1734, 0.0
  %v1754 = vsel %vm1724, %v1736, 0.0
  %v1755 = vsel %vm1724, %v1738, 0.0
  %v1756 = vsel %vm1724, %v1740, 0.0
  %v1757 = vld [vmem:[%s2] sm:$0xff]
  %v1758 = vld [vmem:[%s2 + $0x8] sm:$0xff]
  %v1759 = vld [vmem:[%s2 + $0x10] sm:$0xff]
  %v1760 = vld [vmem:[%s2 + $0x18] sm:$0xff]
  %s1761 = scalar_lea.vmem %s2, 64
  %v1762 = vld [vmem:[%s1761] sm:$0xff]
  %v1763 = vld [vmem:[%s1761 + $0x8] sm:$0xff]
  %v1764 = vld [vmem:[%s1761 + $0x10] sm:$0xff]
  %v1765 = vld [vmem:[%s1761 + $0x18] sm:$0xff]
  %v1767 = vsel %vm931, %v1762, 0
  %v1770 = vsel %vm931, %v1763, 0
  %v1773 = vsel %vm931, %v1764, 0
  %v1776 = vsel %vm931, %v1765, 0
  %1778 = vmatpush.msra.mxu0 0.0
  %1779 = vmatpush.msra.mxu0 0.0
  %1780 = vmatpush.msra.mxu0 0.0
  %1781 = vmatpush.msra.mxu0 0.0
  %1782 = vmatpush.msra.mxu0 0.0
  %1783 = vmatpush.msra.mxu0 0.0
  %1784 = vmatpush.msra.mxu0 0.0
  %1785 = vmatpush.msra.mxu0 0.0
  %1786 = vmatpush.msra.mxu0 %v1490
  %1787 = vmatpush.msra.mxu0 %v1489
  %1788 = vmatpush.msra.mxu0 %v1488
  %1789 = vmatpush.msra.mxu0 %v1487
  %1790 = vmatpush.msra.mxu0 %v1486
  %1791 = vmatpush.msra.mxu0 %v1485
  %1792 = vmatpush.msra.mxu0 %v1484
  %1793 = vmatpush.msra.mxu0 %v1483
  %1794 = vmatmul.f32.gmra.mxu0 %v1767
  %v1795 = vpop.f32.mrf.mxu0
  %v1796 = vadd.f32 0.0, %v1795
  %1797 = vmatmul.f32.gmra.mxu0 %v1770
  %v1798 = vpop.f32.mrf.mxu0
  %v1799 = vadd.f32 0.0, %v1798
  %1800 = vmatmul.f32.gmra.mxu0 %v1773
  %v1801 = vpop.f32.mrf.mxu0
  %v1802 = vadd.f32 0.0, %v1801
  %1803 = vmatmul.f32.gmra.mxu0 %v1776
  %v1804 = vpop.f32.mrf.mxu0
  %v1805 = vadd.f32 0.0, %v1804
  %1806 = vdwg.mxu0
  %v1808 = vsel %vm931, %v1757, 0
  %v1811 = vsel %vm931, %v1758, 0
  %v1814 = vsel %vm931, %v1759, 0
  %v1817 = vsel %vm931, %v1760, 0
  %1819 = vmatpush.msra.mxu0 0.0
  %1820 = vmatpush.msra.mxu0 0.0
  %1821 = vmatpush.msra.mxu0 0.0
  %1822 = vmatpush.msra.mxu0 0.0
  %1823 = vmatpush.msra.mxu0 0.0
  %1824 = vmatpush.msra.mxu0 0.0
  %1825 = vmatpush.msra.mxu0 0.0
  %1826 = vmatpush.msra.mxu0 0.0
  %1827 = vmatpush.msra.mxu0 %v1756
  %1828 = vmatpush.msra.mxu0 %v1755
  %1829 = vmatpush.msra.mxu0 %v1754
  %1830 = vmatpush.msra.mxu0 %v1753
  %1831 = vmatpush.msra.mxu0 %v1752
  %1832 = vmatpush.msra.mxu0 %v1751
  %1833 = vmatpush.msra.mxu0 %v1750
  %1834 = vmatpush.msra.mxu0 %v1749
  %1835 = vmatmul.f32.gmra.mxu0 %v1808
  %v1836 = vpop.f32.mrf.mxu0
  %v1837 = vadd.f32 %v1796, %v1836
  %1838 = vmatmul.f32.gmra.mxu0 %v1811
  %v1839 = vpop.f32.mrf.mxu0
  %v1840 = vadd.f32 %v1799, %v1839
  %1841 = vmatmul.f32.gmra.mxu0 %v1814
  %v1842 = vpop.f32.mrf.mxu0
  %v1843 = vadd.f32 %v1802, %v1842
  %1844 = vmatmul.f32.gmra.mxu0 %v1817
  %v1845 = vpop.f32.mrf.mxu0
  %v1846 = vadd.f32 %v1805, %v1845
  %1847 = vdwg.mxu0
  %s1848 = scalar_lea.vmem %s2, 256
  %v1849 = vld [vmem:[%s1848] sm:$0xff]
  %v1850 = vld [vmem:[%s1848 + $0x8] sm:$0xff]
  %v1851 = vld [vmem:[%s1848 + $0x10] sm:$0xff]
  %v1852 = vld [vmem:[%s1848 + $0x18] sm:$0xff]
  %v1854 = vsel %vm931, %v1849, 0
  %v1857 = vsel %vm931, %v1850, 0
  %v1860 = vsel %vm931, %v1851, 0
  %v1863 = vsel %vm931, %v1852, 0
  %1865 = vmatpush.msra.mxu0 0.0
  %1866 = vmatpush.msra.mxu0 0.0
  %1867 = vmatpush.msra.mxu0 0.0
  %1868 = vmatpush.msra.mxu0 0.0
  %1869 = vmatpush.msra.mxu0 0.0
  %1870 = vmatpush.msra.mxu0 0.0
  %1871 = vmatpush.msra.mxu0 0.0
  %1872 = vmatpush.msra.mxu0 0.0
  %1873 = vmatpush.msra.mxu0 %v1224
  %1874 = vmatpush.msra.mxu0 %v1223
  %1875 = vmatpush.msra.mxu0 %v1222
  %1876 = vmatpush.msra.mxu0 %v1221
  %1877 = vmatpush.msra.mxu0 %v1220
  %1878 = vmatpush.msra.mxu0 %v1219
  %1879 = vmatpush.msra.mxu0 %v1218
  %1880 = vmatpush.msra.mxu0 %v1217
  %1881 = vmatmul.f32.gmra.mxu0 %v1854
  %v1882 = vpop.f32.mrf.mxu0
  %v1883 = vadd.f32 0.0, %v1882
  %1884 = vmatmul.f32.gmra.mxu0 %v1857
  %v1885 = vpop.f32.mrf.mxu0
  %v1886 = vadd.f32 0.0, %v1885
  %1887 = vmatmul.f32.gmra.mxu0 %v1860
  %v1888 = vpop.f32.mrf.mxu0
  %v1889 = vadd.f32 0.0, %v1888
  %1890 = vmatmul.f32.gmra.mxu0 %v1863
  %v1891 = vpop.f32.mrf.mxu0
  %v1892 = vadd.f32 0.0, %v1891
  %1893 = vdwg.mxu0
  %v1894 = vadd.f32 %v1837, %v1883
  %v1895 = vadd.f32 %v1840, %v1886
  %v1896 = vadd.f32 %v1843, %v1889
  %v1897 = vadd.f32 %v1846, %v1892
  %s1898 = scalar_lea.vmem %s2, 320
  %v1899 = vld [vmem:[%s1898] sm:$0xff]
  %v1900 = vld [vmem:[%s1898 + $0x8] sm:$0xff]
  %v1901 = vld [vmem:[%s1898 + $0x10] sm:$0xff]
  %v1902 = vld [vmem:[%s1898 + $0x18] sm:$0xff]
  %v1904 = vsel %vm931, %v1899, 0
  %v1907 = vsel %vm931, %v1900, 0
  %v1910 = vsel %vm931, %v1901, 0
  %v1913 = vsel %vm931, %v1902, 0
  %1915 = vmatpush.msra.mxu0 0.0
  %1916 = vmatpush.msra.mxu0 0.0
  %1917 = vmatpush.msra.mxu0 0.0
  %1918 = vmatpush.msra.mxu0 0.0
  %1919 = vmatpush.msra.mxu0 0.0
  %1920 = vmatpush.msra.mxu0 0.0
  %1921 = vmatpush.msra.mxu0 0.0
  %1922 = vmatpush.msra.mxu0 0.0
  %1923 = vmatpush.msra.mxu0 %v988
  %1924 = vmatpush.msra.mxu0 %v986
  %1925 = vmatpush.msra.mxu0 %v984
  %1926 = vmatpush.msra.mxu0 %v982
  %1927 = vmatpush.msra.mxu0 %v980
  %1928 = vmatpush.msra.mxu0 %v978
  %1929 = vmatpush.msra.mxu0 %v976
  %1930 = vmatpush.msra.mxu0 %v974
  %1931 = vmatmul.f32.gmra.mxu0 %v1904
  %v1932 = vpop.f32.mrf.mxu0
  %v1933 = vadd.f32 0.0, %v1932
  %1934 = vmatmul.f32.gmra.mxu0 %v1907
  %v1935 = vpop.f32.mrf.mxu0
  %v1936 = vadd.f32 0.0, %v1935
  %1937 = vmatmul.f32.gmra.mxu0 %v1910
  %v1938 = vpop.f32.mrf.mxu0
  %v1939 = vadd.f32 0.0, %v1938
  %1940 = vmatmul.f32.gmra.mxu0 %v1913
  %v1941 = vpop.f32.mrf.mxu0
  %v1942 = vadd.f32 0.0, %v1941
  %1943 = vdwg.mxu0
  %v1944 = vadd.f32 %v1894, %v1933
  %v1945 = vadd.f32 %v1895, %v1936
  %v1946 = vadd.f32 %v1896, %v1939
  %v1947 = vadd.f32 %v1897, %v1942
  %v1948 = vsel %vm482, %v1184, 0.0
  %1949 = vadd.xlane.f32.xlu0 %v1948
  %v1950 = vpop.xlane.xlu0 %1949
  %v1951 = vsel %vm482, %v1185, 0.0
  %1952 = vadd.xlane.f32.xlu0 %v1951
  %v1953 = vpop.xlane.xlu0 %1952
  %v1954 = vsel %vm482, %v1186, 0.0
  %1955 = vadd.xlane.f32.xlu0 %v1954
  %v1956 = vpop.xlane.xlu0 %1955
  %v1957 = vsel %vm482, %v1187, 0.0
  %1958 = vadd.xlane.f32.xlu0 %v1957
  %v1959 = vpop.xlane.xlu0 %1958
  %v1960 = vadd.f32 %v1950, 0.0
  %v1961 = vadd.f32 %v1953, 0.0
  %v1962 = vadd.f32 %v1956, 0.0
  %v1963 = vadd.f32 %v1959, 0.0
  %v1964 = vmul.f32 %v1184, %v1184
  %v1965 = vmul.f32 %v1185, %v1185
  %v1966 = vmul.f32 %v1186, %v1186
  %v1967 = vmul.f32 %v1187, %v1187
  %v1968 = vsel %vm482, %v1964, 0.0
  %1969 = vadd.xlane.f32.xlu0 %v1968
  %v1970 = vpop.xlane.xlu0 %1969
  %v1971 = vsel %vm482, %v1965, 0.0
  %1972 = vadd.xlane.f32.xlu0 %v1971
  %v1973 = vpop.xlane.xlu0 %1972
  %v1974 = vsel %vm482, %v1966, 0.0
  %1975 = vadd.xlane.f32.xlu0 %v1974
  %v1976 = vpop.xlane.xlu0 %1975
  %v1977 = vsel %vm482, %v1967, 0.0
  %1978 = vadd.xlane.f32.xlu0 %v1977
  %v1979 = vpop.xlane.xlu0 %1978
  %v1980 = vadd.f32 %v1970, 0.0
  %v1981 = vadd.f32 %v1973, 0.0
  %v1982 = vadd.f32 %v1976, 0.0
  %v1983 = vadd.f32 %v1979, 0.0
  %v1984 = vsel %vm482, %v1450, 0.0
  %1985 = vadd.xlane.f32.xlu0 %v1984
  %v1986 = vpop.xlane.xlu0 %1985
  %v1987 = vsel %vm482, %v1451, 0.0
  %1988 = vadd.xlane.f32.xlu0 %v1987
  %v1989 = vpop.xlane.xlu0 %1988
  %v1990 = vsel %vm482, %v1452, 0.0
  %1991 = vadd.xlane.f32.xlu0 %v1990
  %v1992 = vpop.xlane.xlu0 %1991
  %v1993 = vsel %vm482, %v1453, 0.0
  %1994 = vadd.xlane.f32.xlu0 %v1993
  %v1995 = vpop.xlane.xlu0 %1994
  %v1996 = vadd.f32 %v1960, %v1986
  %v1997 = vadd.f32 %v1961, %v1989
  %v1998 = vadd.f32 %v1962, %v1992
  %v1999 = vadd.f32 %v1963, %v1995
  %v2000 = vmul.f32 %v1450, %v1450
  %v2001 = vmul.f32 %v1451, %v1451
  %v2002 = vmul.f32 %v1452, %v1452
  %v2003 = vmul.f32 %v1453, %v1453
  %v2004 = vsel %vm482, %v2000, 0.0
  %2005 = vadd.xlane.f32.xlu0 %v2004
  %v2006 = vpop.xlane.xlu0 %2005
  %v2007 = vsel %vm482, %v2001, 0.0
  %2008 = vadd.xlane.f32.xlu0 %v2007
  %v2009 = vpop.xlane.xlu0 %2008
  %v2010 = vsel %vm482, %v2002, 0.0
  %2011 = vadd.xlane.f32.xlu0 %v2010
  %v2012 = vpop.xlane.xlu0 %2011
  %v2013 = vsel %vm482, %v2003, 0.0
  %2014 = vadd.xlane.f32.xlu0 %v2013
  %v2015 = vpop.xlane.xlu0 %2014
  %v2016 = vadd.f32 %v1980, %v2006
  %v2017 = vadd.f32 %v1981, %v2009
  %v2018 = vadd.f32 %v1982, %v2012
  %v2019 = vadd.f32 %v1983, %v2015
  %v2020 = vsel %vm482, %v1716, 0.0
  %2021 = vadd.xlane.f32.xlu0 %v2020
  %v2022 = vpop.xlane.xlu0 %2021
  %v2023 = vsel %vm482, %v1717, 0.0
  %2024 = vadd.xlane.f32.xlu0 %v2023
  %v2025 = vpop.xlane.xlu0 %2024
  %v2026 = vsel %vm482, %v1718, 0.0
  %2027 = vadd.xlane.f32.xlu0 %v2026
  %v2028 = vpop.xlane.xlu0 %2027
  %v2029 = vsel %vm482, %v1719, 0.0
  %2030 = vadd.xlane.f32.xlu0 %v2029
  %v2031 = vpop.xlane.xlu0 %2030
  %v2032 = vadd.f32 %v1996, %v2022
  %v2033 = vadd.f32 %v1997, %v2025
  %v2034 = vadd.f32 %v1998, %v2028
  %v2035 = vadd.f32 %v1999, %v2031
  %v2036 = vmul.f32 %v1716, %v1716
  %v2037 = vmul.f32 %v1717, %v1717
  %v2038 = vmul.f32 %v1718, %v1718
  %v2039 = vmul.f32 %v1719, %v1719
  %v2040 = vsel %vm482, %v2036, 0.0
  %2041 = vadd.xlane.f32.xlu0 %v2040
  %v2042 = vpop.xlane.xlu0 %2041
  %v2043 = vsel %vm482, %v2037, 0.0
  %2044 = vadd.xlane.f32.xlu0 %v2043
  %v2045 = vpop.xlane.xlu0 %2044
  %v2046 = vsel %vm482, %v2038, 0.0
  %2047 = vadd.xlane.f32.xlu0 %v2046
  %v2048 = vpop.xlane.xlu0 %2047
  %v2049 = vsel %vm482, %v2039, 0.0
  %2050 = vadd.xlane.f32.xlu0 %v2049
  %v2051 = vpop.xlane.xlu0 %2050
  %v2052 = vadd.f32 %v2016, %v2042
  %v2053 = vadd.f32 %v2017, %v2045
  %v2054 = vadd.f32 %v2018, %v2048
  %v2055 = vadd.f32 %v2019, %v2051
  %v2056 = vsel %vm482, %v1944, 0.0
  %2057 = vadd.xlane.f32.xlu0 %v2056
  %v2058 = vpop.xlane.xlu0 %2057
  %v2059 = vsel %vm482, %v1945, 0.0
  %2060 = vadd.xlane.f32.xlu0 %v2059
  %v2061 = vpop.xlane.xlu0 %2060
  %v2062 = vsel %vm482, %v1946, 0.0
  %2063 = vadd.xlane.f32.xlu0 %v2062
  %v2064 = vpop.xlane.xlu0 %2063
  %v2065 = vsel %vm482, %v1947, 0.0
  %2066 = vadd.xlane.f32.xlu0 %v2065
  %v2067 = vpop.xlane.xlu0 %2066
  %v2068 = vadd.f32 %v2032, %v2058
  %v2069 = vadd.f32 %v2033, %v2061
  %v2070 = vadd.f32 %v2034, %v2064
  %v2071 = vadd.f32 %v2035, %v2067
  %v2072 = vmul.f32 %v1944, %v1944
  %v2073 = vmul.f32 %v1945, %v1945
  %v2074 = vmul.f32 %v1946, %v1946
  %v2075 = vmul.f32 %v1947, %v1947
  %v2076 = vsel %vm482, %v2072, 0.0
  %2077 = vadd.xlane.f32.xlu0 %v2076
  %v2078 = vpop.xlane.xlu0 %2077
  %v2079 = vsel %vm482, %v2073, 0.0
  %2080 = vadd.xlane.f32.xlu0 %v2079
  %v2081 = vpop.xlane.xlu0 %2080
  %v2082 = vsel %vm482, %v2074, 0.0
  %2083 = vadd.xlane.f32.xlu0 %v2082
  %v2084 = vpop.xlane.xlu0 %2083
  %v2085 = vsel %vm482, %v2075, 0.0
  %2086 = vadd.xlane.f32.xlu0 %v2085
  %v2087 = vpop.xlane.xlu0 %2086
  %v2088 = vadd.f32 %v2052, %v2078
  %v2089 = vadd.f32 %v2053, %v2081
  %v2090 = vadd.f32 %v2054, %v2084
  %v2091 = vadd.f32 %v2055, %v2087
  %v2092 = vmul.f32 %v2068, 0.0025510204
  %v2093 = vmul.f32 %v2069, 0.0025510204
  %v2094 = vmul.f32 %v2070, 0.0025510204
  %v2095 = vmul.f32 %v2071, 0.0025510204
  %v2096 = vmul.f32 %v2088, 0.0025510204
  %v2097 = vmul.f32 %v2089, 0.0025510204
  %v2098 = vmul.f32 %v2090, 0.0025510204
  %v2099 = vmul.f32 %v2091, 0.0025510204
  %v2100 = vmul.f32 %v2092, %v2092
  %v2101 = vmul.f32 %v2093, %v2093
  %v2102 = vmul.f32 %v2094, %v2094
  %v2103 = vmul.f32 %v2095, %v2095
  %v2104 = vsub.f32 %v2096, %v2100
  %v2105 = vsub.f32 %v2097, %v2101
  %v2106 = vsub.f32 %v2098, %v2102
  %v2107 = vsub.f32 %v2099, %v2103
  %v2108 = vld [vmem:[%s5] sm:$0xff]
  %v2109 = vld [vmem:[%s5 + $0x8] sm:$0xff]
  %v2110 = vld [vmem:[%s5 + $0x10] sm:$0xff]
  %v2111 = vld [vmem:[%s5 + $0x18] sm:$0xff]
  %v2112 = vadd.f32 %v2104, 1e-05
  %v2113 = vadd.f32 %v2105, 1e-05
  %v2114 = vadd.f32 %v2106, 1e-05
  %v2115 = vadd.f32 %v2107, 1e-05
  %v2116 = vrsqrt.pop %v2112
  %v2117 = vmul.f32 %v2116, %v2112
  %v2118 = vmul.f32 %v2117, %v2116
  %v2119 = vmul.f32 0.5, %v2118
  %v2120 = vsub.f32 1.5, %v2119
  %v2121 = vmul.f32 %v2116, %v2120
  %vm2122 = vweird.f32 %v2112
  %vm2123 = vweird.f32 %v2116
  %vm2124 = vmor %vm2122, %vm2123
  %v2125 = vsel %vm2124, %v2116, %v2121
  %v2126 = vrsqrt.pop %v2113
  %v2127 = vmul.f32 %v2126, %v2113
  %v2128 = vmul.f32 %v2127, %v2126
  %v2129 = vmul.f32 0.5, %v2128
  %v2130 = vsub.f32 1.5, %v2129
  %v2131 = vmul.f32 %v2126, %v2130
  %vm2132 = vweird.f32 %v2113
  %vm2133 = vweird.f32 %v2126
  %vm2134 = vmor %vm2132, %vm2133
  %v2135 = vsel %vm2134, %v2126, %v2131
  %v2136 = vrsqrt.pop %v2114
  %v2137 = vmul.f32 %v2136, %v2114
  %v2138 = vmul.f32 %v2137, %v2136
  %v2139 = vmul.f32 0.5, %v2138
  %v2140 = vsub.f32 1.5, %v2139
  %v2141 = vmul.f32 %v2136, %v2140
  %vm2142 = vweird.f32 %v2114
  %vm2143 = vweird.f32 %v2136
  %vm2144 = vmor %vm2142, %vm2143
  %v2145 = vsel %vm2144, %v2136, %v2141
  %v2146 = vrsqrt.pop %v2115
  %v2147 = vmul.f32 %v2146, %v2115
  %v2148 = vmul.f32 %v2147, %v2146
  %v2149 = vmul.f32 0.5, %v2148
  %v2150 = vsub.f32 1.5, %v2149
  %v2151 = vmul.f32 %v2146, %v2150
  %vm2152 = vweird.f32 %v2115
  %vm2153 = vweird.f32 %v2146
  %vm2154 = vmor %vm2152, %vm2153
  %v2155 = vsel %vm2154, %v2146, %v2151
  %v2156 = vmul.f32 %v2108, %v2125
  %v2157 = vmul.f32 %v2109, %v2135
  %v2158 = vmul.f32 %v2110, %v2145
  %v2159 = vmul.f32 %v2111, %v2155
  %v2160 = vmul.f32 %v2092, %v2156
  %v2161 = vmul.f32 %v2093, %v2157
  %v2162 = vmul.f32 %v2094, %v2158
  %v2163 = vmul.f32 %v2095, %v2159
  %2168 = vrot.lane.b32.xlu0 %v2160, 1
  %v2169 = vpop.permute.xlu0 %2168
  %2170 = vrot.lane.b32.xlu0 %v2161, 1
  %v2171 = vpop.permute.xlu0 %2170
  %2172 = vrot.lane.b32.xlu0 %v2162, 1
  %v2173 = vpop.permute.xlu0 %2172
  %2174 = vrot.lane.b32.xlu0 %v2163, 1
  %v2175 = vpop.permute.xlu0 %2174
  %v2180 = vsub.f32 %v2108, %v2169
  %v2181 = vsub.f32 %v2109, %v2171
  %v2182 = vsub.f32 %v2110, %v2173
  %v2183 = vsub.f32 %v2111, %v2175
  %2185 = vset.pattern.permute.xlu0 0
  %2186 = vperm.xlu0 %2185, %v2156
  %v2187 = vpop.permute.xlu0 %2186
  %2190 = vset.pattern.permute.xlu0 0
  %2191 = vperm.xlu0 %2190, %v2157
  %v2192 = vpop.permute.xlu0 %2191
  %2195 = vset.pattern.permute.xlu0 0
  %2196 = vperm.xlu0 %2195, %v2158
  %v2197 = vpop.permute.xlu0 %2196
  %2200 = vset.pattern.permute.xlu0 0
  %2201 = vperm.xlu0 %2200, %v2159
  %v2202 = vpop.permute.xlu0 %2201
  %v2204 = vmul.f32 %v1184, %v2187
  %v2205 = vmul.f32 %v1185, %v2192
  %v2206 = vmul.f32 %v1186, %v2197
  %v2207 = vmul.f32 %v1187, %v2202
  %2209 = vset.pattern.permute.xlu0 1
  %2210 = vperm.xlu0 %2209, %v2180
  %v2211 = vpop.permute.xlu0 %2210
  %2214 = vset.pattern.permute.xlu0 1
  %2215 = vperm.xlu0 %2214, %v2181
  %v2216 = vpop.permute.xlu0 %2215
  %2219 = vset.pattern.permute.xlu0 1
  %2220 = vperm.xlu0 %2219, %v2182
  %v2221 = vpop.permute.xlu0 %2220
  %2224 = vset.pattern.permute.xlu0 1
  %2225 = vperm.xlu0 %2224, %v2183
  %v2226 = vpop.permute.xlu0 %2225
  %v2228 = vadd.f32 %v2204, %v2211
  %v2229 = vadd.f32 %v2205, %v2216
  %v2230 = vadd.f32 %v2206, %v2221
  %v2231 = vadd.f32 %v2207, %v2226
  %v2232 = vmax.f32 %v2228, 0.0
  %v2233 = vmax.f32 %v2229, 0.0
  %v2234 = vmax.f32 %v2230, 0.0
  %v2235 = vmax.f32 %v2231, 0.0
  %2240 = vrot.lane.b32.xlu0 %v2232, 8
  %v2241 = vpop.permute.xlu0 %2240
  %2242 = vrot.lane.b32.xlu0 %v2233, 8
  %v2243 = vpop.permute.xlu0 %2242
  %2244 = vrot.lane.b32.xlu0 %v2234, 8
  %v2245 = vpop.permute.xlu0 %2244
  %2246 = vrot.lane.b32.xlu0 %v2235, 8
  %v2247 = vpop.permute.xlu0 %2246
  %2252 = vst.msk [vmem:[#allocation3] sm:$0xff] %vm859, %v2241
  %2253 = vst.msk [vmem:[#allocation3 + $0x8] sm:$0xff] %vm859, %v2243
  %2254 = vst.msk [vmem:[#allocation3 + $0x10] sm:$0xff] %vm859, %v2245
  %2255 = vst.msk [vmem:[#allocation3 + $0x18] sm:$0xff] %vm859, %v2247
  %v2256 = vmul.f32 %v1450, %v2187
  %v2257 = vmul.f32 %v1451, %v2192
  %v2258 = vmul.f32 %v1452, %v2197
  %v2259 = vmul.f32 %v1453, %v2202
  %v2260 = vadd.f32 %v2256, %v2211
  %v2261 = vadd.f32 %v2257, %v2216
  %v2262 = vadd.f32 %v2258, %v2221
  %v2263 = vadd.f32 %v2259, %v2226
  %v2264 = vmax.f32 %v2260, 0.0
  %v2265 = vmax.f32 %v2261, 0.0
  %v2266 = vmax.f32 %v2262, 0.0
  %v2267 = vmax.f32 %v2263, 0.0
  %2272 = vrot.lane.b32.xlu0 %v2264, 8
  %v2273 = vpop.permute.xlu0 %2272
  %2274 = vrot.lane.b32.xlu0 %v2265, 8
  %v2275 = vpop.permute.xlu0 %2274
  %2276 = vrot.lane.b32.xlu0 %v2266, 8
  %v2277 = vpop.permute.xlu0 %2276
  %2278 = vrot.lane.b32.xlu0 %v2267, 8
  %v2279 = vpop.permute.xlu0 %2278
  %2284 = vst.msk [vmem:[#allocation4] sm:$0xff] %vm859, %v2273
  %2285 = vst.msk [vmem:[#allocation4 + $0x8] sm:$0xff] %vm859, %v2275
  %2286 = vst.msk [vmem:[#allocation4 + $0x10] sm:$0xff] %vm859, %v2277
  %2287 = vst.msk [vmem:[#allocation4 + $0x18] sm:$0xff] %vm859, %v2279
  %v2288 = vmul.f32 %v1716, %v2187
  %v2289 = vmul.f32 %v1717, %v2192
  %v2290 = vmul.f32 %v1718, %v2197
  %v2291 = vmul.f32 %v1719, %v2202
  %v2292 = vadd.f32 %v2288, %v2211
  %v2293 = vadd.f32 %v2289, %v2216
  %v2294 = vadd.f32 %v2290, %v2221
  %v2295 = vadd.f32 %v2291, %v2226
  %v2296 = vmax.f32 %v2292, 0.0
  %v2297 = vmax.f32 %v2293, 0.0
  %v2298 = vmax.f32 %v2294, 0.0
  %v2299 = vmax.f32 %v2295, 0.0
  %2304 = vrot.lane.b32.xlu0 %v2296, 8
  %v2305 = vpop.permute.xlu0 %2304
  %2306 = vrot.lane.b32.xlu0 %v2297, 8
  %v2307 = vpop.permute.xlu0 %2306
  %2308 = vrot.lane.b32.xlu0 %v2298, 8
  %v2309 = vpop.permute.xlu0 %2308
  %2310 = vrot.lane.b32.xlu0 %v2299, 8
  %v2311 = vpop.permute.xlu0 %2310
  %2316 = vst.msk [vmem:[#allocation5] sm:$0xff] %vm859, %v2305
  %2317 = vst.msk [vmem:[#allocation5 + $0x8] sm:$0xff] %vm859, %v2307
  %2318 = vst.msk [vmem:[#allocation5 + $0x10] sm:$0xff] %vm859, %v2309
  %2319 = vst.msk [vmem:[#allocation5 + $0x18] sm:$0xff] %vm859, %v2311
  %v2320 = vmul.f32 %v1944, %v2187
  %v2321 = vmul.f32 %v1945, %v2192
  %v2322 = vmul.f32 %v1946, %v2197
  %v2323 = vmul.f32 %v1947, %v2202
  %v2324 = vadd.f32 %v2320, %v2211
  %v2325 = vadd.f32 %v2321, %v2216
  %v2326 = vadd.f32 %v2322, %v2221
  %v2327 = vadd.f32 %v2323, %v2226
  %v2328 = vmax.f32 %v2324, 0.0
  %v2329 = vmax.f32 %v2325, 0.0
  %v2330 = vmax.f32 %v2326, 0.0
  %v2331 = vmax.f32 %v2327, 0.0
  %2336 = vrot.lane.b32.xlu0 %v2328, 8
  %v2337 = vpop.permute.xlu0 %2336
  %2338 = vrot.lane.b32.xlu0 %v2329, 8
  %v2339 = vpop.permute.xlu0 %2338
  %2340 = vrot.lane.b32.xlu0 %v2330, 8
  %v2341 = vpop.permute.xlu0 %2340
  %2342 = vrot.lane.b32.xlu0 %v2331, 8
  %v2343 = vpop.permute.xlu0 %2342
  %2348 = vst.msk [vmem:[#allocation6] sm:$0xff] %vm859, %v2337
  %2349 = vst.msk [vmem:[#allocation6 + $0x8] sm:$0xff] %vm859, %v2339
  %2350 = vst.msk [vmem:[#allocation6 + $0x10] sm:$0xff] %vm859, %v2341
  %2351 = vst.msk [vmem:[#allocation6 + $0x18] sm:$0xff] %vm859, %v2343
  %v2352 = vld [vmem:[#allocation3] sm:$0xff]
  %v2353 = vld [vmem:[#allocation3 + $0x8] sm:$0xff]
  %v2354 = vld [vmem:[#allocation3 + $0x10] sm:$0xff]
  %v2355 = vld [vmem:[#allocation3 + $0x18] sm:$0xff]
  %s2356 = scalar_lea.vmem %s3, 160
  %v2357 = vld [vmem:[%s2356] sm:$0xff]
  %v2358 = vld [vmem:[%s2356 + $0x8] sm:$0xff]
  %v2359 = vld [vmem:[%s2356 + $0x10] sm:$0xff]
  %v2360 = vld [vmem:[%s2356 + $0x18] sm:$0xff]
  %2362 = vset.pattern.permute.xlu0 0
  %2363 = vperm.xlu0 %2362, %v2357
  %v2364 = vpop.permute.xlu0 %2363
  %2367 = vset.pattern.permute.xlu0 0
  %2368 = vperm.xlu0 %2367, %v2358
  %v2369 = vpop.permute.xlu0 %2368
  %2372 = vset.pattern.permute.xlu0 0
  %2373 = vperm.xlu0 %2372, %v2359
  %v2374 = vpop.permute.xlu0 %2373
  %2377 = vset.pattern.permute.xlu0 0
  %2378 = vperm.xlu0 %2377, %v2360
  %v2379 = vpop.permute.xlu0 %2378
  %v2381 = vmul.f32 %v2364, %v2352
  %v2382 = vmul.f32 %v2369, %v2353
  %v2383 = vmul.f32 %v2374, %v2354
  %v2384 = vmul.f32 %v2379, %v2355
  %v2385 = vadd.f32 %v2381, 0.0
  %v2386 = vadd.f32 %v2382, 0.0
  %v2387 = vadd.f32 %v2383, 0.0
  %v2388 = vadd.f32 %v2384, 0.0
  %v2389 = vld [vmem:[#allocation4] sm:$0xff]
  %v2390 = vld [vmem:[#allocation4 + $0x8] sm:$0xff]
  %v2391 = vld [vmem:[#allocation4 + $0x10] sm:$0xff]
  %v2392 = vld [vmem:[#allocation4 + $0x18] sm:$0xff]
  %v2393 = vld [vmem:[%s6 + $0x3] sm:$0x1]
  %vm2394 = vcmp.gt.f32.partialorder %v2393, 0.5
  %v2395 = vsel %vm2394, 1, 0
  %v2396 = vperm.slane %v2395, 0
  %vm2397 = vcmp.eq.s32.totalorder %v2396, 1
  %2402 = vrot.lane.b32.xlu0 %v2389, 121
  %v2403 = vpop.permute.xlu0 %2402
  %2404 = vrot.lane.b32.xlu0 %v2390, 121
  %v2405 = vpop.permute.xlu0 %2404
  %2406 = vrot.lane.b32.xlu0 %v2391, 121
  %v2407 = vpop.permute.xlu0 %2406
  %2408 = vrot.lane.b32.xlu0 %v2392, 121
  %v2409 = vpop.permute.xlu0 %2408
  %v2414 = vsel %vm2397, %v2403, 0.0
  %v2415 = vsel %vm2397, %v2405, 0.0
  %v2416 = vsel %vm2397, %v2407, 0.0
  %v2417 = vsel %vm2397, %v2409, 0.0
  %s2418 = scalar_lea.vmem %s3, 224
  %v2419 = vld [vmem:[%s2418] sm:$0xff]
  %v2420 = vld [vmem:[%s2418 + $0x8] sm:$0xff]
  %v2421 = vld [vmem:[%s2418 + $0x10] sm:$0xff]
  %v2422 = vld [vmem:[%s2418 + $0x18] sm:$0xff]
  %2424 = vset.pattern.permute.xlu0 0
  %2425 = vperm.xlu0 %2424, %v2419
  %v2426 = vpop.permute.xlu0 %2425
  %2429 = vset.pattern.permute.xlu0 0
  %2430 = vperm.xlu0 %2429, %v2420
  %v2431 = vpop.permute.xlu0 %2430
  %2434 = vset.pattern.permute.xlu0 0
  %2435 = vperm.xlu0 %2434, %v2421
  %v2436 = vpop.permute.xlu0 %2435
  %2439 = vset.pattern.permute.xlu0 0
  %2440 = vperm.xlu0 %2439, %v2422
  %v2441 = vpop.permute.xlu0 %2440
  %v2443 = vmul.f32 %v2426, %v2414
  %v2444 = vmul.f32 %v2431, %v2415
  %v2445 = vmul.f32 %v2436, %v2416
  %v2446 = vmul.f32 %v2441, %v2417
  %2451 = vrot.lane.b32.xlu0 %v2443, 8
  %v2452 = vpop.permute.xlu0 %2451
  %2453 = vrot.lane.b32.xlu0 %v2444, 8
  %v2454 = vpop.permute.xlu0 %2453
  %2455 = vrot.lane.b32.xlu0 %v2445, 8
  %v2456 = vpop.permute.xlu0 %2455
  %2457 = vrot.lane.b32.xlu0 %v2446, 8
  %v2458 = vpop.permute.xlu0 %2457
  %v2463 = vadd.f32 %v2385, %v2452
  %v2464 = vadd.f32 %v2386, %v2454
  %v2465 = vadd.f32 %v2387, %v2456
  %v2466 = vadd.f32 %v2388, %v2458
  %v2467 = vld [vmem:[#allocation5] sm:$0xff]
  %v2468 = vld [vmem:[#allocation5 + $0x8] sm:$0xff]
  %v2469 = vld [vmem:[#allocation5 + $0x10] sm:$0xff]
  %v2470 = vld [vmem:[#allocation5 + $0x18] sm:$0xff]
  %v2471 = vld [vmem:[%s6 + $0x1] sm:$0x1]
  %vm2472 = vcmp.gt.f32.partialorder %v2471, 0.5
  %v2473 = vsel %vm2472, 1, 0
  %v2474 = vperm.slane %v2473, 0
  %vm2475 = vcmp.eq.s32.totalorder %v2474, 1
  %2480 = vrot.lane.b32.xlu0 %v2467, 127
  %v2481 = vpop.permute.xlu0 %2480
  %2482 = vrot.lane.b32.xlu0 %v2468, 127
  %v2483 = vpop.permute.xlu0 %2482
  %2484 = vrot.lane.b32.xlu0 %v2469, 127
  %v2485 = vpop.permute.xlu0 %2484
  %2486 = vrot.lane.b32.xlu0 %v2470, 127
  %v2487 = vpop.permute.xlu0 %2486
  %v2492 = vsel %vm2475, %v2481, 0.0
  %v2493 = vsel %vm2475, %v2483, 0.0
  %v2494 = vsel %vm2475, %v2485, 0.0
  %v2495 = vsel %vm2475, %v2487, 0.0
  %s2496 = scalar_lea.vmem %s3, 416
  %v2497 = vld [vmem:[%s2496] sm:$0xff]
  %v2498 = vld [vmem:[%s2496 + $0x8] sm:$0xff]
  %v2499 = vld [vmem:[%s2496 + $0x10] sm:$0xff]
  %v2500 = vld [vmem:[%s2496 + $0x18] sm:$0xff]
  %2502 = vset.pattern.permute.xlu0 0
  %2503 = vperm.xlu0 %2502, %v2497
  %v2504 = vpop.permute.xlu0 %2503
  %2507 = vset.pattern.permute.xlu0 0
  %2508 = vperm.xlu0 %2507, %v2498
  %v2509 = vpop.permute.xlu0 %2508
  %2512 = vset.pattern.permute.xlu0 0
  %2513 = vperm.xlu0 %2512, %v2499
  %v2514 = vpop.permute.xlu0 %2513
  %2517 = vset.pattern.permute.xlu0 0
  %2518 = vperm.xlu0 %2517, %v2500
  %v2519 = vpop.permute.xlu0 %2518
  %v2521 = vmul.f32 %v2504, %v2492
  %v2522 = vmul.f32 %v2509, %v2493
  %v2523 = vmul.f32 %v2514, %v2494
  %v2524 = vmul.f32 %v2519, %v2495
  %2529 = vrot.lane.b32.xlu0 %v2521, 8
  %v2530 = vpop.permute.xlu0 %2529
  %2531 = vrot.lane.b32.xlu0 %v2522, 8
  %v2532 = vpop.permute.xlu0 %2531
  %2533 = vrot.lane.b32.xlu0 %v2523, 8
  %v2534 = vpop.permute.xlu0 %2533
  %2535 = vrot.lane.b32.xlu0 %v2524, 8
  %v2536 = vpop.permute.xlu0 %2535
  %v2541 = vadd.f32 %v2463, %v2530
  %v2542 = vadd.f32 %v2464, %v2532
  %v2543 = vadd.f32 %v2465, %v2534
  %v2544 = vadd.f32 %v2466, %v2536
  %v2545 = vld [vmem:[#allocation6] sm:$0xff]
  %v2546 = vld [vmem:[#allocation6 + $0x8] sm:$0xff]
  %v2547 = vld [vmem:[#allocation6 + $0x10] sm:$0xff]
  %v2548 = vld [vmem:[#allocation6 + $0x18] sm:$0xff]
  %v2549 = vld [vmem:[%s6] sm:$0x1]
  %vm2550 = vcmp.gt.f32.partialorder %v2549, 0.5
  %v2551 = vsel %vm2550, 1, 0
  %v2552 = vperm.slane %v2551, 0
  %vm2553 = vcmp.eq.s32.totalorder %v2552, 1
  %v2554 = vsel %vm2553, %v2545, 0.0
  %v2555 = vsel %vm2553, %v2546, 0.0
  %v2556 = vsel %vm2553, %v2547, 0.0
  %v2557 = vsel %vm2553, %v2548, 0.0
  %s2558 = scalar_lea.vmem %s3, 480
  %v2559 = vld [vmem:[%s2558] sm:$0xff]
  %v2560 = vld [vmem:[%s2558 + $0x8] sm:$0xff]
  %v2561 = vld [vmem:[%s2558 + $0x10] sm:$0xff]
  %v2562 = vld [vmem:[%s2558 + $0x18] sm:$0xff]
  %2564 = vset.pattern.permute.xlu0 0
  %2565 = vperm.xlu0 %2564, %v2559
  %v2566 = vpop.permute.xlu0 %2565
  %2569 = vset.pattern.permute.xlu0 0
  %2570 = vperm.xlu0 %2569, %v2560
  %v2571 = vpop.permute.xlu0 %2570
  %2574 = vset.pattern.permute.xlu0 0
  %2575 = vperm.xlu0 %2574, %v2561
  %v2576 = vpop.permute.xlu0 %2575
  %2579 = vset.pattern.permute.xlu0 0
  %2580 = vperm.xlu0 %2579, %v2562
  %v2581 = vpop.permute.xlu0 %2580
  %v2583 = vmul.f32 %v2566, %v2554
  %v2584 = vmul.f32 %v2571, %v2555
  %v2585 = vmul.f32 %v2576, %v2556
  %v2586 = vmul.f32 %v2581, %v2557
  %2591 = vrot.lane.b32.xlu0 %v2583, 8
  %v2592 = vpop.permute.xlu0 %2591
  %2593 = vrot.lane.b32.xlu0 %v2584, 8
  %v2594 = vpop.permute.xlu0 %2593
  %2595 = vrot.lane.b32.xlu0 %v2585, 8
  %v2596 = vpop.permute.xlu0 %2595
  %2597 = vrot.lane.b32.xlu0 %v2586, 8
  %v2598 = vpop.permute.xlu0 %2597
  %v2603 = vadd.f32 %v2541, %v2592
  %v2604 = vadd.f32 %v2542, %v2594
  %v2605 = vadd.f32 %v2543, %v2596
  %v2606 = vadd.f32 %v2544, %v2598
  %v2607 = vsel %vm859, %v2603, 0.0
  %v2608 = vsel %vm859, %v2604, 0.0
  %v2609 = vadd.f32 %v2607, %v2608
  %v2610 = vsel %vm859, %v2605, 0.0
  %v2611 = vadd.f32 %v2609, %v2610
  %v2612 = vsel %vm859, %v2606, 0.0
  %v2613 = vadd.f32 %v2611, %v2612
  %v2614 = vrot.slane %v2613, 4
  %v2615 = vadd.f32 %v2613, %v2614
  %v2616 = vrot.slane %v2615, 2
  %v2617 = vadd.f32 %v2615, %v2616
  %v2618 = vrot.slane %v2617, 1
  %v2619 = vadd.f32 %v2617, %v2618
  %v2620 = vtanh.pop %v2619
  %2622 = vrot.lane.b32.xlu0 %v2620, 120
  %v2623 = vpop.permute.xlu0 %2622
  %vm2625 = vcmask 794624
  %2626 = vst.msk [vmem:[%s7] sm:$0x1] %vm2625, %v2623
  %v2627 = vld [vmem:[#allocation4] sm:$0xff]
  %v2628 = vld [vmem:[#allocation4 + $0x8] sm:$0xff]
  %v2629 = vld [vmem:[#allocation4 + $0x10] sm:$0xff]
  %v2630 = vld [vmem:[#allocation4 + $0x18] sm:$0xff]
  %s2631 = scalar_lea.vmem %s3, 128
  %v2632 = vld [vmem:[%s2631] sm:$0xff]
  %v2633 = vld [vmem:[%s2631 + $0x8] sm:$0xff]
  %v2634 = vld [vmem:[%s2631 + $0x10] sm:$0xff]
  %v2635 = vld [vmem:[%s2631 + $0x18] sm:$0xff]
  %2637 = vset.pattern.permute.xlu0 0
  %2638 = vperm.xlu0 %2637, %v2632
  %v2639 = vpop.permute.xlu0 %2638
  %2642 = vset.pattern.permute.xlu0 0
  %2643 = vperm.xlu0 %2642, %v2633
  %v2644 = vpop.permute.xlu0 %2643
  %2647 = vset.pattern.permute.xlu0 0
  %2648 = vperm.xlu0 %2647, %v2634
  %v2649 = vpop.permute.xlu0 %2648
  %2652 = vset.pattern.permute.xlu0 0
  %2653 = vperm.xlu0 %2652, %v2635
  %v2654 = vpop.permute.xlu0 %2653
  %v2656 = vmul.f32 %v2639, %v2627
  %v2657 = vmul.f32 %v2644, %v2628
  %v2658 = vmul.f32 %v2649, %v2629
  %v2659 = vmul.f32 %v2654, %v2630
  %v2660 = vadd.f32 %v2656, 0.0
  %v2661 = vadd.f32 %v2657, 0.0
  %v2662 = vadd.f32 %v2658, 0.0
  %v2663 = vadd.f32 %v2659, 0.0
  %s2664 = scalar_lea.vmem %s3, 192
  %v2665 = vld [vmem:[%s2664] sm:$0xff]
  %v2666 = vld [vmem:[%s2664 + $0x8] sm:$0xff]
  %v2667 = vld [vmem:[%s2664 + $0x10] sm:$0xff]
  %v2668 = vld [vmem:[%s2664 + $0x18] sm:$0xff]
  %2670 = vset.pattern.permute.xlu0 0
  %2671 = vperm.xlu0 %2670, %v2665
  %v2672 = vpop.permute.xlu0 %2671
  %2675 = vset.pattern.permute.xlu0 0
  %2676 = vperm.xlu0 %2675, %v2666
  %v2677 = vpop.permute.xlu0 %2676
  %2680 = vset.pattern.permute.xlu0 0
  %2681 = vperm.xlu0 %2680, %v2667
  %v2682 = vpop.permute.xlu0 %2681
  %2685 = vset.pattern.permute.xlu0 0
  %2686 = vperm.xlu0 %2685, %v2668
  %v2687 = vpop.permute.xlu0 %2686
  %v2689 = vmul.f32 %v2672, %v2352
  %v2690 = vmul.f32 %v2677, %v2353
  %v2691 = vmul.f32 %v2682, %v2354
  %v2692 = vmul.f32 %v2687, %v2355
  %v2693 = vadd.f32 %v2660, %v2689
  %v2694 = vadd.f32 %v2661, %v2690
  %v2695 = vadd.f32 %v2662, %v2691
  %v2696 = vadd.f32 %v2663, %v2692
  %v2697 = vld [vmem:[#allocation6] sm:$0xff]
  %v2698 = vld [vmem:[#allocation6 + $0x8] sm:$0xff]
  %v2699 = vld [vmem:[#allocation6 + $0x10] sm:$0xff]
  %v2700 = vld [vmem:[#allocation6 + $0x18] sm:$0xff]
  %v2701 = vld [vmem:[%s6 + $0x1] sm:$0x1]
  %vm2702 = vcmp.gt.f32.partialorder %v2701, 0.5
  %v2703 = vsel %vm2702, 1, 0
  %v2704 = vperm.slane %v2703, 0
  %vm2705 = vcmp.eq.s32.totalorder %v2704, 1
  %2710 = vrot.lane.b32.xlu0 %v2697, 127
  %v2711 = vpop.permute.xlu0 %2710
  %2712 = vrot.lane.b32.xlu0 %v2698, 127
  %v2713 = vpop.permute.xlu0 %2712
  %2714 = vrot.lane.b32.xlu0 %v2699, 127
  %v2715 = vpop.permute.xlu0 %2714
  %2716 = vrot.lane.b32.xlu0 %v2700, 127
  %v2717 = vpop.permute.xlu0 %2716
  %v2722 = vsel %vm2705, %v2711, 0.0
  %v2723 = vsel %vm2705, %v2713, 0.0
  %v2724 = vsel %vm2705, %v2715, 0.0
  %v2725 = vsel %vm2705, %v2717, 0.0
  %s2726 = scalar_lea.vmem %s3, 384
  %v2727 = vld [vmem:[%s2726] sm:$0xff]
  %v2728 = vld [vmem:[%s2726 + $0x8] sm:$0xff]
  %v2729 = vld [vmem:[%s2726 + $0x10] sm:$0xff]
  %v2730 = vld [vmem:[%s2726 + $0x18] sm:$0xff]
  %2732 = vset.pattern.permute.xlu0 0
  %2733 = vperm.xlu0 %2732, %v2727
  %v2734 = vpop.permute.xlu0 %2733
  %2737 = vset.pattern.permute.xlu0 0
  %2738 = vperm.xlu0 %2737, %v2728
  %v2739 = vpop.permute.xlu0 %2738
  %2742 = vset.pattern.permute.xlu0 0
  %2743 = vperm.xlu0 %2742, %v2729
  %v2744 = vpop.permute.xlu0 %2743
  %2747 = vset.pattern.permute.xlu0 0
  %2748 = vperm.xlu0 %2747, %v2730
  %v2749 = vpop.permute.xlu0 %2748
  %v2751 = vmul.f32 %v2734, %v2722
  %v2752 = vmul.f32 %v2739, %v2723
  %v2753 = vmul.f32 %v2744, %v2724
  %v2754 = vmul.f32 %v2749, %v2725
  %2759 = vrot.lane.b32.xlu0 %v2751, 8
  %v2760 = vpop.permute.xlu0 %2759
  %2761 = vrot.lane.b32.xlu0 %v2752, 8
  %v2762 = vpop.permute.xlu0 %2761
  %2763 = vrot.lane.b32.xlu0 %v2753, 8
  %v2764 = vpop.permute.xlu0 %2763
  %2765 = vrot.lane.b32.xlu0 %v2754, 8
  %v2766 = vpop.permute.xlu0 %2765
  %v2771 = vadd.f32 %v2693, %v2760
  %v2772 = vadd.f32 %v2694, %v2762
  %v2773 = vadd.f32 %v2695, %v2764
  %v2774 = vadd.f32 %v2696, %v2766
  %s2775 = scalar_lea.vmem %s3, 448
  %v2776 = vld [vmem:[%s2775] sm:$0xff]
  %v2777 = vld [vmem:[%s2775 + $0x8] sm:$0xff]
  %v2778 = vld [vmem:[%s2775 + $0x10] sm:$0xff]
  %v2779 = vld [vmem:[%s2775 + $0x18] sm:$0xff]
  %2781 = vset.pattern.permute.xlu0 0
  %2782 = vperm.xlu0 %2781, %v2776
  %v2783 = vpop.permute.xlu0 %2782
  %2786 = vset.pattern.permute.xlu0 0
  %2787 = vperm.xlu0 %2786, %v2777
  %v2788 = vpop.permute.xlu0 %2787
  %2791 = vset.pattern.permute.xlu0 0
  %2792 = vperm.xlu0 %2791, %v2778
  %v2793 = vpop.permute.xlu0 %2792
  %2796 = vset.pattern.permute.xlu0 0
  %2797 = vperm.xlu0 %2796, %v2779
  %v2798 = vpop.permute.xlu0 %2797
  %v2800 = vmul.f32 %v2783, %v2492
  %v2801 = vmul.f32 %v2788, %v2493
  %v2802 = vmul.f32 %v2793, %v2494
  %v2803 = vmul.f32 %v2798, %v2495
  %2808 = vrot.lane.b32.xlu0 %v2800, 8
  %v2809 = vpop.permute.xlu0 %2808
  %2810 = vrot.lane.b32.xlu0 %v2801, 8
  %v2811 = vpop.permute.xlu0 %2810
  %2812 = vrot.lane.b32.xlu0 %v2802, 8
  %v2813 = vpop.permute.xlu0 %2812
  %2814 = vrot.lane.b32.xlu0 %v2803, 8
  %v2815 = vpop.permute.xlu0 %2814
  %v2820 = vadd.f32 %v2771, %v2809
  %v2821 = vadd.f32 %v2772, %v2811
  %v2822 = vadd.f32 %v2773, %v2813
  %v2823 = vadd.f32 %v2774, %v2815
  %v2824 = vsel %vm859, %v2820, 0.0
  %v2825 = vsel %vm859, %v2821, 0.0
  %v2826 = vadd.f32 %v2824, %v2825
  %v2827 = vsel %vm859, %v2822, 0.0
  %v2828 = vadd.f32 %v2826, %v2827
  %v2829 = vsel %vm859, %v2823, 0.0
  %v2830 = vadd.f32 %v2828, %v2829
  %v2831 = vrot.slane %v2830, 4
  %v2832 = vadd.f32 %v2830, %v2831
  %v2833 = vrot.slane %v2832, 2
  %v2834 = vadd.f32 %v2832, %v2833
  %v2835 = vrot.slane %v2834, 1
  %v2836 = vadd.f32 %v2834, %v2835
  %v2837 = vtanh.pop %v2836
  %2839 = vrot.lane.b32.xlu0 %v2837, 120
  %v2840 = vpop.permute.xlu0 %2839
  %2842 = vst.msk [vmem:[%s7 + $0x1] sm:$0x1] %vm2625, %v2840
  %v2843 = vld [vmem:[%s2356] sm:$0xff]
  %v2844 = vld [vmem:[%s2356 + $0x8] sm:$0xff]
  %v2845 = vld [vmem:[%s2356 + $0x10] sm:$0xff]
  %v2846 = vld [vmem:[%s2356 + $0x18] sm:$0xff]
  %2848 = vset.pattern.permute.xlu0 0
  %2849 = vperm.xlu0 %2848, %v2843
  %v2850 = vpop.permute.xlu0 %2849
  %2853 = vset.pattern.permute.xlu0 0
  %2854 = vperm.xlu0 %2853, %v2844
  %v2855 = vpop.permute.xlu0 %2854
  %2858 = vset.pattern.permute.xlu0 0
  %2859 = vperm.xlu0 %2858, %v2845
  %v2860 = vpop.permute.xlu0 %2859
  %2863 = vset.pattern.permute.xlu0 0
  %2864 = vperm.xlu0 %2863, %v2846
  %v2865 = vpop.permute.xlu0 %2864
  %v2867 = vmul.f32 %v2850, %v2627
  %v2868 = vmul.f32 %v2855, %v2628
  %v2869 = vmul.f32 %v2860, %v2629
  %v2870 = vmul.f32 %v2865, %v2630
  %v2871 = vadd.f32 %v2867, 0.0
  %v2872 = vadd.f32 %v2868, 0.0
  %v2873 = vadd.f32 %v2869, 0.0
  %v2874 = vadd.f32 %v2870, 0.0
  %v2875 = vld [vmem:[%s2418] sm:$0xff]
  %v2876 = vld [vmem:[%s2418 + $0x8] sm:$0xff]
  %v2877 = vld [vmem:[%s2418 + $0x10] sm:$0xff]
  %v2878 = vld [vmem:[%s2418 + $0x18] sm:$0xff]
  %2880 = vset.pattern.permute.xlu0 0
  %2881 = vperm.xlu0 %2880, %v2875
  %v2882 = vpop.permute.xlu0 %2881
  %2885 = vset.pattern.permute.xlu0 0
  %2886 = vperm.xlu0 %2885, %v2876
  %v2887 = vpop.permute.xlu0 %2886
  %2890 = vset.pattern.permute.xlu0 0
  %2891 = vperm.xlu0 %2890, %v2877
  %v2892 = vpop.permute.xlu0 %2891
  %2895 = vset.pattern.permute.xlu0 0
  %2896 = vperm.xlu0 %2895, %v2878
  %v2897 = vpop.permute.xlu0 %2896
  %v2899 = vmul.f32 %v2882, %v2352
  %v2900 = vmul.f32 %v2887, %v2353
  %v2901 = vmul.f32 %v2892, %v2354
  %v2902 = vmul.f32 %v2897, %v2355
  %v2903 = vadd.f32 %v2871, %v2899
  %v2904 = vadd.f32 %v2872, %v2900
  %v2905 = vadd.f32 %v2873, %v2901
  %v2906 = vadd.f32 %v2874, %v2902
  %v2907 = vld [vmem:[%s2496] sm:$0xff]
  %v2908 = vld [vmem:[%s2496 + $0x8] sm:$0xff]
  %v2909 = vld [vmem:[%s2496 + $0x10] sm:$0xff]
  %v2910 = vld [vmem:[%s2496 + $0x18] sm:$0xff]
  %2912 = vset.pattern.permute.xlu0 0
  %2913 = vperm.xlu0 %2912, %v2907
  %v2914 = vpop.permute.xlu0 %2913
  %2917 = vset.pattern.permute.xlu0 0
  %2918 = vperm.xlu0 %2917, %v2908
  %v2919 = vpop.permute.xlu0 %2918
  %2922 = vset.pattern.permute.xlu0 0
  %2923 = vperm.xlu0 %2922, %v2909
  %v2924 = vpop.permute.xlu0 %2923
  %2927 = vset.pattern.permute.xlu0 0
  %2928 = vperm.xlu0 %2927, %v2910
  %v2929 = vpop.permute.xlu0 %2928
  %v2931 = vmul.f32 %v2914, %v2722
  %v2932 = vmul.f32 %v2919, %v2723
  %v2933 = vmul.f32 %v2924, %v2724
  %v2934 = vmul.f32 %v2929, %v2725
  %2939 = vrot.lane.b32.xlu0 %v2931, 8
  %v2940 = vpop.permute.xlu0 %2939
  %2941 = vrot.lane.b32.xlu0 %v2932, 8
  %v2942 = vpop.permute.xlu0 %2941
  %2943 = vrot.lane.b32.xlu0 %v2933, 8
  %v2944 = vpop.permute.xlu0 %2943
  %2945 = vrot.lane.b32.xlu0 %v2934, 8
  %v2946 = vpop.permute.xlu0 %2945
  %v2951 = vadd.f32 %v2903, %v2940
  %v2952 = vadd.f32 %v2904, %v2942
  %v2953 = vadd.f32 %v2905, %v2944
  %v2954 = vadd.f32 %v2906, %v2946
  %v2955 = vld [vmem:[%s2558] sm:$0xff]
  %v2956 = vld [vmem:[%s2558 + $0x8] sm:$0xff]
  %v2957 = vld [vmem:[%s2558 + $0x10] sm:$0xff]
  %v2958 = vld [vmem:[%s2558 + $0x18] sm:$0xff]
  %2960 = vset.pattern.permute.xlu0 0
  %2961 = vperm.xlu0 %2960, %v2955
  %v2962 = vpop.permute.xlu0 %2961
  %2965 = vset.pattern.permute.xlu0 0
  %2966 = vperm.xlu0 %2965, %v2956
  %v2967 = vpop.permute.xlu0 %2966
  %2970 = vset.pattern.permute.xlu0 0
  %2971 = vperm.xlu0 %2970, %v2957
  %v2972 = vpop.permute.xlu0 %2971
  %2975 = vset.pattern.permute.xlu0 0
  %2976 = vperm.xlu0 %2975, %v2958
  %v2977 = vpop.permute.xlu0 %2976
  %v2979 = vmul.f32 %v2962, %v2492
  %v2980 = vmul.f32 %v2967, %v2493
  %v2981 = vmul.f32 %v2972, %v2494
  %v2982 = vmul.f32 %v2977, %v2495
  %2987 = vrot.lane.b32.xlu0 %v2979, 8
  %v2988 = vpop.permute.xlu0 %2987
  %2989 = vrot.lane.b32.xlu0 %v2980, 8
  %v2990 = vpop.permute.xlu0 %2989
  %2991 = vrot.lane.b32.xlu0 %v2981, 8
  %v2992 = vpop.permute.xlu0 %2991
  %2993 = vrot.lane.b32.xlu0 %v2982, 8
  %v2994 = vpop.permute.xlu0 %2993
  %v2999 = vadd.f32 %v2951, %v2988
  %v3000 = vadd.f32 %v2952, %v2990
  %v3001 = vadd.f32 %v2953, %v2992
  %v3002 = vadd.f32 %v2954, %v2994
  %v3003 = vsel %vm859, %v2999, 0.0
  %v3004 = vsel %vm859, %v3000, 0.0
  %v3005 = vadd.f32 %v3003, %v3004
  %v3006 = vsel %vm859, %v3001, 0.0
  %v3007 = vadd.f32 %v3005, %v3006
  %v3008 = vsel %vm859, %v3002, 0.0
  %v3009 = vadd.f32 %v3007, %v3008
  %v3010 = vrot.slane %v3009, 4
  %v3011 = vadd.f32 %v3009, %v3010
  %v3012 = vrot.slane %v3011, 2
  %v3013 = vadd.f32 %v3011, %v3012
  %v3014 = vrot.slane %v3013, 1
  %v3015 = vadd.f32 %v3013, %v3014
  %v3016 = vtanh.pop %v3015
  %3018 = vrot.lane.b32.xlu0 %v3016, 120
  %v3019 = vpop.permute.xlu0 %3018
  %3021 = vst.msk [vmem:[%s7 + $0x2] sm:$0x1] %vm2625, %v3019
  %v3022 = vld [vmem:[#allocation3] sm:$0xff]
  %v3023 = vld [vmem:[#allocation3 + $0x8] sm:$0xff]
  %v3024 = vld [vmem:[#allocation3 + $0x10] sm:$0xff]
  %v3025 = vld [vmem:[#allocation3 + $0x18] sm:$0xff]
  %v3026 = vld [vmem:[%s6 + $0x5] sm:$0x1]
  %vm3027 = vcmp.gt.f32.partialorder %v3026, 0.5
  %v3028 = vsel %vm3027, 1, 0
  %v3029 = vperm.slane %v3028, 0
  %vm3030 = vcmp.eq.s32.totalorder %v3029, 1
  %3035 = vrot.lane.b32.xlu0 %v3022, 119
  %v3036 = vpop.permute.xlu0 %3035
  %3037 = vrot.lane.b32.xlu0 %v3023, 119
  %v3038 = vpop.permute.xlu0 %3037
  %3039 = vrot.lane.b32.xlu0 %v3024, 119
  %v3040 = vpop.permute.xlu0 %3039
  %3041 = vrot.lane.b32.xlu0 %v3025, 119
  %v3042 = vpop.permute.xlu0 %3041
  %v3047 = vsel %vm3030, %v3036, 0.0
  %v3048 = vsel %vm3030, %v3038, 0.0
  %v3049 = vsel %vm3030, %v3040, 0.0
  %v3050 = vsel %vm3030, %v3042, 0.0
  %v3051 = vld [vmem:[%s2631] sm:$0xff]
  %v3052 = vld [vmem:[%s2631 + $0x8] sm:$0xff]
  %v3053 = vld [vmem:[%s2631 + $0x10] sm:$0xff]
  %v3054 = vld [vmem:[%s2631 + $0x18] sm:$0xff]
  %3056 = vset.pattern.permute.xlu0 0
  %3057 = vperm.xlu0 %3056, %v3051
  %v3058 = vpop.permute.xlu0 %3057
  %3061 = vset.pattern.permute.xlu0 0
  %3062 = vperm.xlu0 %3061, %v3052
  %v3063 = vpop.permute.xlu0 %3062
  %3066 = vset.pattern.permute.xlu0 0
  %3067 = vperm.xlu0 %3066, %v3053
  %v3068 = vpop.permute.xlu0 %3067
  %3071 = vset.pattern.permute.xlu0 0
  %3072 = vperm.xlu0 %3071, %v3054
  %v3073 = vpop.permute.xlu0 %3072
  %v3075 = vmul.f32 %v3058, %v3047
  %v3076 = vmul.f32 %v3063, %v3048
  %v3077 = vmul.f32 %v3068, %v3049
  %v3078 = vmul.f32 %v3073, %v3050
  %v3079 = vadd.f32 %v3075, 0.0
  %v3080 = vadd.f32 %v3076, 0.0
  %v3081 = vadd.f32 %v3077, 0.0
  %v3082 = vadd.f32 %v3078, 0.0
  %v3083 = vld [vmem:[%s2664] sm:$0xff]
  %v3084 = vld [vmem:[%s2664 + $0x8] sm:$0xff]
  %v3085 = vld [vmem:[%s2664 + $0x10] sm:$0xff]
  %v3086 = vld [vmem:[%s2664 + $0x18] sm:$0xff]
  %3088 = vset.pattern.permute.xlu0 0
  %3089 = vperm.xlu0 %3088, %v3083
  %v3090 = vpop.permute.xlu0 %3089
  %3093 = vset.pattern.permute.xlu0 0
  %3094 = vperm.xlu0 %3093, %v3084
  %v3095 = vpop.permute.xlu0 %3094
  %3098 = vset.pattern.permute.xlu0 0
  %3099 = vperm.xlu0 %3098, %v3085
  %v3100 = vpop.permute.xlu0 %3099
  %3103 = vset.pattern.permute.xlu0 0
  %3104 = vperm.xlu0 %3103, %v3086
  %v3105 = vpop.permute.xlu0 %3104
  %v3107 = vmul.f32 %v3090, %v2627
  %v3108 = vmul.f32 %v3095, %v2628
  %v3109 = vmul.f32 %v3100, %v2629
  %v3110 = vmul.f32 %v3105, %v2630
  %3115 = vrot.lane.b32.xlu0 %v3107, 120
  %v3116 = vpop.permute.xlu0 %3115
  %3117 = vrot.lane.b32.xlu0 %v3108, 120
  %v3118 = vpop.permute.xlu0 %3117
  %3119 = vrot.lane.b32.xlu0 %v3109, 120
  %v3120 = vpop.permute.xlu0 %3119
  %3121 = vrot.lane.b32.xlu0 %v3110, 120
  %v3122 = vpop.permute.xlu0 %3121
  %v3127 = vadd.f32 %v3079, %v3116
  %v3128 = vadd.f32 %v3080, %v3118
  %v3129 = vadd.f32 %v3081, %v3120
  %v3130 = vadd.f32 %v3082, %v3122
  %v3131 = vld [vmem:[#allocation5] sm:$0xff]
  %v3132 = vld [vmem:[#allocation5 + $0x8] sm:$0xff]
  %v3133 = vld [vmem:[#allocation5 + $0x10] sm:$0xff]
  %v3134 = vld [vmem:[#allocation5 + $0x18] sm:$0xff]
  %v3135 = vld [vmem:[%s6 + $0x2] sm:$0x1]
  %vm3136 = vcmp.gt.f32.partialorder %v3135, 0.5
  %v3137 = vsel %vm3136, 1, 0
  %v3138 = vperm.slane %v3137, 0
  %vm3139 = vcmp.eq.s32.totalorder %v3138, 1
  %3144 = vrot.lane.b32.xlu0 %v3131, 126
  %v3145 = vpop.permute.xlu0 %3144
  %3146 = vrot.lane.b32.xlu0 %v3132, 126
  %v3147 = vpop.permute.xlu0 %3146
  %3148 = vrot.lane.b32.xlu0 %v3133, 126
  %v3149 = vpop.permute.xlu0 %3148
  %3150 = vrot.lane.b32.xlu0 %v3134, 126
  %v3151 = vpop.permute.xlu0 %3150
  %v3156 = vsel %vm3139, %v3145, 0.0
  %v3157 = vsel %vm3139, %v3147, 0.0
  %v3158 = vsel %vm3139, %v3149, 0.0
  %v3159 = vsel %vm3139, %v3151, 0.0
  %v3160 = vld [vmem:[%s2726] sm:$0xff]
  %v3161 = vld [vmem:[%s2726 + $0x8] sm:$0xff]
  %v3162 = vld [vmem:[%s2726 + $0x10] sm:$0xff]
  %v3163 = vld [vmem:[%s2726 + $0x18] sm:$0xff]
  %3165 = vset.pattern.permute.xlu0 0
  %3166 = vperm.xlu0 %3165, %v3160
  %v3167 = vpop.permute.xlu0 %3166
  %3170 = vset.pattern.permute.xlu0 0
  %3171 = vperm.xlu0 %3170, %v3161
  %v3172 = vpop.permute.xlu0 %3171
  %3175 = vset.pattern.permute.xlu0 0
  %3176 = vperm.xlu0 %3175, %v3162
  %v3177 = vpop.permute.xlu0 %3176
  %3180 = vset.pattern.permute.xlu0 0
  %3181 = vperm.xlu0 %3180, %v3163
  %v3182 = vpop.permute.xlu0 %3181
  %v3184 = vmul.f32 %v3167, %v3156
  %v3185 = vmul.f32 %v3172, %v3157
  %v3186 = vmul.f32 %v3177, %v3158
  %v3187 = vmul.f32 %v3182, %v3159
  %v3188 = vadd.f32 %v3127, %v3184
  %v3189 = vadd.f32 %v3128, %v3185
  %v3190 = vadd.f32 %v3129, %v3186
  %v3191 = vadd.f32 %v3130, %v3187
  %v3192 = vld [vmem:[%s2775] sm:$0xff]
  %v3193 = vld [vmem:[%s2775 + $0x8] sm:$0xff]
  %v3194 = vld [vmem:[%s2775 + $0x10] sm:$0xff]
  %v3195 = vld [vmem:[%s2775 + $0x18] sm:$0xff]
  %3197 = vset.pattern.permute.xlu0 0
  %3198 = vperm.xlu0 %3197, %v3192
  %v3199 = vpop.permute.xlu0 %3198
  %3202 = vset.pattern.permute.xlu0 0
  %3203 = vperm.xlu0 %3202, %v3193
  %v3204 = vpop.permute.xlu0 %3203
  %3207 = vset.pattern.permute.xlu0 0
  %3208 = vperm.xlu0 %3207, %v3194
  %v3209 = vpop.permute.xlu0 %3208
  %3212 = vset.pattern.permute.xlu0 0
  %3213 = vperm.xlu0 %3212, %v3195
  %v3214 = vpop.permute.xlu0 %3213
  %v3216 = vmul.f32 %v3199, %v2722
  %v3217 = vmul.f32 %v3204, %v2723
  %v3218 = vmul.f32 %v3209, %v2724
  %v3219 = vmul.f32 %v3214, %v2725
  %v3220 = vadd.f32 %v3188, %v3216
  %v3221 = vadd.f32 %v3189, %v3217
  %v3222 = vadd.f32 %v3190, %v3218
  %v3223 = vadd.f32 %v3191, %v3219
  %v3224 = vsel %vm482, %v3220, 0.0
  %v3225 = vsel %vm482, %v3221, 0.0
  %v3226 = vadd.f32 %v3224, %v3225
  %v3227 = vsel %vm482, %v3222, 0.0
  %v3228 = vadd.f32 %v3226, %v3227
  %v3229 = vsel %vm482, %v3223, 0.0
  %v3230 = vadd.f32 %v3228, %v3229
  %v3231 = vrot.slane %v3230, 4
  %v3232 = vadd.f32 %v3230, %v3231
  %v3233 = vrot.slane %v3232, 2
  %v3234 = vadd.f32 %v3232, %v3233
  %v3235 = vrot.slane %v3234, 1
  %v3236 = vadd.f32 %v3234, %v3235
  %v3237 = vtanh.pop %v3236
  %3238 = vst.msk [vmem:[%s7 + $0x3] sm:$0x1] %vm2625, %v3237
  %v3239 = vld [vmem:[#allocation5] sm:$0xff]
  %v3240 = vld [vmem:[#allocation5 + $0x8] sm:$0xff]
  %v3241 = vld [vmem:[#allocation5 + $0x10] sm:$0xff]
  %v3242 = vld [vmem:[#allocation5 + $0x18] sm:$0xff]
  %s3243 = scalar_lea.vmem %s3, 32
  %v3244 = vld [vmem:[%s3243] sm:$0xff]
  %v3245 = vld [vmem:[%s3243 + $0x8] sm:$0xff]
  %v3246 = vld [vmem:[%s3243 + $0x10] sm:$0xff]
  %v3247 = vld [vmem:[%s3243 + $0x18] sm:$0xff]
  %3249 = vset.pattern.permute.xlu0 0
  %3250 = vperm.xlu0 %3249, %v3244
  %v3251 = vpop.permute.xlu0 %3250
  %3254 = vset.pattern.permute.xlu0 0
  %3255 = vperm.xlu0 %3254, %v3245
  %v3256 = vpop.permute.xlu0 %3255
  %3259 = vset.pattern.permute.xlu0 0
  %3260 = vperm.xlu0 %3259, %v3246
  %v3261 = vpop.permute.xlu0 %3260
  %3264 = vset.pattern.permute.xlu0 0
  %3265 = vperm.xlu0 %3264, %v3247
  %v3266 = vpop.permute.xlu0 %3265
  %v3268 = vmul.f32 %v3251, %v3239
  %v3269 = vmul.f32 %v3256, %v3240
  %v3270 = vmul.f32 %v3261, %v3241
  %v3271 = vmul.f32 %v3266, %v3242
  %v3272 = vadd.f32 %v3268, 0.0
  %v3273 = vadd.f32 %v3269, 0.0
  %v3274 = vadd.f32 %v3270, 0.0
  %v3275 = vadd.f32 %v3271, 0.0
  %v3276 = vld [vmem:[#allocation6] sm:$0xff]
  %v3277 = vld [vmem:[#allocation6 + $0x8] sm:$0xff]
  %v3278 = vld [vmem:[#allocation6 + $0x10] sm:$0xff]
  %v3279 = vld [vmem:[#allocation6 + $0x18] sm:$0xff]
  %v3280 = vld [vmem:[%s6 + $0x3] sm:$0x1]
  %vm3281 = vcmp.gt.f32.partialorder %v3280, 0.5
  %v3282 = vsel %vm3281, 1, 0
  %v3283 = vperm.slane %v3282, 0
  %vm3284 = vcmp.eq.s32.totalorder %v3283, 1
  %3289 = vrot.lane.b32.xlu0 %v3276, 121
  %v3290 = vpop.permute.xlu0 %3289
  %3291 = vrot.lane.b32.xlu0 %v3277, 121
  %v3292 = vpop.permute.xlu0 %3291
  %3293 = vrot.lane.b32.xlu0 %v3278, 121
  %v3294 = vpop.permute.xlu0 %3293
  %3295 = vrot.lane.b32.xlu0 %v3279, 121
  %v3296 = vpop.permute.xlu0 %3295
  %v3301 = vsel %vm3284, %v3290, 0.0
  %v3302 = vsel %vm3284, %v3292, 0.0
  %v3303 = vsel %vm3284, %v3294, 0.0
  %v3304 = vsel %vm3284, %v3296, 0.0
  %s3305 = scalar_lea.vmem %s3, 96
  %v3306 = vld [vmem:[%s3305] sm:$0xff]
  %v3307 = vld [vmem:[%s3305 + $0x8] sm:$0xff]
  %v3308 = vld [vmem:[%s3305 + $0x10] sm:$0xff]
  %v3309 = vld [vmem:[%s3305 + $0x18] sm:$0xff]
  %3311 = vset.pattern.permute.xlu0 0
  %3312 = vperm.xlu0 %3311, %v3306
  %v3313 = vpop.permute.xlu0 %3312
  %3316 = vset.pattern.permute.xlu0 0
  %3317 = vperm.xlu0 %3316, %v3307
  %v3318 = vpop.permute.xlu0 %3317
  %3321 = vset.pattern.permute.xlu0 0
  %3322 = vperm.xlu0 %3321, %v3308
  %v3323 = vpop.permute.xlu0 %3322
  %3326 = vset.pattern.permute.xlu0 0
  %3327 = vperm.xlu0 %3326, %v3309
  %v3328 = vpop.permute.xlu0 %3327
  %v3330 = vmul.f32 %v3313, %v3301
  %v3331 = vmul.f32 %v3318, %v3302
  %v3332 = vmul.f32 %v3323, %v3303
  %v3333 = vmul.f32 %v3328, %v3304
  %3338 = vrot.lane.b32.xlu0 %v3330, 8
  %v3339 = vpop.permute.xlu0 %3338
  %3340 = vrot.lane.b32.xlu0 %v3331, 8
  %v3341 = vpop.permute.xlu0 %3340
  %3342 = vrot.lane.b32.xlu0 %v3332, 8
  %v3343 = vpop.permute.xlu0 %3342
  %3344 = vrot.lane.b32.xlu0 %v3333, 8
  %v3345 = vpop.permute.xlu0 %3344
  %v3350 = vadd.f32 %v3272, %v3339
  %v3351 = vadd.f32 %v3273, %v3341
  %v3352 = vadd.f32 %v3274, %v3343
  %v3353 = vadd.f32 %v3275, %v3345
  %s3354 = scalar_lea.vmem %s3, 288
  %v3355 = vld [vmem:[%s3354] sm:$0xff]
  %v3356 = vld [vmem:[%s3354 + $0x8] sm:$0xff]
  %v3357 = vld [vmem:[%s3354 + $0x10] sm:$0xff]
  %v3358 = vld [vmem:[%s3354 + $0x18] sm:$0xff]
  %3360 = vset.pattern.permute.xlu0 0
  %3361 = vperm.xlu0 %3360, %v3355
  %v3362 = vpop.permute.xlu0 %3361
  %3365 = vset.pattern.permute.xlu0 0
  %3366 = vperm.xlu0 %3365, %v3356
  %v3367 = vpop.permute.xlu0 %3366
  %3370 = vset.pattern.permute.xlu0 0
  %3371 = vperm.xlu0 %3370, %v3357
  %v3372 = vpop.permute.xlu0 %3371
  %3375 = vset.pattern.permute.xlu0 0
  %3376 = vperm.xlu0 %3375, %v3358
  %v3377 = vpop.permute.xlu0 %3376
  %v3379 = vmul.f32 %v3362, %v2352
  %v3380 = vmul.f32 %v3367, %v2353
  %v3381 = vmul.f32 %v3372, %v2354
  %v3382 = vmul.f32 %v3377, %v2355
  %v3383 = vadd.f32 %v3350, %v3379
  %v3384 = vadd.f32 %v3351, %v3380
  %v3385 = vadd.f32 %v3352, %v3381
  %v3386 = vadd.f32 %v3353, %v3382
  %s3387 = scalar_lea.vmem %s3, 352
  %v3388 = vld [vmem:[%s3387] sm:$0xff]
  %v3389 = vld [vmem:[%s3387 + $0x8] sm:$0xff]
  %v3390 = vld [vmem:[%s3387 + $0x10] sm:$0xff]
  %v3391 = vld [vmem:[%s3387 + $0x18] sm:$0xff]
  %3393 = vset.pattern.permute.xlu0 0
  %3394 = vperm.xlu0 %3393, %v3388
  %v3395 = vpop.permute.xlu0 %3394
  %3398 = vset.pattern.permute.xlu0 0
  %3399 = vperm.xlu0 %3398, %v3389
  %v3400 = vpop.permute.xlu0 %3399
  %3403 = vset.pattern.permute.xlu0 0
  %3404 = vperm.xlu0 %3403, %v3390
  %v3405 = vpop.permute.xlu0 %3404
  %3408 = vset.pattern.permute.xlu0 0
  %3409 = vperm.xlu0 %3408, %v3391
  %v3410 = vpop.permute.xlu0 %3409
  %v3412 = vmul.f32 %v3395, %v2414
  %v3413 = vmul.f32 %v3400, %v2415
  %v3414 = vmul.f32 %v3405, %v2416
  %v3415 = vmul.f32 %v3410, %v2417
  %3420 = vrot.lane.b32.xlu0 %v3412, 8
  %v3421 = vpop.permute.xlu0 %3420
  %3422 = vrot.lane.b32.xlu0 %v3413, 8
  %v3423 = vpop.permute.xlu0 %3422
  %3424 = vrot.lane.b32.xlu0 %v3414, 8
  %v3425 = vpop.permute.xlu0 %3424
  %3426 = vrot.lane.b32.xlu0 %v3415, 8
  %v3427 = vpop.permute.xlu0 %3426
  %v3432 = vadd.f32 %v3383, %v3421
  %v3433 = vadd.f32 %v3384, %v3423
  %v3434 = vadd.f32 %v3385, %v3425
  %v3435 = vadd.f32 %v3386, %v3427
  %v3436 = vsel %vm859, %v3432, 0.0
  %v3437 = vsel %vm859, %v3433, 0.0
  %v3438 = vadd.f32 %v3436, %v3437
  %v3439 = vsel %vm859, %v3434, 0.0
  %v3440 = vadd.f32 %v3438, %v3439
  %v3441 = vsel %vm859, %v3435, 0.0
  %v3442 = vadd.f32 %v3440, %v3441
  %v3443 = vrot.slane %v3442, 4
  %v3444 = vadd.f32 %v3442, %v3443
  %v3445 = vrot.slane %v3444, 2
  %v3446 = vadd.f32 %v3444, %v3445
  %v3447 = vrot.slane %v3446, 1
  %v3448 = vadd.f32 %v3446, %v3447
  %v3449 = vtanh.pop %v3448
  %3451 = vrot.lane.b32.xlu0 %v3449, 120
  %v3452 = vpop.permute.xlu0 %3451
  %3454 = vst.msk [vmem:[%s7 + $0x4] sm:$0x1] %vm2625, %v3452
  %v3455 = vld [vmem:[#allocation6] sm:$0xff]
  %v3456 = vld [vmem:[#allocation6 + $0x8] sm:$0xff]
  %v3457 = vld [vmem:[#allocation6 + $0x10] sm:$0xff]
  %v3458 = vld [vmem:[#allocation6 + $0x18] sm:$0xff]
  %v3459 = vld [vmem:[%s3] sm:$0xff]
  %v3460 = vld [vmem:[%s3 + $0x8] sm:$0xff]
  %v3461 = vld [vmem:[%s3 + $0x10] sm:$0xff]
  %v3462 = vld [vmem:[%s3 + $0x18] sm:$0xff]
  %3464 = vset.pattern.permute.xlu0 0
  %3465 = vperm.xlu0 %3464, %v3459
  %v3466 = vpop.permute.xlu0 %3465
  %3469 = vset.pattern.permute.xlu0 0
  %3470 = vperm.xlu0 %3469, %v3460
  %v3471 = vpop.permute.xlu0 %3470
  %3474 = vset.pattern.permute.xlu0 0
  %3475 = vperm.xlu0 %3474, %v3461
  %v3476 = vpop.permute.xlu0 %3475
  %3479 = vset.pattern.permute.xlu0 0
  %3480 = vperm.xlu0 %3479, %v3462
  %v3481 = vpop.permute.xlu0 %3480
  %v3483 = vmul.f32 %v3466, %v3455
  %v3484 = vmul.f32 %v3471, %v3456
  %v3485 = vmul.f32 %v3476, %v3457
  %v3486 = vmul.f32 %v3481, %v3458
  %v3487 = vadd.f32 %v3483, 0.0
  %v3488 = vadd.f32 %v3484, 0.0
  %v3489 = vadd.f32 %v3485, 0.0
  %v3490 = vadd.f32 %v3486, 0.0
  %s3491 = scalar_lea.vmem %s3, 64
  %v3492 = vld [vmem:[%s3491] sm:$0xff]
  %v3493 = vld [vmem:[%s3491 + $0x8] sm:$0xff]
  %v3494 = vld [vmem:[%s3491 + $0x10] sm:$0xff]
  %v3495 = vld [vmem:[%s3491 + $0x18] sm:$0xff]
  %3497 = vset.pattern.permute.xlu0 0
  %3498 = vperm.xlu0 %3497, %v3492
  %v3499 = vpop.permute.xlu0 %3498
  %3502 = vset.pattern.permute.xlu0 0
  %3503 = vperm.xlu0 %3502, %v3493
  %v3504 = vpop.permute.xlu0 %3503
  %3507 = vset.pattern.permute.xlu0 0
  %3508 = vperm.xlu0 %3507, %v3494
  %v3509 = vpop.permute.xlu0 %3508
  %3512 = vset.pattern.permute.xlu0 0
  %3513 = vperm.xlu0 %3512, %v3495
  %v3514 = vpop.permute.xlu0 %3513
  %v3516 = vmul.f32 %v3499, %v3239
  %v3517 = vmul.f32 %v3504, %v3240
  %v3518 = vmul.f32 %v3509, %v3241
  %v3519 = vmul.f32 %v3514, %v3242
  %v3520 = vadd.f32 %v3487, %v3516
  %v3521 = vadd.f32 %v3488, %v3517
  %v3522 = vadd.f32 %v3489, %v3518
  %v3523 = vadd.f32 %v3490, %v3519
  %s3524 = scalar_lea.vmem %s3, 256
  %v3525 = vld [vmem:[%s3524] sm:$0xff]
  %v3526 = vld [vmem:[%s3524 + $0x8] sm:$0xff]
  %v3527 = vld [vmem:[%s3524 + $0x10] sm:$0xff]
  %v3528 = vld [vmem:[%s3524 + $0x18] sm:$0xff]
  %3530 = vset.pattern.permute.xlu0 0
  %3531 = vperm.xlu0 %3530, %v3525
  %v3532 = vpop.permute.xlu0 %3531
  %3535 = vset.pattern.permute.xlu0 0
  %3536 = vperm.xlu0 %3535, %v3526
  %v3537 = vpop.permute.xlu0 %3536
  %3540 = vset.pattern.permute.xlu0 0
  %3541 = vperm.xlu0 %3540, %v3527
  %v3542 = vpop.permute.xlu0 %3541
  %3545 = vset.pattern.permute.xlu0 0
  %3546 = vperm.xlu0 %3545, %v3528
  %v3547 = vpop.permute.xlu0 %3546
  %v3549 = vmul.f32 %v3532, %v2627
  %v3550 = vmul.f32 %v3537, %v2628
  %v3551 = vmul.f32 %v3542, %v2629
  %v3552 = vmul.f32 %v3547, %v2630
  %v3553 = vadd.f32 %v3520, %v3549
  %v3554 = vadd.f32 %v3521, %v3550
  %v3555 = vadd.f32 %v3522, %v3551
  %v3556 = vadd.f32 %v3523, %v3552
  %s3557 = scalar_lea.vmem %s3, 320
  %v3558 = vld [vmem:[%s3557] sm:$0xff]
  %v3559 = vld [vmem:[%s3557 + $0x8] sm:$0xff]
  %v3560 = vld [vmem:[%s3557 + $0x10] sm:$0xff]
  %v3561 = vld [vmem:[%s3557 + $0x18] sm:$0xff]
  %3563 = vset.pattern.permute.xlu0 0
  %3564 = vperm.xlu0 %3563, %v3558
  %v3565 = vpop.permute.xlu0 %3564
  %3568 = vset.pattern.permute.xlu0 0
  %3569 = vperm.xlu0 %3568, %v3559
  %v3570 = vpop.permute.xlu0 %3569
  %3573 = vset.pattern.permute.xlu0 0
  %3574 = vperm.xlu0 %3573, %v3560
  %v3575 = vpop.permute.xlu0 %3574
  %3578 = vset.pattern.permute.xlu0 0
  %3579 = vperm.xlu0 %3578, %v3561
  %v3580 = vpop.permute.xlu0 %3579
  %v3582 = vmul.f32 %v3565, %v2352
  %v3583 = vmul.f32 %v3570, %v2353
  %v3584 = vmul.f32 %v3575, %v2354
  %v3585 = vmul.f32 %v3580, %v2355
  %v3586 = vadd.f32 %v3553, %v3582
  %v3587 = vadd.f32 %v3554, %v3583
  %v3588 = vadd.f32 %v3555, %v3584
  %v3589 = vadd.f32 %v3556, %v3585
  %v3590 = vsel %vm859, %v3586, 0.0
  %v3591 = vsel %vm859, %v3587, 0.0
  %v3592 = vadd.f32 %v3590, %v3591
  %v3593 = vsel %vm859, %v3588, 0.0
  %v3594 = vadd.f32 %v3592, %v3593
  %v3595 = vsel %vm859, %v3589, 0.0
  %v3596 = vadd.f32 %v3594, %v3595
  %v3597 = vrot.slane %v3596, 4
  %v3598 = vadd.f32 %v3596, %v3597
  %v3599 = vrot.slane %v3598, 2
  %v3600 = vadd.f32 %v3598, %v3599
  %v3601 = vrot.slane %v3600, 1
  %v3602 = vadd.f32 %v3600, %v3601
  %v3603 = vtanh.pop %v3602
  %3605 = vrot.lane.b32.xlu0 %v3603, 120
  %v3606 = vpop.permute.xlu0 %3605
  %3608 = vst.msk [vmem:[%s7 + $0x5] sm:$0x1] %vm2625, %v3606
  %v3609 = vld [vmem:[%s3243] sm:$0xff]
  %v3610 = vld [vmem:[%s3243 + $0x8] sm:$0xff]
  %v3611 = vld [vmem:[%s3243 + $0x10] sm:$0xff]
  %v3612 = vld [vmem:[%s3243 + $0x18] sm:$0xff]
  %3614 = vset.pattern.permute.xlu0 0
  %3615 = vperm.xlu0 %3614, %v3609
  %v3616 = vpop.permute.xlu0 %3615
  %3619 = vset.pattern.permute.xlu0 0
  %3620 = vperm.xlu0 %3619, %v3610
  %v3621 = vpop.permute.xlu0 %3620
  %3624 = vset.pattern.permute.xlu0 0
  %3625 = vperm.xlu0 %3624, %v3611
  %v3626 = vpop.permute.xlu0 %3625
  %3629 = vset.pattern.permute.xlu0 0
  %3630 = vperm.xlu0 %3629, %v3612
  %v3631 = vpop.permute.xlu0 %3630
  %v3633 = vmul.f32 %v3616, %v3455
  %v3634 = vmul.f32 %v3621, %v3456
  %v3635 = vmul.f32 %v3626, %v3457
  %v3636 = vmul.f32 %v3631, %v3458
  %v3637 = vadd.f32 %v3633, 0.0
  %v3638 = vadd.f32 %v3634, 0.0
  %v3639 = vadd.f32 %v3635, 0.0
  %v3640 = vadd.f32 %v3636, 0.0
  %v3641 = vld [vmem:[%s3305] sm:$0xff]
  %v3642 = vld [vmem:[%s3305 + $0x8] sm:$0xff]
  %v3643 = vld [vmem:[%s3305 + $0x10] sm:$0xff]
  %v3644 = vld [vmem:[%s3305 + $0x18] sm:$0xff]
  %3646 = vset.pattern.permute.xlu0 0
  %3647 = vperm.xlu0 %3646, %v3641
  %v3648 = vpop.permute.xlu0 %3647
  %3651 = vset.pattern.permute.xlu0 0
  %3652 = vperm.xlu0 %3651, %v3642
  %v3653 = vpop.permute.xlu0 %3652
  %3656 = vset.pattern.permute.xlu0 0
  %3657 = vperm.xlu0 %3656, %v3643
  %v3658 = vpop.permute.xlu0 %3657
  %3661 = vset.pattern.permute.xlu0 0
  %3662 = vperm.xlu0 %3661, %v3644
  %v3663 = vpop.permute.xlu0 %3662
  %v3665 = vmul.f32 %v3648, %v3239
  %v3666 = vmul.f32 %v3653, %v3240
  %v3667 = vmul.f32 %v3658, %v3241
  %v3668 = vmul.f32 %v3663, %v3242
  %v3669 = vadd.f32 %v3637, %v3665
  %v3670 = vadd.f32 %v3638, %v3666
  %v3671 = vadd.f32 %v3639, %v3667
  %v3672 = vadd.f32 %v3640, %v3668
  %v3673 = vld [vmem:[%s3354] sm:$0xff]
  %v3674 = vld [vmem:[%s3354 + $0x8] sm:$0xff]
  %v3675 = vld [vmem:[%s3354 + $0x10] sm:$0xff]
  %v3676 = vld [vmem:[%s3354 + $0x18] sm:$0xff]
  %3678 = vset.pattern.permute.xlu0 0
  %3679 = vperm.xlu0 %3678, %v3673
  %v3680 = vpop.permute.xlu0 %3679
  %3683 = vset.pattern.permute.xlu0 0
  %3684 = vperm.xlu0 %3683, %v3674
  %v3685 = vpop.permute.xlu0 %3684
  %3688 = vset.pattern.permute.xlu0 0
  %3689 = vperm.xlu0 %3688, %v3675
  %v3690 = vpop.permute.xlu0 %3689
  %3693 = vset.pattern.permute.xlu0 0
  %3694 = vperm.xlu0 %3693, %v3676
  %v3695 = vpop.permute.xlu0 %3694
  %v3697 = vmul.f32 %v3680, %v2627
  %v3698 = vmul.f32 %v3685, %v2628
  %v3699 = vmul.f32 %v3690, %v2629
  %v3700 = vmul.f32 %v3695, %v2630
  %v3701 = vadd.f32 %v3669, %v3697
  %v3702 = vadd.f32 %v3670, %v3698
  %v3703 = vadd.f32 %v3671, %v3699
  %v3704 = vadd.f32 %v3672, %v3700
  %v3705 = vld [vmem:[%s3387] sm:$0xff]
  %v3706 = vld [vmem:[%s3387 + $0x8] sm:$0xff]
  %v3707 = vld [vmem:[%s3387 + $0x10] sm:$0xff]
  %v3708 = vld [vmem:[%s3387 + $0x18] sm:$0xff]
  %3710 = vset.pattern.permute.xlu0 0
  %3711 = vperm.xlu0 %3710, %v3705
  %v3712 = vpop.permute.xlu0 %3711
  %3715 = vset.pattern.permute.xlu0 0
  %3716 = vperm.xlu0 %3715, %v3706
  %v3717 = vpop.permute.xlu0 %3716
  %3720 = vset.pattern.permute.xlu0 0
  %3721 = vperm.xlu0 %3720, %v3707
  %v3722 = vpop.permute.xlu0 %3721
  %3725 = vset.pattern.permute.xlu0 0
  %3726 = vperm.xlu0 %3725, %v3708
  %v3727 = vpop.permute.xlu0 %3726
  %v3729 = vmul.f32 %v3712, %v2352
  %v3730 = vmul.f32 %v3717, %v2353
  %v3731 = vmul.f32 %v3722, %v2354
  %v3732 = vmul.f32 %v3727, %v2355
  %v3733 = vadd.f32 %v3701, %v3729
  %v3734 = vadd.f32 %v3702, %v3730
  %v3735 = vadd.f32 %v3703, %v3731
  %v3736 = vadd.f32 %v3704, %v3732
  %v3737 = vsel %vm859, %v3733, 0.0
  %v3738 = vsel %vm859, %v3734, 0.0
  %v3739 = vadd.f32 %v3737, %v3738
  %v3740 = vsel %vm859, %v3735, 0.0
  %v3741 = vadd.f32 %v3739, %v3740
  %v3742 = vsel %vm859, %v3736, 0.0
  %v3743 = vadd.f32 %v3741, %v3742
  %v3744 = vrot.slane %v3743, 4
  %v3745 = vadd.f32 %v3743, %v3744
  %v3746 = vrot.slane %v3745, 2
  %v3747 = vadd.f32 %v3745, %v3746
  %v3748 = vrot.slane %v3747, 1
  %v3749 = vadd.f32 %v3747, %v3748
  %v3750 = vtanh.pop %v3749
  %3752 = vrot.lane.b32.xlu0 %v3750, 120
  %v3753 = vpop.permute.xlu0 %3752
  %3755 = vst.msk [vmem:[%s7 + $0x6] sm:$0x1] %vm2625, %v3753
  %v3756 = vld [vmem:[#allocation5] sm:$0xff]
  %v3757 = vld [vmem:[#allocation5 + $0x8] sm:$0xff]
  %v3758 = vld [vmem:[#allocation5 + $0x10] sm:$0xff]
  %v3759 = vld [vmem:[#allocation5 + $0x18] sm:$0xff]
  %v3760 = vld [vmem:[%s6 + $0x5] sm:$0x1]
  %vm3761 = vcmp.gt.f32.partialorder %v3760, 0.5
  %v3762 = vsel %vm3761, 1, 0
  %v3763 = vperm.slane %v3762, 0
  %vm3764 = vcmp.eq.s32.totalorder %v3763, 1
  %3769 = vrot.lane.b32.xlu0 %v3756, 119
  %v3770 = vpop.permute.xlu0 %3769
  %3771 = vrot.lane.b32.xlu0 %v3757, 119
  %v3772 = vpop.permute.xlu0 %3771
  %3773 = vrot.lane.b32.xlu0 %v3758, 119
  %v3774 = vpop.permute.xlu0 %3773
  %3775 = vrot.lane.b32.xlu0 %v3759, 119
  %v3776 = vpop.permute.xlu0 %3775
  %v3781 = vsel %vm3764, %v3770, 0.0
  %v3782 = vsel %vm3764, %v3772, 0.0
  %v3783 = vsel %vm3764, %v3774, 0.0
  %v3784 = vsel %vm3764, %v3776, 0.0
  %v3785 = vld [vmem:[%s3] sm:$0xff]
  %v3786 = vld [vmem:[%s3 + $0x8] sm:$0xff]
  %v3787 = vld [vmem:[%s3 + $0x10] sm:$0xff]
  %v3788 = vld [vmem:[%s3 + $0x18] sm:$0xff]
  %3790 = vset.pattern.permute.xlu0 0
  %3791 = vperm.xlu0 %3790, %v3785
  %v3792 = vpop.permute.xlu0 %3791
  %3795 = vset.pattern.permute.xlu0 0
  %3796 = vperm.xlu0 %3795, %v3786
  %v3797 = vpop.permute.xlu0 %3796
  %3800 = vset.pattern.permute.xlu0 0
  %3801 = vperm.xlu0 %3800, %v3787
  %v3802 = vpop.permute.xlu0 %3801
  %3805 = vset.pattern.permute.xlu0 0
  %3806 = vperm.xlu0 %3805, %v3788
  %v3807 = vpop.permute.xlu0 %3806
  %v3809 = vmul.f32 %v3792, %v3781
  %v3810 = vmul.f32 %v3797, %v3782
  %v3811 = vmul.f32 %v3802, %v3783
  %v3812 = vmul.f32 %v3807, %v3784
  %v3813 = vadd.f32 %v3809, 0.0
  %v3814 = vadd.f32 %v3810, 0.0
  %v3815 = vadd.f32 %v3811, 0.0
  %v3816 = vadd.f32 %v3812, 0.0
  %v3817 = vld [vmem:[%s3491] sm:$0xff]
  %v3818 = vld [vmem:[%s3491 + $0x8] sm:$0xff]
  %v3819 = vld [vmem:[%s3491 + $0x10] sm:$0xff]
  %v3820 = vld [vmem:[%s3491 + $0x18] sm:$0xff]
  %3822 = vset.pattern.permute.xlu0 0
  %3823 = vperm.xlu0 %3822, %v3817
  %v3824 = vpop.permute.xlu0 %3823
  %3827 = vset.pattern.permute.xlu0 0
  %3828 = vperm.xlu0 %3827, %v3818
  %v3829 = vpop.permute.xlu0 %3828
  %3832 = vset.pattern.permute.xlu0 0
  %3833 = vperm.xlu0 %3832, %v3819
  %v3834 = vpop.permute.xlu0 %3833
  %3837 = vset.pattern.permute.xlu0 0
  %3838 = vperm.xlu0 %3837, %v3820
  %v3839 = vpop.permute.xlu0 %3838
  %v3841 = vmul.f32 %v3824, %v3455
  %v3842 = vmul.f32 %v3829, %v3456
  %v3843 = vmul.f32 %v3834, %v3457
  %v3844 = vmul.f32 %v3839, %v3458
  %3849 = vrot.lane.b32.xlu0 %v3841, 120
  %v3850 = vpop.permute.xlu0 %3849
  %3851 = vrot.lane.b32.xlu0 %v3842, 120
  %v3852 = vpop.permute.xlu0 %3851
  %3853 = vrot.lane.b32.xlu0 %v3843, 120
  %v3854 = vpop.permute.xlu0 %3853
  %3855 = vrot.lane.b32.xlu0 %v3844, 120
  %v3856 = vpop.permute.xlu0 %3855
  %v3861 = vadd.f32 %v3813, %v3850
  %v3862 = vadd.f32 %v3814, %v3852
  %v3863 = vadd.f32 %v3815, %v3854
  %v3864 = vadd.f32 %v3816, %v3856
  %v3865 = vld [vmem:[%s3524] sm:$0xff]
  %v3866 = vld [vmem:[%s3524 + $0x8] sm:$0xff]
  %v3867 = vld [vmem:[%s3524 + $0x10] sm:$0xff]
  %v3868 = vld [vmem:[%s3524 + $0x18] sm:$0xff]
  %3870 = vset.pattern.permute.xlu0 0
  %3871 = vperm.xlu0 %3870, %v3865
  %v3872 = vpop.permute.xlu0 %3871
  %3875 = vset.pattern.permute.xlu0 0
  %3876 = vperm.xlu0 %3875, %v3866
  %v3877 = vpop.permute.xlu0 %3876
  %3880 = vset.pattern.permute.xlu0 0
  %3881 = vperm.xlu0 %3880, %v3867
  %v3882 = vpop.permute.xlu0 %3881
  %3885 = vset.pattern.permute.xlu0 0
  %3886 = vperm.xlu0 %3885, %v3868
  %v3887 = vpop.permute.xlu0 %3886
  %v3889 = vmul.f32 %v3872, %v3047
  %v3890 = vmul.f32 %v3877, %v3048
  %v3891 = vmul.f32 %v3882, %v3049
  %v3892 = vmul.f32 %v3887, %v3050
  %v3893 = vadd.f32 %v3861, %v3889
  %v3894 = vadd.f32 %v3862, %v3890
  %v3895 = vadd.f32 %v3863, %v3891
  %v3896 = vadd.f32 %v3864, %v3892
  %v3897 = vld [vmem:[%s3557] sm:$0xff]
  %v3898 = vld [vmem:[%s3557 + $0x8] sm:$0xff]
  %v3899 = vld [vmem:[%s3557 + $0x10] sm:$0xff]
  %v3900 = vld [vmem:[%s3557 + $0x18] sm:$0xff]
  %3902 = vset.pattern.permute.xlu0 0
  %3903 = vperm.xlu0 %3902, %v3897
  %v3904 = vpop.permute.xlu0 %3903
  %3907 = vset.pattern.permute.xlu0 0
  %3908 = vperm.xlu0 %3907, %v3898
  %v3909 = vpop.permute.xlu0 %3908
  %3912 = vset.pattern.permute.xlu0 0
  %3913 = vperm.xlu0 %3912, %v3899
  %v3914 = vpop.permute.xlu0 %3913
  %3917 = vset.pattern.permute.xlu0 0
  %3918 = vperm.xlu0 %3917, %v3900
  %v3919 = vpop.permute.xlu0 %3918
  %v3921 = vmul.f32 %v3904, %v2627
  %v3922 = vmul.f32 %v3909, %v2628
  %v3923 = vmul.f32 %v3914, %v2629
  %v3924 = vmul.f32 %v3919, %v2630
  %3929 = vrot.lane.b32.xlu0 %v3921, 120
  %v3930 = vpop.permute.xlu0 %3929
  %3931 = vrot.lane.b32.xlu0 %v3922, 120
  %v3932 = vpop.permute.xlu0 %3931
  %3933 = vrot.lane.b32.xlu0 %v3923, 120
  %v3934 = vpop.permute.xlu0 %3933
  %3935 = vrot.lane.b32.xlu0 %v3924, 120
  %v3936 = vpop.permute.xlu0 %3935
  %v3941 = vadd.f32 %v3893, %v3930
  %v3942 = vadd.f32 %v3894, %v3932
  %v3943 = vadd.f32 %v3895, %v3934
  %v3944 = vadd.f32 %v3896, %v3936
  %v3945 = vsel %vm482, %v3941, 0.0
  %v3946 = vsel %vm482, %v3942, 0.0
  %v3947 = vadd.f32 %v3945, %v3946
  %v3948 = vsel %vm482, %v3943, 0.0
  %v3949 = vadd.f32 %v3947, %v3948
  %v3950 = vsel %vm482, %v3944, 0.0
  %v3951 = vadd.f32 %v3949, %v3950
  %v3952 = vrot.slane %v3951, 4
  %v3953 = vadd.f32 %v3951, %v3952
  %v3954 = vrot.slane %v3953, 2
  %v3955 = vadd.f32 %v3953, %v3954
  %v3956 = vrot.slane %v3955, 1
  %v3957 = vadd.f32 %v3955, %v3956
  %v3958 = vtanh.pop %v3957
  %3959 = vst.msk [vmem:[%s7 + $0x7] sm:$0x1] %vm2625, %v3958
  %v3960 = vld [vmem:[%s2356] sm:$0xff]
  %v3961 = vld [vmem:[%s2356 + $0x8] sm:$0xff]
  %v3962 = vld [vmem:[%s2356 + $0x10] sm:$0xff]
  %v3963 = vld [vmem:[%s2356 + $0x18] sm:$0xff]
  %3965 = vset.pattern.permute.xlu0 0
  %3966 = vperm.xlu0 %3965, %v3960
  %v3967 = vpop.permute.xlu0 %3966
  %3970 = vset.pattern.permute.xlu0 0
  %3971 = vperm.xlu0 %3970, %v3961
  %v3972 = vpop.permute.xlu0 %3971
  %3975 = vset.pattern.permute.xlu0 0
  %3976 = vperm.xlu0 %3975, %v3962
  %v3977 = vpop.permute.xlu0 %3976
  %3980 = vset.pattern.permute.xlu0 0
  %3981 = vperm.xlu0 %3980, %v3963
  %v3982 = vpop.permute.xlu0 %3981
  %v3984 = vmul.f32 %v3967, %v3239
  %v3985 = vmul.f32 %v3972, %v3240
  %v3986 = vmul.f32 %v3977, %v3241
  %v3987 = vmul.f32 %v3982, %v3242
  %v3988 = vadd.f32 %v3984, 0.0
  %v3989 = vadd.f32 %v3985, 0.0
  %v3990 = vadd.f32 %v3986, 0.0
  %v3991 = vadd.f32 %v3987, 0.0
  %v3992 = vld [vmem:[%s2418] sm:$0xff]
  %v3993 = vld [vmem:[%s2418 + $0x8] sm:$0xff]
  %v3994 = vld [vmem:[%s2418 + $0x10] sm:$0xff]
  %v3995 = vld [vmem:[%s2418 + $0x18] sm:$0xff]
  %3997 = vset.pattern.permute.xlu0 0
  %3998 = vperm.xlu0 %3997, %v3992
  %v3999 = vpop.permute.xlu0 %3998
  %4002 = vset.pattern.permute.xlu0 0
  %4003 = vperm.xlu0 %4002, %v3993
  %v4004 = vpop.permute.xlu0 %4003
  %4007 = vset.pattern.permute.xlu0 0
  %4008 = vperm.xlu0 %4007, %v3994
  %v4009 = vpop.permute.xlu0 %4008
  %4012 = vset.pattern.permute.xlu0 0
  %4013 = vperm.xlu0 %4012, %v3995
  %v4014 = vpop.permute.xlu0 %4013
  %v4016 = vmul.f32 %v3999, %v3301
  %v4017 = vmul.f32 %v4004, %v3302
  %v4018 = vmul.f32 %v4009, %v3303
  %v4019 = vmul.f32 %v4014, %v3304
  %4024 = vrot.lane.b32.xlu0 %v4016, 8
  %v4025 = vpop.permute.xlu0 %4024
  %4026 = vrot.lane.b32.xlu0 %v4017, 8
  %v4027 = vpop.permute.xlu0 %4026
  %4028 = vrot.lane.b32.xlu0 %v4018, 8
  %v4029 = vpop.permute.xlu0 %4028
  %4030 = vrot.lane.b32.xlu0 %v4019, 8
  %v4031 = vpop.permute.xlu0 %4030
  %v4036 = vadd.f32 %v3988, %v4025
  %v4037 = vadd.f32 %v3989, %v4027
  %v4038 = vadd.f32 %v3990, %v4029
  %v4039 = vadd.f32 %v3991, %v4031
  %v4040 = vld [vmem:[%s2496] sm:$0xff]
  %v4041 = vld [vmem:[%s2496 + $0x8] sm:$0xff]
  %v4042 = vld [vmem:[%s2496 + $0x10] sm:$0xff]
  %v4043 = vld [vmem:[%s2496 + $0x18] sm:$0xff]
  %4045 = vset.pattern.permute.xlu0 0
  %4046 = vperm.xlu0 %4045, %v4040
  %v4047 = vpop.permute.xlu0 %4046
  %4050 = vset.pattern.permute.xlu0 0
  %4051 = vperm.xlu0 %4050, %v4041
  %v4052 = vpop.permute.xlu0 %4051
  %4055 = vset.pattern.permute.xlu0 0
  %4056 = vperm.xlu0 %4055, %v4042
  %v4057 = vpop.permute.xlu0 %4056
  %4060 = vset.pattern.permute.xlu0 0
  %4061 = vperm.xlu0 %4060, %v4043
  %v4062 = vpop.permute.xlu0 %4061
  %v4064 = vmul.f32 %v4047, %v2352
  %v4065 = vmul.f32 %v4052, %v2353
  %v4066 = vmul.f32 %v4057, %v2354
  %v4067 = vmul.f32 %v4062, %v2355
  %v4068 = vadd.f32 %v4036, %v4064
  %v4069 = vadd.f32 %v4037, %v4065
  %v4070 = vadd.f32 %v4038, %v4066
  %v4071 = vadd.f32 %v4039, %v4067
  %v4072 = vld [vmem:[%s2558] sm:$0xff]
  %v4073 = vld [vmem:[%s2558 + $0x8] sm:$0xff]
  %v4074 = vld [vmem:[%s2558 + $0x10] sm:$0xff]
  %v4075 = vld [vmem:[%s2558 + $0x18] sm:$0xff]
  %4077 = vset.pattern.permute.xlu0 0
  %4078 = vperm.xlu0 %4077, %v4072
  %v4079 = vpop.permute.xlu0 %4078
  %4082 = vset.pattern.permute.xlu0 0
  %4083 = vperm.xlu0 %4082, %v4073
  %v4084 = vpop.permute.xlu0 %4083
  %4087 = vset.pattern.permute.xlu0 0
  %4088 = vperm.xlu0 %4087, %v4074
  %v4089 = vpop.permute.xlu0 %4088
  %4092 = vset.pattern.permute.xlu0 0
  %4093 = vperm.xlu0 %4092, %v4075
  %v4094 = vpop.permute.xlu0 %4093
  %v4096 = vmul.f32 %v4079, %v2414
  %v4097 = vmul.f32 %v4084, %v2415
  %v4098 = vmul.f32 %v4089, %v2416
  %v4099 = vmul.f32 %v4094, %v2417
  %4104 = vrot.lane.b32.xlu0 %v4096, 8
  %v4105 = vpop.permute.xlu0 %4104
  %4106 = vrot.lane.b32.xlu0 %v4097, 8
  %v4107 = vpop.permute.xlu0 %4106
  %4108 = vrot.lane.b32.xlu0 %v4098, 8
  %v4109 = vpop.permute.xlu0 %4108
  %4110 = vrot.lane.b32.xlu0 %v4099, 8
  %v4111 = vpop.permute.xlu0 %4110
  %v4116 = vadd.f32 %v4068, %v4105
  %v4117 = vadd.f32 %v4069, %v4107
  %v4118 = vadd.f32 %v4070, %v4109
  %v4119 = vadd.f32 %v4071, %v4111
  %v4120 = vsel %vm859, %v4116, 0.0
  %v4121 = vsel %vm859, %v4117, 0.0
  %v4122 = vadd.f32 %v4120, %v4121
  %v4123 = vsel %vm859, %v4118, 0.0
  %v4124 = vadd.f32 %v4122, %v4123
  %v4125 = vsel %vm859, %v4119, 0.0
  %v4126 = vadd.f32 %v4124, %v4125
  %v4127 = vrot.slane %v4126, 4
  %v4128 = vadd.f32 %v4126, %v4127
  %v4129 = vrot.slane %v4128, 2
  %v4130 = vadd.f32 %v4128, %v4129
  %v4131 = vrot.slane %v4130, 1
  %v4132 = vadd.f32 %v4130, %v4131
  %v4133 = vtanh.pop %v4132
  %4135 = vrot.lane.b32.xlu0 %v4133, 120
  %v4136 = vpop.permute.xlu0 %4135
  %4138 = vst.msk [vmem:[%s7 + $0x8] sm:$0x1] %vm2625, %v4136
  %v4139 = vld [vmem:[%s2631] sm:$0xff]
  %v4140 = vld [vmem:[%s2631 + $0x8] sm:$0xff]
  %v4141 = vld [vmem:[%s2631 + $0x10] sm:$0xff]
  %v4142 = vld [vmem:[%s2631 + $0x18] sm:$0xff]
  %4144 = vset.pattern.permute.xlu0 0
  %4145 = vperm.xlu0 %4144, %v4139
  %v4146 = vpop.permute.xlu0 %4145
  %4149 = vset.pattern.permute.xlu0 0
  %4150 = vperm.xlu0 %4149, %v4140
  %v4151 = vpop.permute.xlu0 %4150
  %4154 = vset.pattern.permute.xlu0 0
  %4155 = vperm.xlu0 %4154, %v4141
  %v4156 = vpop.permute.xlu0 %4155
  %4159 = vset.pattern.permute.xlu0 0
  %4160 = vperm.xlu0 %4159, %v4142
  %v4161 = vpop.permute.xlu0 %4160
  %v4163 = vmul.f32 %v4146, %v3455
  %v4164 = vmul.f32 %v4151, %v3456
  %v4165 = vmul.f32 %v4156, %v3457
  %v4166 = vmul.f32 %v4161, %v3458
  %v4167 = vadd.f32 %v4163, 0.0
  %v4168 = vadd.f32 %v4164, 0.0
  %v4169 = vadd.f32 %v4165, 0.0
  %v4170 = vadd.f32 %v4166, 0.0
  %v4171 = vld [vmem:[%s2664] sm:$0xff]
  %v4172 = vld [vmem:[%s2664 + $0x8] sm:$0xff]
  %v4173 = vld [vmem:[%s2664 + $0x10] sm:$0xff]
  %v4174 = vld [vmem:[%s2664 + $0x18] sm:$0xff]
  %4176 = vset.pattern.permute.xlu0 0
  %4177 = vperm.xlu0 %4176, %v4171
  %v4178 = vpop.permute.xlu0 %4177
  %4181 = vset.pattern.permute.xlu0 0
  %4182 = vperm.xlu0 %4181, %v4172
  %v4183 = vpop.permute.xlu0 %4182
  %4186 = vset.pattern.permute.xlu0 0
  %4187 = vperm.xlu0 %4186, %v4173
  %v4188 = vpop.permute.xlu0 %4187
  %4191 = vset.pattern.permute.xlu0 0
  %4192 = vperm.xlu0 %4191, %v4174
  %v4193 = vpop.permute.xlu0 %4192
  %v4195 = vmul.f32 %v4178, %v3239
  %v4196 = vmul.f32 %v4183, %v3240
  %v4197 = vmul.f32 %v4188, %v3241
  %v4198 = vmul.f32 %v4193, %v3242
  %v4199 = vadd.f32 %v4167, %v4195
  %v4200 = vadd.f32 %v4168, %v4196
  %v4201 = vadd.f32 %v4169, %v4197
  %v4202 = vadd.f32 %v4170, %v4198
  %v4203 = vld [vmem:[%s2726] sm:$0xff]
  %v4204 = vld [vmem:[%s2726 + $0x8] sm:$0xff]
  %v4205 = vld [vmem:[%s2726 + $0x10] sm:$0xff]
  %v4206 = vld [vmem:[%s2726 + $0x18] sm:$0xff]
  %4208 = vset.pattern.permute.xlu0 0
  %4209 = vperm.xlu0 %4208, %v4203
  %v4210 = vpop.permute.xlu0 %4209
  %4213 = vset.pattern.permute.xlu0 0
  %4214 = vperm.xlu0 %4213, %v4204
  %v4215 = vpop.permute.xlu0 %4214
  %4218 = vset.pattern.permute.xlu0 0
  %4219 = vperm.xlu0 %4218, %v4205
  %v4220 = vpop.permute.xlu0 %4219
  %4223 = vset.pattern.permute.xlu0 0
  %4224 = vperm.xlu0 %4223, %v4206
  %v4225 = vpop.permute.xlu0 %4224
  %v4227 = vmul.f32 %v4210, %v2627
  %v4228 = vmul.f32 %v4215, %v2628
  %v4229 = vmul.f32 %v4220, %v2629
  %v4230 = vmul.f32 %v4225, %v2630
  %v4231 = vadd.f32 %v4199, %v4227
  %v4232 = vadd.f32 %v4200, %v4228
  %v4233 = vadd.f32 %v4201, %v4229
  %v4234 = vadd.f32 %v4202, %v4230
  %v4235 = vld [vmem:[%s2775] sm:$0xff]
  %v4236 = vld [vmem:[%s2775 + $0x8] sm:$0xff]
  %v4237 = vld [vmem:[%s2775 + $0x10] sm:$0xff]
  %v4238 = vld [vmem:[%s2775 + $0x18] sm:$0xff]
  %4240 = vset.pattern.permute.xlu0 0
  %4241 = vperm.xlu0 %4240, %v4235
  %v4242 = vpop.permute.xlu0 %4241
  %4245 = vset.pattern.permute.xlu0 0
  %4246 = vperm.xlu0 %4245, %v4236
  %v4247 = vpop.permute.xlu0 %4246
  %4250 = vset.pattern.permute.xlu0 0
  %4251 = vperm.xlu0 %4250, %v4237
  %v4252 = vpop.permute.xlu0 %4251
  %4255 = vset.pattern.permute.xlu0 0
  %4256 = vperm.xlu0 %4255, %v4238
  %v4257 = vpop.permute.xlu0 %4256
  %v4259 = vmul.f32 %v4242, %v2352
  %v4260 = vmul.f32 %v4247, %v2353
  %v4261 = vmul.f32 %v4252, %v2354
  %v4262 = vmul.f32 %v4257, %v2355
  %v4263 = vadd.f32 %v4231, %v4259
  %v4264 = vadd.f32 %v4232, %v4260
  %v4265 = vadd.f32 %v4233, %v4261
  %v4266 = vadd.f32 %v4234, %v4262
  %v4267 = vsel %vm859, %v4263, 0.0
  %v4268 = vsel %vm859, %v4264, 0.0
  %v4269 = vadd.f32 %v4267, %v4268
  %v4270 = vsel %vm859, %v4265, 0.0
  %v4271 = vadd.f32 %v4269, %v4270
  %v4272 = vsel %vm859, %v4266, 0.0
  %v4273 = vadd.f32 %v4271, %v4272
  %v4274 = vrot.slane %v4273, 4
  %v4275 = vadd.f32 %v4273, %v4274
  %v4276 = vrot.slane %v4275, 2
  %v4277 = vadd.f32 %v4275, %v4276
  %v4278 = vrot.slane %v4277, 1
  %v4279 = vadd.f32 %v4277, %v4278
  %v4280 = vtanh.pop %v4279
  %4282 = vrot.lane.b32.xlu0 %v4280, 120
  %v4283 = vpop.permute.xlu0 %4282
  %4285 = vst.msk [vmem:[%s7 + $0x9] sm:$0x1] %vm2625, %v4283
  %v4286 = vld [vmem:[%s2356] sm:$0xff]
  %v4287 = vld [vmem:[%s2356 + $0x8] sm:$0xff]
  %v4288 = vld [vmem:[%s2356 + $0x10] sm:$0xff]
  %v4289 = vld [vmem:[%s2356 + $0x18] sm:$0xff]
  %4291 = vset.pattern.permute.xlu0 0
  %4292 = vperm.xlu0 %4291, %v4286
  %v4293 = vpop.permute.xlu0 %4292
  %4296 = vset.pattern.permute.xlu0 0
  %4297 = vperm.xlu0 %4296, %v4287
  %v4298 = vpop.permute.xlu0 %4297
  %4301 = vset.pattern.permute.xlu0 0
  %4302 = vperm.xlu0 %4301, %v4288
  %v4303 = vpop.permute.xlu0 %4302
  %4306 = vset.pattern.permute.xlu0 0
  %4307 = vperm.xlu0 %4306, %v4289
  %v4308 = vpop.permute.xlu0 %4307
  %v4310 = vmul.f32 %v4293, %v3455
  %v4311 = vmul.f32 %v4298, %v3456
  %v4312 = vmul.f32 %v4303, %v3457
  %v4313 = vmul.f32 %v4308, %v3458
  %v4314 = vadd.f32 %v4310, 0.0
  %v4315 = vadd.f32 %v4311, 0.0
  %v4316 = vadd.f32 %v4312, 0.0
  %v4317 = vadd.f32 %v4313, 0.0
  %v4318 = vld [vmem:[%s2418] sm:$0xff]
  %v4319 = vld [vmem:[%s2418 + $0x8] sm:$0xff]
  %v4320 = vld [vmem:[%s2418 + $0x10] sm:$0xff]
  %v4321 = vld [vmem:[%s2418 + $0x18] sm:$0xff]
  %4323 = vset.pattern.permute.xlu0 0
  %4324 = vperm.xlu0 %4323, %v4318
  %v4325 = vpop.permute.xlu0 %4324
  %4328 = vset.pattern.permute.xlu0 0
  %4329 = vperm.xlu0 %4328, %v4319
  %v4330 = vpop.permute.xlu0 %4329
  %4333 = vset.pattern.permute.xlu0 0
  %4334 = vperm.xlu0 %4333, %v4320
  %v4335 = vpop.permute.xlu0 %4334
  %4338 = vset.pattern.permute.xlu0 0
  %4339 = vperm.xlu0 %4338, %v4321
  %v4340 = vpop.permute.xlu0 %4339
  %v4342 = vmul.f32 %v4325, %v3239
  %v4343 = vmul.f32 %v4330, %v3240
  %v4344 = vmul.f32 %v4335, %v3241
  %v4345 = vmul.f32 %v4340, %v3242
  %v4346 = vadd.f32 %v4314, %v4342
  %v4347 = vadd.f32 %v4315, %v4343
  %v4348 = vadd.f32 %v4316, %v4344
  %v4349 = vadd.f32 %v4317, %v4345
  %v4350 = vld [vmem:[%s2496] sm:$0xff]
  %v4351 = vld [vmem:[%s2496 + $0x8] sm:$0xff]
  %v4352 = vld [vmem:[%s2496 + $0x10] sm:$0xff]
  %v4353 = vld [vmem:[%s2496 + $0x18] sm:$0xff]
  %4355 = vset.pattern.permute.xlu0 0
  %4356 = vperm.xlu0 %4355, %v4350
  %v4357 = vpop.permute.xlu0 %4356
  %4360 = vset.pattern.permute.xlu0 0
  %4361 = vperm.xlu0 %4360, %v4351
  %v4362 = vpop.permute.xlu0 %4361
  %4365 = vset.pattern.permute.xlu0 0
  %4366 = vperm.xlu0 %4365, %v4352
  %v4367 = vpop.permute.xlu0 %4366
  %4370 = vset.pattern.permute.xlu0 0
  %4371 = vperm.xlu0 %4370, %v4353
  %v4372 = vpop.permute.xlu0 %4371
  %v4374 = vmul.f32 %v4357, %v2627
  %v4375 = vmul.f32 %v4362, %v2628
  %v4376 = vmul.f32 %v4367, %v2629
  %v4377 = vmul.f32 %v4372, %v2630
  %v4378 = vadd.f32 %v4346, %v4374
  %v4379 = vadd.f32 %v4347, %v4375
  %v4380 = vadd.f32 %v4348, %v4376
  %v4381 = vadd.f32 %v4349, %v4377
  %v4382 = vld [vmem:[%s2558] sm:$0xff]
  %v4383 = vld [vmem:[%s2558 + $0x8] sm:$0xff]
  %v4384 = vld [vmem:[%s2558 + $0x10] sm:$0xff]
  %v4385 = vld [vmem:[%s2558 + $0x18] sm:$0xff]
  %4387 = vset.pattern.permute.xlu0 0
  %4388 = vperm.xlu0 %4387, %v4382
  %v4389 = vpop.permute.xlu0 %4388
  %4392 = vset.pattern.permute.xlu0 0
  %4393 = vperm.xlu0 %4392, %v4383
  %v4394 = vpop.permute.xlu0 %4393
  %4397 = vset.pattern.permute.xlu0 0
  %4398 = vperm.xlu0 %4397, %v4384
  %v4399 = vpop.permute.xlu0 %4398
  %4402 = vset.pattern.permute.xlu0 0
  %4403 = vperm.xlu0 %4402, %v4385
  %v4404 = vpop.permute.xlu0 %4403
  %v4406 = vmul.f32 %v4389, %v2352
  %v4407 = vmul.f32 %v4394, %v2353
  %v4408 = vmul.f32 %v4399, %v2354
  %v4409 = vmul.f32 %v4404, %v2355
  %v4410 = vadd.f32 %v4378, %v4406
  %v4411 = vadd.f32 %v4379, %v4407
  %v4412 = vadd.f32 %v4380, %v4408
  %v4413 = vadd.f32 %v4381, %v4409
  %v4414 = vsel %vm859, %v4410, 0.0
  %v4415 = vsel %vm859, %v4411, 0.0
  %v4416 = vadd.f32 %v4414, %v4415
  %v4417 = vsel %vm859, %v4412, 0.0
  %v4418 = vadd.f32 %v4416, %v4417
  %v4419 = vsel %vm859, %v4413, 0.0
  %v4420 = vadd.f32 %v4418, %v4419
  %v4421 = vrot.slane %v4420, 4
  %v4422 = vadd.f32 %v4420, %v4421
  %v4423 = vrot.slane %v4422, 2
  %v4424 = vadd.f32 %v4422, %v4423
  %v4425 = vrot.slane %v4424, 1
  %v4426 = vadd.f32 %v4424, %v4425
  %v4427 = vtanh.pop %v4426
  %4429 = vrot.lane.b32.xlu0 %v4427, 120
  %v4430 = vpop.permute.xlu0 %4429
  %4432 = vst.msk [vmem:[%s7 + $0xa] sm:$0x1] %vm2625, %v4430
  %v4433 = vld [vmem:[%s2631] sm:$0xff]
  %v4434 = vld [vmem:[%s2631 + $0x8] sm:$0xff]
  %v4435 = vld [vmem:[%s2631 + $0x10] sm:$0xff]
  %v4436 = vld [vmem:[%s2631 + $0x18] sm:$0xff]
  %4438 = vset.pattern.permute.xlu0 0
  %4439 = vperm.xlu0 %4438, %v4433
  %v4440 = vpop.permute.xlu0 %4439
  %4443 = vset.pattern.permute.xlu0 0
  %4444 = vperm.xlu0 %4443, %v4434
  %v4445 = vpop.permute.xlu0 %4444
  %4448 = vset.pattern.permute.xlu0 0
  %4449 = vperm.xlu0 %4448, %v4435
  %v4450 = vpop.permute.xlu0 %4449
  %4453 = vset.pattern.permute.xlu0 0
  %4454 = vperm.xlu0 %4453, %v4436
  %v4455 = vpop.permute.xlu0 %4454
  %v4457 = vmul.f32 %v4440, %v3781
  %v4458 = vmul.f32 %v4445, %v3782
  %v4459 = vmul.f32 %v4450, %v3783
  %v4460 = vmul.f32 %v4455, %v3784
  %v4461 = vadd.f32 %v4457, 0.0
  %v4462 = vadd.f32 %v4458, 0.0
  %v4463 = vadd.f32 %v4459, 0.0
  %v4464 = vadd.f32 %v4460, 0.0
  %v4465 = vld [vmem:[%s2664] sm:$0xff]
  %v4466 = vld [vmem:[%s2664 + $0x8] sm:$0xff]
  %v4467 = vld [vmem:[%s2664 + $0x10] sm:$0xff]
  %v4468 = vld [vmem:[%s2664 + $0x18] sm:$0xff]
  %4470 = vset.pattern.permute.xlu0 0
  %4471 = vperm.xlu0 %4470, %v4465
  %v4472 = vpop.permute.xlu0 %4471
  %4475 = vset.pattern.permute.xlu0 0
  %4476 = vperm.xlu0 %4475, %v4466
  %v4477 = vpop.permute.xlu0 %4476
  %4480 = vset.pattern.permute.xlu0 0
  %4481 = vperm.xlu0 %4480, %v4467
  %v4482 = vpop.permute.xlu0 %4481
  %4485 = vset.pattern.permute.xlu0 0
  %4486 = vperm.xlu0 %4485, %v4468
  %v4487 = vpop.permute.xlu0 %4486
  %v4489 = vmul.f32 %v4472, %v3455
  %v4490 = vmul.f32 %v4477, %v3456
  %v4491 = vmul.f32 %v4482, %v3457
  %v4492 = vmul.f32 %v4487, %v3458
  %4497 = vrot.lane.b32.xlu0 %v4489, 120
  %v4498 = vpop.permute.xlu0 %4497
  %4499 = vrot.lane.b32.xlu0 %v4490, 120
  %v4500 = vpop.permute.xlu0 %4499
  %4501 = vrot.lane.b32.xlu0 %v4491, 120
  %v4502 = vpop.permute.xlu0 %4501
  %4503 = vrot.lane.b32.xlu0 %v4492, 120
  %v4504 = vpop.permute.xlu0 %4503
  %v4509 = vadd.f32 %v4461, %v4498
  %v4510 = vadd.f32 %v4462, %v4500
  %v4511 = vadd.f32 %v4463, %v4502
  %v4512 = vadd.f32 %v4464, %v4504
  %v4513 = vld [vmem:[%s2726] sm:$0xff]
  %v4514 = vld [vmem:[%s2726 + $0x8] sm:$0xff]
  %v4515 = vld [vmem:[%s2726 + $0x10] sm:$0xff]
  %v4516 = vld [vmem:[%s2726 + $0x18] sm:$0xff]
  %4518 = vset.pattern.permute.xlu0 0
  %4519 = vperm.xlu0 %4518, %v4513
  %v4520 = vpop.permute.xlu0 %4519
  %4523 = vset.pattern.permute.xlu0 0
  %4524 = vperm.xlu0 %4523, %v4514
  %v4525 = vpop.permute.xlu0 %4524
  %4528 = vset.pattern.permute.xlu0 0
  %4529 = vperm.xlu0 %4528, %v4515
  %v4530 = vpop.permute.xlu0 %4529
  %4533 = vset.pattern.permute.xlu0 0
  %4534 = vperm.xlu0 %4533, %v4516
  %v4535 = vpop.permute.xlu0 %4534
  %v4537 = vmul.f32 %v4520, %v3047
  %v4538 = vmul.f32 %v4525, %v3048
  %v4539 = vmul.f32 %v4530, %v3049
  %v4540 = vmul.f32 %v4535, %v3050
  %v4541 = vadd.f32 %v4509, %v4537
  %v4542 = vadd.f32 %v4510, %v4538
  %v4543 = vadd.f32 %v4511, %v4539
  %v4544 = vadd.f32 %v4512, %v4540
  %v4545 = vld [vmem:[%s2775] sm:$0xff]
  %v4546 = vld [vmem:[%s2775 + $0x8] sm:$0xff]
  %v4547 = vld [vmem:[%s2775 + $0x10] sm:$0xff]
  %v4548 = vld [vmem:[%s2775 + $0x18] sm:$0xff]
  %4550 = vset.pattern.permute.xlu0 0
  %4551 = vperm.xlu0 %4550, %v4545
  %v4552 = vpop.permute.xlu0 %4551
  %4555 = vset.pattern.permute.xlu0 0
  %4556 = vperm.xlu0 %4555, %v4546
  %v4557 = vpop.permute.xlu0 %4556
  %4560 = vset.pattern.permute.xlu0 0
  %4561 = vperm.xlu0 %4560, %v4547
  %v4562 = vpop.permute.xlu0 %4561
  %4565 = vset.pattern.permute.xlu0 0
  %4566 = vperm.xlu0 %4565, %v4548
  %v4567 = vpop.permute.xlu0 %4566
  %v4569 = vmul.f32 %v4552, %v2627
  %v4570 = vmul.f32 %v4557, %v2628
  %v4571 = vmul.f32 %v4562, %v2629
  %v4572 = vmul.f32 %v4567, %v2630
  %4577 = vrot.lane.b32.xlu0 %v4569, 120
  %v4578 = vpop.permute.xlu0 %4577
  %4579 = vrot.lane.b32.xlu0 %v4570, 120
  %v4580 = vpop.permute.xlu0 %4579
  %4581 = vrot.lane.b32.xlu0 %v4571, 120
  %v4582 = vpop.permute.xlu0 %4581
  %4583 = vrot.lane.b32.xlu0 %v4572, 120
  %v4584 = vpop.permute.xlu0 %4583
  %v4589 = vadd.f32 %v4541, %v4578
  %v4590 = vadd.f32 %v4542, %v4580
  %v4591 = vadd.f32 %v4543, %v4582
  %v4592 = vadd.f32 %v4544, %v4584
  %v4593 = vsel %vm482, %v4589, 0.0
  %v4594 = vsel %vm482, %v4590, 0.0
  %v4595 = vadd.f32 %v4593, %v4594
  %v4596 = vsel %vm482, %v4591, 0.0
  %v4597 = vadd.f32 %v4595, %v4596
  %v4598 = vsel %vm482, %v4592, 0.0
  %v4599 = vadd.f32 %v4597, %v4598
  %v4600 = vrot.slane %v4599, 4
  %v4601 = vadd.f32 %v4599, %v4600
  %v4602 = vrot.slane %v4601, 2
  %v4603 = vadd.f32 %v4601, %v4602
  %v4604 = vrot.slane %v4603, 1
  %v4605 = vadd.f32 %v4603, %v4604
  %v4606 = vtanh.pop %v4605
  %4607 = vst.msk [vmem:[%s7 + $0xb] sm:$0x1] %vm2625, %v4606
  %v4608 = vld [vmem:[#allocation3] sm:$0xff]
  %v4609 = vld [vmem:[#allocation3 + $0x8] sm:$0xff]
  %v4610 = vld [vmem:[#allocation3 + $0x10] sm:$0xff]
  %v4611 = vld [vmem:[#allocation3 + $0x18] sm:$0xff]
  %v4612 = vld [vmem:[%s6 + $0x7] sm:$0x1]
  %vm4613 = vcmp.gt.f32.partialorder %v4612, 0.5
  %v4614 = vsel %vm4613, 1, 0
  %v4615 = vperm.slane %v4614, 0
  %vm4616 = vcmp.eq.s32.totalorder %v4615, 1
  %4621 = vrot.lane.b32.xlu0 %v4608, 113
  %v4622 = vpop.permute.xlu0 %4621
  %4623 = vrot.lane.b32.xlu0 %v4609, 113
  %v4624 = vpop.permute.xlu0 %4623
  %4625 = vrot.lane.b32.xlu0 %v4610, 113
  %v4626 = vpop.permute.xlu0 %4625
  %4627 = vrot.lane.b32.xlu0 %v4611, 113
  %v4628 = vpop.permute.xlu0 %4627
  %v4633 = vsel %vm4616, %v4622, 0.0
  %v4634 = vsel %vm4616, %v4624, 0.0
  %v4635 = vsel %vm4616, %v4626, 0.0
  %v4636 = vsel %vm4616, %v4628, 0.0
  %v4637 = vld [vmem:[%s3243] sm:$0xff]
  %v4638 = vld [vmem:[%s3243 + $0x8] sm:$0xff]
  %v4639 = vld [vmem:[%s3243 + $0x10] sm:$0xff]
  %v4640 = vld [vmem:[%s3243 + $0x18] sm:$0xff]
  %4642 = vset.pattern.permute.xlu0 0
  %4643 = vperm.xlu0 %4642, %v4637
  %v4644 = vpop.permute.xlu0 %4643
  %4647 = vset.pattern.permute.xlu0 0
  %4648 = vperm.xlu0 %4647, %v4638
  %v4649 = vpop.permute.xlu0 %4648
  %4652 = vset.pattern.permute.xlu0 0
  %4653 = vperm.xlu0 %4652, %v4639
  %v4654 = vpop.permute.xlu0 %4653
  %4657 = vset.pattern.permute.xlu0 0
  %4658 = vperm.xlu0 %4657, %v4640
  %v4659 = vpop.permute.xlu0 %4658
  %v4661 = vmul.f32 %v4644, %v4633
  %v4662 = vmul.f32 %v4649, %v4634
  %v4663 = vmul.f32 %v4654, %v4635
  %v4664 = vmul.f32 %v4659, %v4636
  %v4665 = vadd.f32 %v4661, 0.0
  %v4666 = vadd.f32 %v4662, 0.0
  %v4667 = vadd.f32 %v4663, 0.0
  %v4668 = vadd.f32 %v4664, 0.0
  %v4669 = vld [vmem:[#allocation4] sm:$0xff]
  %v4670 = vld [vmem:[#allocation4 + $0x8] sm:$0xff]
  %v4671 = vld [vmem:[#allocation4 + $0x10] sm:$0xff]
  %v4672 = vld [vmem:[#allocation4 + $0x18] sm:$0xff]
  %v4673 = vld [vmem:[%s6 + $0x6] sm:$0x1]
  %vm4674 = vcmp.gt.f32.partialorder %v4673, 0.5
  %v4675 = vsel %vm4674, 1, 0
  %v4676 = vperm.slane %v4675, 0
  %vm4677 = vcmp.eq.s32.totalorder %v4676, 1
  %4682 = vrot.lane.b32.xlu0 %v4669, 114
  %v4683 = vpop.permute.xlu0 %4682
  %4684 = vrot.lane.b32.xlu0 %v4670, 114
  %v4685 = vpop.permute.xlu0 %4684
  %4686 = vrot.lane.b32.xlu0 %v4671, 114
  %v4687 = vpop.permute.xlu0 %4686
  %4688 = vrot.lane.b32.xlu0 %v4672, 114
  %v4689 = vpop.permute.xlu0 %4688
  %v4694 = vsel %vm4677, %v4683, 0.0
  %v4695 = vsel %vm4677, %v4685, 0.0
  %v4696 = vsel %vm4677, %v4687, 0.0
  %v4697 = vsel %vm4677, %v4689, 0.0
  %v4698 = vld [vmem:[%s3305] sm:$0xff]
  %v4699 = vld [vmem:[%s3305 + $0x8] sm:$0xff]
  %v4700 = vld [vmem:[%s3305 + $0x10] sm:$0xff]
  %v4701 = vld [vmem:[%s3305 + $0x18] sm:$0xff]
  %4703 = vset.pattern.permute.xlu0 0
  %4704 = vperm.xlu0 %4703, %v4698
  %v4705 = vpop.permute.xlu0 %4704
  %4708 = vset.pattern.permute.xlu0 0
  %4709 = vperm.xlu0 %4708, %v4699
  %v4710 = vpop.permute.xlu0 %4709
  %4713 = vset.pattern.permute.xlu0 0
  %4714 = vperm.xlu0 %4713, %v4700
  %v4715 = vpop.permute.xlu0 %4714
  %4718 = vset.pattern.permute.xlu0 0
  %4719 = vperm.xlu0 %4718, %v4701
  %v4720 = vpop.permute.xlu0 %4719
  %v4722 = vmul.f32 %v4705, %v4694
  %v4723 = vmul.f32 %v4710, %v4695
  %v4724 = vmul.f32 %v4715, %v4696
  %v4725 = vmul.f32 %v4720, %v4697
  %v4726 = vadd.f32 %v4665, %v4722
  %v4727 = vadd.f32 %v4666, %v4723
  %v4728 = vadd.f32 %v4667, %v4724
  %v4729 = vadd.f32 %v4668, %v4725
  %v4730 = vld [vmem:[%s3354] sm:$0xff]
  %v4731 = vld [vmem:[%s3354 + $0x8] sm:$0xff]
  %v4732 = vld [vmem:[%s3354 + $0x10] sm:$0xff]
  %v4733 = vld [vmem:[%s3354 + $0x18] sm:$0xff]
  %4735 = vset.pattern.permute.xlu0 0
  %4736 = vperm.xlu0 %4735, %v4730
  %v4737 = vpop.permute.xlu0 %4736
  %4740 = vset.pattern.permute.xlu0 0
  %4741 = vperm.xlu0 %4740, %v4731
  %v4742 = vpop.permute.xlu0 %4741
  %4745 = vset.pattern.permute.xlu0 0
  %4746 = vperm.xlu0 %4745, %v4732
  %v4747 = vpop.permute.xlu0 %4746
  %4750 = vset.pattern.permute.xlu0 0
  %4751 = vperm.xlu0 %4750, %v4733
  %v4752 = vpop.permute.xlu0 %4751
  %v4754 = vmul.f32 %v4737, %v3239
  %v4755 = vmul.f32 %v4742, %v3240
  %v4756 = vmul.f32 %v4747, %v3241
  %v4757 = vmul.f32 %v4752, %v3242
  %4762 = vrot.lane.b32.xlu0 %v4754, 120
  %v4763 = vpop.permute.xlu0 %4762
  %4764 = vrot.lane.b32.xlu0 %v4755, 120
  %v4765 = vpop.permute.xlu0 %4764
  %4766 = vrot.lane.b32.xlu0 %v4756, 120
  %v4767 = vpop.permute.xlu0 %4766
  %4768 = vrot.lane.b32.xlu0 %v4757, 120
  %v4769 = vpop.permute.xlu0 %4768
  %v4774 = vadd.f32 %v4726, %v4763
  %v4775 = vadd.f32 %v4727, %v4765
  %v4776 = vadd.f32 %v4728, %v4767
  %v4777 = vadd.f32 %v4729, %v4769
  %v4778 = vld [vmem:[%s3387] sm:$0xff]
  %v4779 = vld [vmem:[%s3387 + $0x8] sm:$0xff]
  %v4780 = vld [vmem:[%s3387 + $0x10] sm:$0xff]
  %v4781 = vld [vmem:[%s3387 + $0x18] sm:$0xff]
  %4783 = vset.pattern.permute.xlu0 0
  %4784 = vperm.xlu0 %4783, %v4778
  %v4785 = vpop.permute.xlu0 %4784
  %4788 = vset.pattern.permute.xlu0 0
  %4789 = vperm.xlu0 %4788, %v4779
  %v4790 = vpop.permute.xlu0 %4789
  %4793 = vset.pattern.permute.xlu0 0
  %4794 = vperm.xlu0 %4793, %v4780
  %v4795 = vpop.permute.xlu0 %4794
  %4798 = vset.pattern.permute.xlu0 0
  %4799 = vperm.xlu0 %4798, %v4781
  %v4800 = vpop.permute.xlu0 %4799
  %v4802 = vmul.f32 %v4785, %v3301
  %v4803 = vmul.f32 %v4790, %v3302
  %v4804 = vmul.f32 %v4795, %v3303
  %v4805 = vmul.f32 %v4800, %v3304
  %v4806 = vadd.f32 %v4774, %v4802
  %v4807 = vadd.f32 %v4775, %v4803
  %v4808 = vadd.f32 %v4776, %v4804
  %v4809 = vadd.f32 %v4777, %v4805
  %v4810 = vsel %vm482, %v4806, 0.0
  %v4811 = vsel %vm482, %v4807, 0.0
  %v4812 = vadd.f32 %v4810, %v4811
  %v4813 = vsel %vm482, %v4808, 0.0
  %v4814 = vadd.f32 %v4812, %v4813
  %v4815 = vsel %vm482, %v4809, 0.0
  %v4816 = vadd.f32 %v4814, %v4815
  %v4817 = vrot.slane %v4816, 4
  %v4818 = vadd.f32 %v4816, %v4817
  %v4819 = vrot.slane %v4818, 2
  %v4820 = vadd.f32 %v4818, %v4819
  %v4821 = vrot.slane %v4820, 1
  %v4822 = vadd.f32 %v4820, %v4821
  %v4823 = vtanh.pop %v4822
  %4824 = vst.msk [vmem:[%s7 + $0xc] sm:$0x1] %vm2625, %v4823
  %v4825 = vld [vmem:[#allocation4] sm:$0xff]
  %v4826 = vld [vmem:[#allocation4 + $0x8] sm:$0xff]
  %v4827 = vld [vmem:[#allocation4 + $0x10] sm:$0xff]
  %v4828 = vld [vmem:[#allocation4 + $0x18] sm:$0xff]
  %v4829 = vld [vmem:[%s6 + $0x7] sm:$0x1]
  %vm4830 = vcmp.gt.f32.partialorder %v4829, 0.5
  %v4831 = vsel %vm4830, 1, 0
  %v4832 = vperm.slane %v4831, 0
  %vm4833 = vcmp.eq.s32.totalorder %v4832, 1
  %4838 = vrot.lane.b32.xlu0 %v4825, 113
  %v4839 = vpop.permute.xlu0 %4838
  %4840 = vrot.lane.b32.xlu0 %v4826, 113
  %v4841 = vpop.permute.xlu0 %4840
  %4842 = vrot.lane.b32.xlu0 %v4827, 113
  %v4843 = vpop.permute.xlu0 %4842
  %4844 = vrot.lane.b32.xlu0 %v4828, 113
  %v4845 = vpop.permute.xlu0 %4844
  %v4850 = vsel %vm4833, %v4839, 0.0
  %v4851 = vsel %vm4833, %v4841, 0.0
  %v4852 = vsel %vm4833, %v4843, 0.0
  %v4853 = vsel %vm4833, %v4845, 0.0
  %v4854 = vld [vmem:[%s3] sm:$0xff]
  %v4855 = vld [vmem:[%s3 + $0x8] sm:$0xff]
  %v4856 = vld [vmem:[%s3 + $0x10] sm:$0xff]
  %v4857 = vld [vmem:[%s3 + $0x18] sm:$0xff]
  %4859 = vset.pattern.permute.xlu0 0
  %4860 = vperm.xlu0 %4859, %v4854
  %v4861 = vpop.permute.xlu0 %4860
  %4864 = vset.pattern.permute.xlu0 0
  %4865 = vperm.xlu0 %4864, %v4855
  %v4866 = vpop.permute.xlu0 %4865
  %4869 = vset.pattern.permute.xlu0 0
  %4870 = vperm.xlu0 %4869, %v4856
  %v4871 = vpop.permute.xlu0 %4870
  %4874 = vset.pattern.permute.xlu0 0
  %4875 = vperm.xlu0 %4874, %v4857
  %v4876 = vpop.permute.xlu0 %4875
  %v4878 = vmul.f32 %v4861, %v4850
  %v4879 = vmul.f32 %v4866, %v4851
  %v4880 = vmul.f32 %v4871, %v4852
  %v4881 = vmul.f32 %v4876, %v4853
  %v4882 = vadd.f32 %v4878, 0.0
  %v4883 = vadd.f32 %v4879, 0.0
  %v4884 = vadd.f32 %v4880, 0.0
  %v4885 = vadd.f32 %v4881, 0.0
  %v4886 = vld [vmem:[%s3491] sm:$0xff]
  %v4887 = vld [vmem:[%s3491 + $0x8] sm:$0xff]
  %v4888 = vld [vmem:[%s3491 + $0x10] sm:$0xff]
  %v4889 = vld [vmem:[%s3491 + $0x18] sm:$0xff]
  %4891 = vset.pattern.permute.xlu0 0
  %4892 = vperm.xlu0 %4891, %v4886
  %v4893 = vpop.permute.xlu0 %4892
  %4896 = vset.pattern.permute.xlu0 0
  %4897 = vperm.xlu0 %4896, %v4887
  %v4898 = vpop.permute.xlu0 %4897
  %4901 = vset.pattern.permute.xlu0 0
  %4902 = vperm.xlu0 %4901, %v4888
  %v4903 = vpop.permute.xlu0 %4902
  %4906 = vset.pattern.permute.xlu0 0
  %4907 = vperm.xlu0 %4906, %v4889
  %v4908 = vpop.permute.xlu0 %4907
  %v4910 = vmul.f32 %v4893, %v4633
  %v4911 = vmul.f32 %v4898, %v4634
  %v4912 = vmul.f32 %v4903, %v4635
  %v4913 = vmul.f32 %v4908, %v4636
  %v4914 = vadd.f32 %v4882, %v4910
  %v4915 = vadd.f32 %v4883, %v4911
  %v4916 = vadd.f32 %v4884, %v4912
  %v4917 = vadd.f32 %v4885, %v4913
  %v4918 = vld [vmem:[%s3524] sm:$0xff]
  %v4919 = vld [vmem:[%s3524 + $0x8] sm:$0xff]
  %v4920 = vld [vmem:[%s3524 + $0x10] sm:$0xff]
  %v4921 = vld [vmem:[%s3524 + $0x18] sm:$0xff]
  %4923 = vset.pattern.permute.xlu0 0
  %4924 = vperm.xlu0 %4923, %v4918
  %v4925 = vpop.permute.xlu0 %4924
  %4928 = vset.pattern.permute.xlu0 0
  %4929 = vperm.xlu0 %4928, %v4919
  %v4930 = vpop.permute.xlu0 %4929
  %4933 = vset.pattern.permute.xlu0 0
  %4934 = vperm.xlu0 %4933, %v4920
  %v4935 = vpop.permute.xlu0 %4934
  %4938 = vset.pattern.permute.xlu0 0
  %4939 = vperm.xlu0 %4938, %v4921
  %v4940 = vpop.permute.xlu0 %4939
  %v4942 = vmul.f32 %v4925, %v3455
  %v4943 = vmul.f32 %v4930, %v3456
  %v4944 = vmul.f32 %v4935, %v3457
  %v4945 = vmul.f32 %v4940, %v3458
  %4950 = vrot.lane.b32.xlu0 %v4942, 120
  %v4951 = vpop.permute.xlu0 %4950
  %4952 = vrot.lane.b32.xlu0 %v4943, 120
  %v4953 = vpop.permute.xlu0 %4952
  %4954 = vrot.lane.b32.xlu0 %v4944, 120
  %v4955 = vpop.permute.xlu0 %4954
  %4956 = vrot.lane.b32.xlu0 %v4945, 120
  %v4957 = vpop.permute.xlu0 %4956
  %v4962 = vadd.f32 %v4914, %v4951
  %v4963 = vadd.f32 %v4915, %v4953
  %v4964 = vadd.f32 %v4916, %v4955
  %v4965 = vadd.f32 %v4917, %v4957
  %v4966 = vld [vmem:[%s3557] sm:$0xff]
  %v4967 = vld [vmem:[%s3557 + $0x8] sm:$0xff]
  %v4968 = vld [vmem:[%s3557 + $0x10] sm:$0xff]
  %v4969 = vld [vmem:[%s3557 + $0x18] sm:$0xff]
  %4971 = vset.pattern.permute.xlu0 0
  %4972 = vperm.xlu0 %4971, %v4966
  %v4973 = vpop.permute.xlu0 %4972
  %4976 = vset.pattern.permute.xlu0 0
  %4977 = vperm.xlu0 %4976, %v4967
  %v4978 = vpop.permute.xlu0 %4977
  %4981 = vset.pattern.permute.xlu0 0
  %4982 = vperm.xlu0 %4981, %v4968
  %v4983 = vpop.permute.xlu0 %4982
  %4986 = vset.pattern.permute.xlu0 0
  %4987 = vperm.xlu0 %4986, %v4969
  %v4988 = vpop.permute.xlu0 %4987
  %v4990 = vmul.f32 %v4973, %v3239
  %v4991 = vmul.f32 %v4978, %v3240
  %v4992 = vmul.f32 %v4983, %v3241
  %v4993 = vmul.f32 %v4988, %v3242
  %4998 = vrot.lane.b32.xlu0 %v4990, 120
  %v4999 = vpop.permute.xlu0 %4998
  %5000 = vrot.lane.b32.xlu0 %v4991, 120
  %v5001 = vpop.permute.xlu0 %5000
  %5002 = vrot.lane.b32.xlu0 %v4992, 120
  %v5003 = vpop.permute.xlu0 %5002
  %5004 = vrot.lane.b32.xlu0 %v4993, 120
  %v5005 = vpop.permute.xlu0 %5004
  %v5010 = vadd.f32 %v4962, %v4999
  %v5011 = vadd.f32 %v4963, %v5001
  %v5012 = vadd.f32 %v4964, %v5003
  %v5013 = vadd.f32 %v4965, %v5005
  %v5014 = vsel %vm482, %v5010, 0.0
  %v5015 = vsel %vm482, %v5011, 0.0
  %v5016 = vadd.f32 %v5014, %v5015
  %v5017 = vsel %vm482, %v5012, 0.0
  %v5018 = vadd.f32 %v5016, %v5017
  %v5019 = vsel %vm482, %v5013, 0.0
  %v5020 = vadd.f32 %v5018, %v5019
  %v5021 = vrot.slane %v5020, 4
  %v5022 = vadd.f32 %v5020, %v5021
  %v5023 = vrot.slane %v5022, 2
  %v5024 = vadd.f32 %v5022, %v5023
  %v5025 = vrot.slane %v5024, 1
  %v5026 = vadd.f32 %v5024, %v5025
  %v5027 = vtanh.pop %v5026
  %5028 = vst.msk [vmem:[%s7 + $0xd] sm:$0x1] %vm2625, %v5027
  %v5029 = vld [vmem:[%s3243] sm:$0xff]
  %v5030 = vld [vmem:[%s3243 + $0x8] sm:$0xff]
  %v5031 = vld [vmem:[%s3243 + $0x10] sm:$0xff]
  %v5032 = vld [vmem:[%s3243 + $0x18] sm:$0xff]
  %5034 = vset.pattern.permute.xlu0 0
  %5035 = vperm.xlu0 %5034, %v5029
  %v5036 = vpop.permute.xlu0 %5035
  %5039 = vset.pattern.permute.xlu0 0
  %5040 = vperm.xlu0 %5039, %v5030
  %v5041 = vpop.permute.xlu0 %5040
  %5044 = vset.pattern.permute.xlu0 0
  %5045 = vperm.xlu0 %5044, %v5031
  %v5046 = vpop.permute.xlu0 %5045
  %5049 = vset.pattern.permute.xlu0 0
  %5050 = vperm.xlu0 %5049, %v5032
  %v5051 = vpop.permute.xlu0 %5050
  %v5053 = vmul.f32 %v5036, %v4850
  %v5054 = vmul.f32 %v5041, %v4851
  %v5055 = vmul.f32 %v5046, %v4852
  %v5056 = vmul.f32 %v5051, %v4853
  %v5057 = vadd.f32 %v5053, 0.0
  %v5058 = vadd.f32 %v5054, 0.0
  %v5059 = vadd.f32 %v5055, 0.0
  %v5060 = vadd.f32 %v5056, 0.0
  %v5061 = vld [vmem:[%s3305] sm:$0xff]
  %v5062 = vld [vmem:[%s3305 + $0x8] sm:$0xff]
  %v5063 = vld [vmem:[%s3305 + $0x10] sm:$0xff]
  %v5064 = vld [vmem:[%s3305 + $0x18] sm:$0xff]
  %5066 = vset.pattern.permute.xlu0 0
  %5067 = vperm.xlu0 %5066, %v5061
  %v5068 = vpop.permute.xlu0 %5067
  %5071 = vset.pattern.permute.xlu0 0
  %5072 = vperm.xlu0 %5071, %v5062
  %v5073 = vpop.permute.xlu0 %5072
  %5076 = vset.pattern.permute.xlu0 0
  %5077 = vperm.xlu0 %5076, %v5063
  %v5078 = vpop.permute.xlu0 %5077
  %5081 = vset.pattern.permute.xlu0 0
  %5082 = vperm.xlu0 %5081, %v5064
  %v5083 = vpop.permute.xlu0 %5082
  %v5085 = vmul.f32 %v5068, %v4633
  %v5086 = vmul.f32 %v5073, %v4634
  %v5087 = vmul.f32 %v5078, %v4635
  %v5088 = vmul.f32 %v5083, %v4636
  %v5089 = vadd.f32 %v5057, %v5085
  %v5090 = vadd.f32 %v5058, %v5086
  %v5091 = vadd.f32 %v5059, %v5087
  %v5092 = vadd.f32 %v5060, %v5088
  %v5093 = vld [vmem:[%s3354] sm:$0xff]
  %v5094 = vld [vmem:[%s3354 + $0x8] sm:$0xff]
  %v5095 = vld [vmem:[%s3354 + $0x10] sm:$0xff]
  %v5096 = vld [vmem:[%s3354 + $0x18] sm:$0xff]
  %5098 = vset.pattern.permute.xlu0 0
  %5099 = vperm.xlu0 %5098, %v5093
  %v5100 = vpop.permute.xlu0 %5099
  %5103 = vset.pattern.permute.xlu0 0
  %5104 = vperm.xlu0 %5103, %v5094
  %v5105 = vpop.permute.xlu0 %5104
  %5108 = vset.pattern.permute.xlu0 0
  %5109 = vperm.xlu0 %5108, %v5095
  %v5110 = vpop.permute.xlu0 %5109
  %5113 = vset.pattern.permute.xlu0 0
  %5114 = vperm.xlu0 %5113, %v5096
  %v5115 = vpop.permute.xlu0 %5114
  %v5117 = vmul.f32 %v5100, %v3455
  %v5118 = vmul.f32 %v5105, %v3456
  %v5119 = vmul.f32 %v5110, %v3457
  %v5120 = vmul.f32 %v5115, %v3458
  %5125 = vrot.lane.b32.xlu0 %v5117, 120
  %v5126 = vpop.permute.xlu0 %5125
  %5127 = vrot.lane.b32.xlu0 %v5118, 120
  %v5128 = vpop.permute.xlu0 %5127
  %5129 = vrot.lane.b32.xlu0 %v5119, 120
  %v5130 = vpop.permute.xlu0 %5129
  %5131 = vrot.lane.b32.xlu0 %v5120, 120
  %v5132 = vpop.permute.xlu0 %5131
  %v5137 = vadd.f32 %v5089, %v5126
  %v5138 = vadd.f32 %v5090, %v5128
  %v5139 = vadd.f32 %v5091, %v5130
  %v5140 = vadd.f32 %v5092, %v5132
  %v5141 = vld [vmem:[%s3387] sm:$0xff]
  %v5142 = vld [vmem:[%s3387 + $0x8] sm:$0xff]
  %v5143 = vld [vmem:[%s3387 + $0x10] sm:$0xff]
  %v5144 = vld [vmem:[%s3387 + $0x18] sm:$0xff]
  %5146 = vset.pattern.permute.xlu0 0
  %5147 = vperm.xlu0 %5146, %v5141
  %v5148 = vpop.permute.xlu0 %5147
  %5151 = vset.pattern.permute.xlu0 0
  %5152 = vperm.xlu0 %5151, %v5142
  %v5153 = vpop.permute.xlu0 %5152
  %5156 = vset.pattern.permute.xlu0 0
  %5157 = vperm.xlu0 %5156, %v5143
  %v5158 = vpop.permute.xlu0 %5157
  %5161 = vset.pattern.permute.xlu0 0
  %5162 = vperm.xlu0 %5161, %v5144
  %v5163 = vpop.permute.xlu0 %5162
  %v5165 = vmul.f32 %v5148, %v3239
  %v5166 = vmul.f32 %v5153, %v3240
  %v5167 = vmul.f32 %v5158, %v3241
  %v5168 = vmul.f32 %v5163, %v3242
  %5173 = vrot.lane.b32.xlu0 %v5165, 120
  %v5174 = vpop.permute.xlu0 %5173
  %5175 = vrot.lane.b32.xlu0 %v5166, 120
  %v5176 = vpop.permute.xlu0 %5175
  %5177 = vrot.lane.b32.xlu0 %v5167, 120
  %v5178 = vpop.permute.xlu0 %5177
  %5179 = vrot.lane.b32.xlu0 %v5168, 120
  %v5180 = vpop.permute.xlu0 %5179
  %v5185 = vadd.f32 %v5137, %v5174
  %v5186 = vadd.f32 %v5138, %v5176
  %v5187 = vadd.f32 %v5139, %v5178
  %v5188 = vadd.f32 %v5140, %v5180
  %v5189 = vsel %vm482, %v5185, 0.0
  %v5190 = vsel %vm482, %v5186, 0.0
  %v5191 = vadd.f32 %v5189, %v5190
  %v5192 = vsel %vm482, %v5187, 0.0
  %v5193 = vadd.f32 %v5191, %v5192
  %v5194 = vsel %vm482, %v5188, 0.0
  %v5195 = vadd.f32 %v5193, %v5194
  %v5196 = vrot.slane %v5195, 4
  %v5197 = vadd.f32 %v5195, %v5196
  %v5198 = vrot.slane %v5197, 2
  %v5199 = vadd.f32 %v5197, %v5198
  %v5200 = vrot.slane %v5199, 1
  %v5201 = vadd.f32 %v5199, %v5200
  %v5202 = vtanh.pop %v5201
  %5203 = vst.msk [vmem:[%s7 + $0xe] sm:$0x1] %vm2625, %v5202
  %v5204 = vld [vmem:[#allocation3] sm:$0xff]
  %v5205 = vld [vmem:[#allocation3 + $0x8] sm:$0xff]
  %v5206 = vld [vmem:[#allocation3 + $0x10] sm:$0xff]
  %v5207 = vld [vmem:[#allocation3 + $0x18] sm:$0xff]
  %v5208 = vld [vmem:[%s6 + $0x8] sm:$0x1]
  %vm5209 = vcmp.gt.f32.partialorder %v5208, 0.5
  %v5210 = vsel %vm5209, 1, 0
  %v5211 = vperm.slane %v5210, 0
  %vm5212 = vcmp.eq.s32.totalorder %v5211, 1
  %5217 = vrot.lane.b32.xlu0 %v5204, 112
  %v5218 = vpop.permute.xlu0 %5217
  %5219 = vrot.lane.b32.xlu0 %v5205, 112
  %v5220 = vpop.permute.xlu0 %5219
  %5221 = vrot.lane.b32.xlu0 %v5206, 112
  %v5222 = vpop.permute.xlu0 %5221
  %5223 = vrot.lane.b32.xlu0 %v5207, 112
  %v5224 = vpop.permute.xlu0 %5223
  %v5229 = vsel %vm5212, %v5218, 0.0
  %v5230 = vsel %vm5212, %v5220, 0.0
  %v5231 = vsel %vm5212, %v5222, 0.0
  %v5232 = vsel %vm5212, %v5224, 0.0
  %v5233 = vld [vmem:[%s3] sm:$0xff]
  %v5234 = vld [vmem:[%s3 + $0x8] sm:$0xff]
  %v5235 = vld [vmem:[%s3 + $0x10] sm:$0xff]
  %v5236 = vld [vmem:[%s3 + $0x18] sm:$0xff]
  %5238 = vset.pattern.permute.xlu0 0
  %5239 = vperm.xlu0 %5238, %v5233
  %v5240 = vpop.permute.xlu0 %5239
  %5243 = vset.pattern.permute.xlu0 0
  %5244 = vperm.xlu0 %5243, %v5234
  %v5245 = vpop.permute.xlu0 %5244
  %5248 = vset.pattern.permute.xlu0 0
  %5249 = vperm.xlu0 %5248, %v5235
  %v5250 = vpop.permute.xlu0 %5249
  %5253 = vset.pattern.permute.xlu0 0
  %5254 = vperm.xlu0 %5253, %v5236
  %v5255 = vpop.permute.xlu0 %5254
  %v5257 = vmul.f32 %v5240, %v5229
  %v5258 = vmul.f32 %v5245, %v5230
  %v5259 = vmul.f32 %v5250, %v5231
  %v5260 = vmul.f32 %v5255, %v5232
  %v5261 = vadd.f32 %v5257, 0.0
  %v5262 = vadd.f32 %v5258, 0.0
  %v5263 = vadd.f32 %v5259, 0.0
  %v5264 = vadd.f32 %v5260, 0.0
  %v5265 = vld [vmem:[%s3491] sm:$0xff]
  %v5266 = vld [vmem:[%s3491 + $0x8] sm:$0xff]
  %v5267 = vld [vmem:[%s3491 + $0x10] sm:$0xff]
  %v5268 = vld [vmem:[%s3491 + $0x18] sm:$0xff]
  %5270 = vset.pattern.permute.xlu0 0
  %5271 = vperm.xlu0 %5270, %v5265
  %v5272 = vpop.permute.xlu0 %5271
  %5275 = vset.pattern.permute.xlu0 0
  %5276 = vperm.xlu0 %5275, %v5266
  %v5277 = vpop.permute.xlu0 %5276
  %5280 = vset.pattern.permute.xlu0 0
  %5281 = vperm.xlu0 %5280, %v5267
  %v5282 = vpop.permute.xlu0 %5281
  %5285 = vset.pattern.permute.xlu0 0
  %5286 = vperm.xlu0 %5285, %v5268
  %v5287 = vpop.permute.xlu0 %5286
  %v5289 = vmul.f32 %v5272, %v4850
  %v5290 = vmul.f32 %v5277, %v4851
  %v5291 = vmul.f32 %v5282, %v4852
  %v5292 = vmul.f32 %v5287, %v4853
  %v5293 = vadd.f32 %v5261, %v5289
  %v5294 = vadd.f32 %v5262, %v5290
  %v5295 = vadd.f32 %v5263, %v5291
  %v5296 = vadd.f32 %v5264, %v5292
  %v5297 = vld [vmem:[%s3524] sm:$0xff]
  %v5298 = vld [vmem:[%s3524 + $0x8] sm:$0xff]
  %v5299 = vld [vmem:[%s3524 + $0x10] sm:$0xff]
  %v5300 = vld [vmem:[%s3524 + $0x18] sm:$0xff]
  %5302 = vset.pattern.permute.xlu0 0
  %5303 = vperm.xlu0 %5302, %v5297
  %v5304 = vpop.permute.xlu0 %5303
  %5307 = vset.pattern.permute.xlu0 0
  %5308 = vperm.xlu0 %5307, %v5298
  %v5309 = vpop.permute.xlu0 %5308
  %5312 = vset.pattern.permute.xlu0 0
  %5313 = vperm.xlu0 %5312, %v5299
  %v5314 = vpop.permute.xlu0 %5313
  %5317 = vset.pattern.permute.xlu0 0
  %5318 = vperm.xlu0 %5317, %v5300
  %v5319 = vpop.permute.xlu0 %5318
  %v5321 = vmul.f32 %v5304, %v3781
  %v5322 = vmul.f32 %v5309, %v3782
  %v5323 = vmul.f32 %v5314, %v3783
  %v5324 = vmul.f32 %v5319, %v3784
  %v5325 = vadd.f32 %v5293, %v5321
  %v5326 = vadd.f32 %v5294, %v5322
  %v5327 = vadd.f32 %v5295, %v5323
  %v5328 = vadd.f32 %v5296, %v5324
  %v5329 = vld [vmem:[%s3557] sm:$0xff]
  %v5330 = vld [vmem:[%s3557 + $0x8] sm:$0xff]
  %v5331 = vld [vmem:[%s3557 + $0x10] sm:$0xff]
  %v5332 = vld [vmem:[%s3557 + $0x18] sm:$0xff]
  %5334 = vset.pattern.permute.xlu0 0
  %5335 = vperm.xlu0 %5334, %v5329
  %v5336 = vpop.permute.xlu0 %5335
  %5339 = vset.pattern.permute.xlu0 0
  %5340 = vperm.xlu0 %5339, %v5330
  %v5341 = vpop.permute.xlu0 %5340
  %5344 = vset.pattern.permute.xlu0 0
  %5345 = vperm.xlu0 %5344, %v5331
  %v5346 = vpop.permute.xlu0 %5345
  %5349 = vset.pattern.permute.xlu0 0
  %5350 = vperm.xlu0 %5349, %v5332
  %v5351 = vpop.permute.xlu0 %5350
  %v5353 = vmul.f32 %v5336, %v3455
  %v5354 = vmul.f32 %v5341, %v3456
  %v5355 = vmul.f32 %v5346, %v3457
  %v5356 = vmul.f32 %v5351, %v3458
  %5361 = vrot.lane.b32.xlu0 %v5353, 120
  %v5362 = vpop.permute.xlu0 %5361
  %5363 = vrot.lane.b32.xlu0 %v5354, 120
  %v5364 = vpop.permute.xlu0 %5363
  %5365 = vrot.lane.b32.xlu0 %v5355, 120
  %v5366 = vpop.permute.xlu0 %5365
  %5367 = vrot.lane.b32.xlu0 %v5356, 120
  %v5368 = vpop.permute.xlu0 %5367
  %v5373 = vadd.f32 %v5325, %v5362
  %v5374 = vadd.f32 %v5326, %v5364
  %v5375 = vadd.f32 %v5327, %v5366
  %v5376 = vadd.f32 %v5328, %v5368
  %v5377 = vsel %vm482, %v5373, 0.0
  %v5378 = vsel %vm482, %v5374, 0.0
  %v5379 = vadd.f32 %v5377, %v5378
  %v5380 = vsel %vm482, %v5375, 0.0
  %v5381 = vadd.f32 %v5379, %v5380
  %v5382 = vsel %vm482, %v5376, 0.0
  %v5383 = vadd.f32 %v5381, %v5382
  %v5384 = vrot.slane %v5383, 4
  %v5385 = vadd.f32 %v5383, %v5384
  %v5386 = vrot.slane %v5385, 2
  %v5387 = vadd.f32 %v5385, %v5386
  %v5388 = vrot.slane %v5387, 1
  %v5389 = vadd.f32 %v5387, %v5388
  %v5390 = vtanh.pop %v5389
  %5391 = vst.msk [vmem:[%s7 + $0xf] sm:$0x1] %vm2625, %v5390
  // Predicated region
  $region30: #{dcgan_g_forward.1} parent=0 // pred_check
    _
  $region31: #{dcgan_g_forward.1} parent=0 // pred_check_branch
    %5393 = sbr.rel (0) target = $region33
  $region32: #{dcgan_g_forward.1} parent=0 // pred_region
    _
  $region33: #{dcgan_g_forward.1} parent=0 // pred_fallthru
    _
  // Predicated region
  $region34: #{dcgan_g_forward.1} parent=0 // pred_check
    _
  $region35: #{dcgan_g_forward.1} parent=0 // pred_check_branch
    %5395 = sbr.rel (0) target = $region37
  $region36: #{dcgan_g_forward.1} parent=0 // pred_region
    _
  $region37: #{dcgan_g_forward.1} parent=0 // pred_fallthru
    _

</llo_original>
